<compile_context>
chip_gen: v7x
topology: tpu7x:2x2x1
jax: 0.10.0
libtpu: 0.0.40
codegen_flags: <defaults>
</compile_context>

<pallas_src>
import functools

import jax
import jax.numpy as jnp
from jax import lax
from jax.experimental import pallas as pl
from jax.experimental.pallas import tpu as pltpu

EPS = 1e-08
_LANE = 128


def _round_up(x, m):
    return (x + m - 1) // m * m


def _pick_anchor_tile(b_real, b_pad):
    """Largest power-of-two-multiple-of-8 anchor tile fitting a ~16MiB temp budget."""
    vmem_cap = max(8, (16 * 1024 * 1024) // (16 * b_pad * b_pad))  # ~4 f32 temps
    anchor_cap = max(8, _round_up(b_real, 8))
    for ta in (128, 64, 32, 16, 8):
        if ta <= vmem_cap and ta <= anchor_cap:
            return ta
    return 8


def _vmem_limit_bytes(b_pad, d, ta, itemsize):
    emb = 2 * b_pad * d * itemsize                 # resident embeddings (double-buffered)
    small = 8 * 2 * b_pad * 4                      # label / norm rows (both orientations)
    outs = 2 * 2 * b_pad * 4                       # two (1,1,Bp) output blocks
    temps = 4 * ta * b_pad * b_pad * 4             # (TA,Bp,Bp) intermediates
    est = emb + small + outs + temps + (8 << 20)   # headroom
    return int(min(64 << 20, max(32 << 20, est)))


def _triplet_kernel(emb_ref, lab_row_ref, lab_col_ref, sq_row_ref, sq_col_ref,
                    sum_ref, cnt_ref, *, margin, eps, ta, b_real):
    bp = lab_row_ref.shape[1]
    a0 = pl.multiple_of(pl.program_id(0) * ta, ta)

    # ---- distance rows for this anchor chunk via the MXU (Gram form) -------
    e_a = emb_ref[pl.ds(a0, ta), :]                                    # (TA, D)
    g = lax.dot_general(e_a, emb_ref[...], (((1,), (1,)), ((), ())),
                        preferred_element_type=jnp.float32)            # (TA, Bp)
    sq_a = sq_col_ref[pl.ds(a0, ta), :]                                # (TA, 1)
    d2 = jnp.maximum(sq_a + sq_row_ref[...] - 2.0 * g, 0.0)
    d = jnp.sqrt(d2)                                                   # (TA, Bp)

    # ---- masks (small 2-D factors; the only (TA,Bp,Bp) op is the final AND)
    lab_a3 = lab_col_ref[pl.ds(a0, ta), :][:, :, None]                 # (TA,1,1)
    a_ids3 = (a0 + lax.broadcasted_iota(jnp.int32, (ta, 1), 0))[:, :, None]
    j_ids = lax.broadcasted_iota(jnp.int32, (bp, 1), 0)                # (Bp, 1)
    k_ids = lax.broadcasted_iota(jnp.int32, (1, bp), 1)                # (1, Bp)

    # positive side: a != j, label[a] == label[j], anchor & positive not padding
    pos_mask = ((a_ids3 != j_ids[None, :, :])
                & (lab_a3 == lab_col_ref[...][None, :, :])
                & (j_ids[None, :, :] < b_real)
                & (a_ids3 < b_real))                                   # (TA,Bp,1)
    # negative side: label[a] != label[k], negative not padding.
    # (a != k and j != k are implied by the label constraints.)
    neg_mask = ((lab_a3 != lab_row_ref[...][:, None, :])
                & (k_ids[:, None, :] < b_real))                        # (TA,1,Bp)

    trip = d[:, :, None] - d[:, None, :] + jnp.float32(margin)         # (TA,Bp,Bp)
    mask = pos_mask & neg_mask
    r = jnp.where(mask, jnp.maximum(trip, 0.0), 0.0)
    pos = jnp.where(mask & (trip > jnp.float32(eps)), 1.0, 0.0)

    # lane-wide partials: reduce over anchors and the sublane (j) axis only.
    sum_ref[...] = jnp.sum(r, axis=(0, 1), keepdims=True)              # (1,1,Bp)
    cnt_ref[...] = jnp.sum(pos, axis=(0, 1), keepdims=True)


def batch_all_triplet_loss(embeddings, labels, margin=1.0):
    """embeddings: (B, D) float, labels: (B,) int -> scalar float32 loss."""
    b, d = embeddings.shape
    bp = max(_LANE, _round_up(b, _LANE))
    ta = _pick_anchor_tile(b, bp)
    num_chunks = -(-b // ta)  # only real anchors are visited; padding is masked

    emb_p = jnp.zeros((bp, d), embeddings.dtype).at[:b, :].set(embeddings)
    lab_p = jnp.full((bp,), -1, jnp.int32).at[:b].set(labels.astype(jnp.int32))
    sq = jnp.sum(emb_p.astype(jnp.float32) ** 2, axis=1)

    kernel = functools.partial(_triplet_kernel, margin=float(margin),
                               eps=EPS, ta=ta, b_real=b)

    chunk_spec = pl.BlockSpec((1, 1, bp), lambda a: (a, 0, 0))
    sums, cnts = pl.pallas_call(
        kernel,
        out_shape=(jax.ShapeDtypeStruct((num_chunks, 1, bp), jnp.float32),
                   jax.ShapeDtypeStruct((num_chunks, 1, bp), jnp.float32)),
        grid_spec=pltpu.PrefetchScalarGridSpec(
            num_scalar_prefetch=0,
            grid=(num_chunks,),
            in_specs=[
                pl.BlockSpec((bp, d), lambda a: (0, 0)),   # embeddings (resident)
                pl.BlockSpec((1, bp), lambda a: (0, 0)),   # labels, lane-major (k)
                pl.BlockSpec((bp, 1), lambda a: (0, 0)),   # labels, sublane-major (j/a)
                pl.BlockSpec((1, bp), lambda a: (0, 0)),   # squared norms, lane-major
                pl.BlockSpec((bp, 1), lambda a: (0, 0)),   # squared norms, sublane-major
            ],
            out_specs=[chunk_spec, chunk_spec],
        ),
        compiler_params=pltpu.CompilerParams(
            dimension_semantics=("parallel",),             # anchor chunks independent
            vmem_limit_bytes=_vmem_limit_bytes(bp, d, ta,
                                               embeddings.dtype.itemsize),
        ),
    )(emb_p, lab_p.reshape(1, bp), lab_p.reshape(bp, 1),
      sq.reshape(1, bp), sq.reshape(bp, 1))

    return jnp.sum(sums) / (jnp.sum(cnts) + jnp.float32(EPS))


def _reference(embeddings, labels, margin=1.0):
    """Pure-JAX reference mirroring the PyTorch module (direct cdist form)."""
    diff = embeddings[:, None, :] - embeddings[None, :, :]
    dist = jnp.sqrt(jnp.maximum(jnp.sum(diff * diff, axis=-1), 0.0))
    b = embeddings.shape[0]
    triplet = dist[:, :, None] - dist[:, None, :] + margin

    eye = jnp.eye(b, dtype=bool)
    ine = ~eye
    distinct = ine[:, :, None] & ine[:, None, :] & ine[None, :, :]
    leq = labels[None, :] == labels[:, None]
    valid = leq[:, :, None] & (~leq[:, None, :])
    mask = distinct & valid

    triplet = triplet * mask.astype(jnp.float32)
    triplet = jnp.maximum(triplet, 0.0)
    num_pos = jnp.sum((triplet > EPS).astype(jnp.float32))
    return jnp.sum(triplet) / (num_pos + EPS)


if __name__ == "__main__":
    key = jax.random.PRNGKey(0)
    k1, k2, k3, k4 = jax.random.split(key, 4)

    # Test 1: B=8, D=32 (single grid step, heavy lane padding).
    emb1 = jax.random.normal(k1, (8, 32), dtype=jnp.float32)
    lab1 = jax.random.randint(k2, (8,), 0, 3, dtype=jnp.int32)
    loss1 = jax.block_until_ready(batch_all_triplet_loss(emb1, lab1, margin=1.0))
    ref1 = _reference(emb1, lab1, margin=1.0)
    assert jnp.allclose(loss1, ref1, atol=1e-3, rtol=1e-3), (loss1, ref1)

    # Test 2: B=20, D=64 -> non-multiple-of-8 batch, exercises padding masks
    # and multiple independent (parallel) anchor chunks with partial outputs.
    emb2 = jax.random.normal(k3, (20, 64), dtype=jnp.float32)
    lab2 = jax.random.randint(k4, (20,), 0, 4, dtype=jnp.int32)
    loss2 = jax.block_until_ready(batch_all_triplet_loss(emb2, lab2, margin=1.0))
    ref2 = _reference(emb2, lab2, margin=1.0)
    assert jnp.allclose(loss2, ref2, atol=1e-3, rtol=1e-3), (loss2, ref2)

    print("KERNEL_OK")
</pallas_src>

<mosaic_0001>
module attributes {stable_mosaic.version = 11 : i64} {
  func.func @_triplet_kernel(%arg0: i32, %arg1: memref<128x32xf32, #tpu.memory_space<vmem>>, %arg2: memref<1x128xi32, #tpu.memory_space<vmem>>, %arg3: memref<128x1xi32, #tpu.memory_space<vmem>>, %arg4: memref<1x128xf32, #tpu.memory_space<vmem>>, %arg5: memref<128x1xf32, #tpu.memory_space<vmem>>, %arg6: memref<1x1x128xf32, #tpu.memory_space<vmem>>, %arg7: memref<1x1x128xf32, #tpu.memory_space<vmem>>) attributes {dimension_semantics = [#tpu.dimension_semantics<parallel>], iteration_bounds = array<i64: 1>, scalar_prefetch = 0 : i64, scratch_operands = 0 : i64, tpu.core_type = #tpu.core_type<tc>, window_params = [{pipeline_mode = #tpu.pipeline_mode<synchronous>, transform_indices = @transform_0, window_bounds = array<i64: 128, 32>}, {pipeline_mode = #tpu.pipeline_mode<synchronous>, transform_indices = @transform_1, window_bounds = array<i64: 1, 128>}, {pipeline_mode = #tpu.pipeline_mode<synchronous>, transform_indices = @transform_2, window_bounds = array<i64: 128, 1>}, {pipeline_mode = #tpu.pipeline_mode<synchronous>, transform_indices = @transform_3, window_bounds = array<i64: 1, 128>}, {pipeline_mode = #tpu.pipeline_mode<synchronous>, transform_indices = @transform_4, window_bounds = array<i64: 128, 1>}, {transform_indices = @transform_5, window_bounds = array<i64: 1, 1, 128>}, {transform_indices = @transform_6, window_bounds = array<i64: 1, 1, 128>}]} {
    %c8_i32 = arith.constant 8 : i32
    %0 = arith.muli %arg0, %c8_i32 : i32
    %1 = tpu.assume_multiple %0, 8 : i32
    %2 = arith.index_cast %1 : i32 to index
    %c0 = arith.constant 0 : index
    %3 = vector.load %arg1[%2, %c0] : memref<128x32xf32, #tpu.memory_space<vmem>>, vector<8x32xf32>
    %c0_0 = arith.constant 0 : index
    %c0_1 = arith.constant 0 : index
    %4 = vector.load %arg1[%c0_0, %c0_1] : memref<128x32xf32, #tpu.memory_space<vmem>>, vector<128x32xf32>
    %cst = arith.constant dense<0.000000e+00> : vector<8x128xf32>
    %5 = tpu.matmul %3, %4, %cst {dimension_numbers = #tpu.dot_dimension_numbers<[1], [1], [0], [0], [0, 0, 1, 0], [], []>} : vector<8x32xf32>, vector<128x32xf32>, vector<8x128xf32> -> vector<8x128xf32>
    %6 = arith.index_cast %1 : i32 to index
    %c0_2 = arith.constant 0 : index
    %7 = vector.load %arg5[%6, %c0_2] : memref<128x1xf32, #tpu.memory_space<vmem>>, vector<8x1xf32>
    %c0_3 = arith.constant 0 : index
    %c0_4 = arith.constant 0 : index
    %8 = vector.load %arg4[%c0_3, %c0_4] : memref<1x128xf32, #tpu.memory_space<vmem>>, vector<1x128xf32>
    %9 = vector.broadcast %7 : vector<8x1xf32> to vector<8x128xf32>
    %10 = vector.broadcast %8 : vector<1x128xf32> to vector<8x128xf32>
    %11 = arith.addf %9, %10 : vector<8x128xf32>
    %cst_5 = arith.constant 2.000000e+00 : f32
    %12 = vector.broadcast %cst_5 : f32 to vector<8x128xf32>
    %13 = arith.mulf %12, %5 : vector<8x128xf32>
    %14 = arith.subf %11, %13 : vector<8x128xf32>
    %cst_6 = arith.constant 0.000000e+00 : f32
    %15 = vector.broadcast %cst_6 : f32 to vector<8x128xf32>
    %16 = arith.maximumf %14, %15 : vector<8x128xf32>
    %17 = math.sqrt %16 : vector<8x128xf32>
    %18 = arith.index_cast %1 : i32 to index
    %c0_7 = arith.constant 0 : index
    %19 = vector.load %arg3[%18, %c0_7] : memref<128x1xi32, #tpu.memory_space<vmem>>, vector<8x1xi32>
    %20 = vector.shape_cast %19 : vector<8x1xi32> to vector<8x1x1xi32>
    %21 = tpu.iota {dimensions = array<i32: 0>} : vector<8x1xi32>
    %22 = vector.broadcast %1 : i32 to vector<8x1xi32>
    %23 = arith.addi %22, %21 : vector<8x1xi32>
    %24 = vector.shape_cast %23 : vector<8x1xi32> to vector<8x1x1xi32>
    %25 = tpu.iota {dimensions = array<i32: 0>} : vector<128x1xi32>
    %26 = tpu.iota {dimensions = array<i32: 1>} : vector<1x128xi32>
    %27 = vector.shape_cast %25 : vector<128x1xi32> to vector<1x128x1xi32>
    %28 = vector.broadcast %24 : vector<8x1x1xi32> to vector<8x128x1xi32>
    %29 = vector.broadcast %27 : vector<1x128x1xi32> to vector<8x128x1xi32>
    %30 = arith.cmpi ne, %28, %29 : vector<8x128x1xi32>
    %c0_8 = arith.constant 0 : index
    %c0_9 = arith.constant 0 : index
    %31 = vector.load %arg3[%c0_8, %c0_9] : memref<128x1xi32, #tpu.memory_space<vmem>>, vector<128x1xi32>
    %32 = vector.shape_cast %31 : vector<128x1xi32> to vector<1x128x1xi32>
    %33 = vector.broadcast %20 : vector<8x1x1xi32> to vector<8x128x1xi32>
    %34 = vector.broadcast %32 : vector<1x128x1xi32> to vector<8x128x1xi32>
    %35 = arith.cmpi eq, %33, %34 : vector<8x128x1xi32>
    %36 = arith.andi %30, %35 : vector<8x128x1xi1>
    %37 = vector.shape_cast %25 : vector<128x1xi32> to vector<1x128x1xi32>
    %c8_i32_10 = arith.constant 8 : i32
    %38 = vector.broadcast %c8_i32_10 : i32 to vector<1x128x1xi32>
    %39 = arith.cmpi slt, %37, %38 : vector<1x128x1xi32>
    %40 = vector.broadcast %39 : vector<1x128x1xi1> to vector<8x128x1xi1>
    %41 = arith.andi %36, %40 : vector<8x128x1xi1>
    %c8_i32_11 = arith.constant 8 : i32
    %42 = vector.broadcast %c8_i32_11 : i32 to vector<8x1x1xi32>
    %43 = arith.cmpi slt, %24, %42 : vector<8x1x1xi32>
    %44 = vector.broadcast %43 : vector<8x1x1xi1> to vector<8x128x1xi1>
    %45 = arith.andi %41, %44 : vector<8x128x1xi1>
    %c0_12 = arith.constant 0 : index
    %c0_13 = arith.constant 0 : index
    %46 = vector.load %arg2[%c0_12, %c0_13] : memref<1x128xi32, #tpu.memory_space<vmem>>, vector<1x128xi32>
    %47 = vector.shape_cast %46 : vector<1x128xi32> to vector<1x1x128xi32>
    %48 = vector.broadcast %20 : vector<8x1x1xi32> to vector<8x1x128xi32>
    %49 = vector.broadcast %47 : vector<1x1x128xi32> to vector<8x1x128xi32>
    %50 = arith.cmpi ne, %48, %49 : vector<8x1x128xi32>
    %51 = vector.shape_cast %26 : vector<1x128xi32> to vector<1x1x128xi32>
    %c8_i32_14 = arith.constant 8 : i32
    %52 = vector.broadcast %c8_i32_14 : i32 to vector<1x1x128xi32>
    %53 = arith.cmpi slt, %51, %52 : vector<1x1x128xi32>
    %54 = vector.broadcast %53 : vector<1x1x128xi1> to vector<8x1x128xi1>
    %55 = arith.andi %50, %54 : vector<8x1x128xi1>
    %56 = vector.shape_cast %17 : vector<8x128xf32> to vector<8x128x1xf32>
    %57 = vector.shape_cast %17 : vector<8x128xf32> to vector<8x1x128xf32>
    %58 = vector.broadcast %56 : vector<8x128x1xf32> to vector<8x128x128xf32>
    %59 = vector.broadcast %57 : vector<8x1x128xf32> to vector<8x128x128xf32>
    %60 = arith.subf %58, %59 : vector<8x128x128xf32>
    %cst_15 = arith.constant 1.000000e+00 : f32
    %61 = vector.broadcast %cst_15 : f32 to vector<8x128x128xf32>
    %62 = arith.addf %60, %61 : vector<8x128x128xf32>
    %63 = vector.broadcast %45 : vector<8x128x1xi1> to vector<8x128x128xi1>
    %64 = vector.broadcast %55 : vector<8x1x128xi1> to vector<8x128x128xi1>
    %65 = arith.andi %63, %64 : vector<8x128x128xi1>
    %cst_16 = arith.constant 0.000000e+00 : f32
    %66 = vector.broadcast %cst_16 : f32 to vector<8x128x128xf32>
    %67 = arith.maximumf %62, %66 : vector<8x128x128xf32>
    %cst_17 = arith.constant 0.000000e+00 : f32
    %68 = vector.broadcast %cst_17 : f32 to vector<8x128x128xf32>
    %69 = arith.select %65, %67, %68 : vector<8x128x128xi1>, vector<8x128x128xf32>
    %cst_18 = arith.constant 9.99999993E-9 : f32
    %70 = vector.broadcast %cst_18 : f32 to vector<8x128x128xf32>
    %71 = arith.cmpf ogt, %62, %70 : vector<8x128x128xf32>
    %72 = arith.andi %65, %71 : vector<8x128x128xi1>
    %cst_19 = arith.constant 1.000000e+00 : f32
    %cst_20 = arith.constant 0.000000e+00 : f32
    %73 = vector.broadcast %cst_19 : f32 to vector<8x128x128xf32>
    %74 = vector.broadcast %cst_20 : f32 to vector<8x128x128xf32>
    %75 = arith.select %72, %73, %74 : vector<8x128x128xi1>, vector<8x128x128xf32>
    %cst_21 = arith.constant dense<0.000000e+00> : vector<128xf32>
    %76 = vector.multi_reduction <add>, %69, %cst_21 [0, 1] : vector<8x128x128xf32> to vector<128xf32>
    %77 = vector.shape_cast %76 : vector<128xf32> to vector<1x1x128xf32>
    %c0_22 = arith.constant 0 : index
    %c0_23 = arith.constant 0 : index
    %c0_24 = arith.constant 0 : index
    %78 = vector.load %arg6[%c0_22, %c0_23, %c0_24] : memref<1x1x128xf32, #tpu.memory_space<vmem>>, vector<1x1x128xf32>
    tpu.vector_store %arg6[%c0_22, %c0_23, %c0_24], %77 {strides = array<i32>} : memref<1x1x128xf32, #tpu.memory_space<vmem>>, vector<1x1x128xf32>,
    %cst_25 = arith.constant dense<0.000000e+00> : vector<128xf32>
    %79 = vector.multi_reduction <add>, %75, %cst_25 [0, 1] : vector<8x128x128xf32> to vector<128xf32>
    %80 = vector.shape_cast %79 : vector<128xf32> to vector<1x1x128xf32>
    %c0_26 = arith.constant 0 : index
    %c0_27 = arith.constant 0 : index
    %c0_28 = arith.constant 0 : index
    %81 = vector.load %arg7[%c0_26, %c0_27, %c0_28] : memref<1x1x128xf32, #tpu.memory_space<vmem>>, vector<1x1x128xf32>
    tpu.vector_store %arg7[%c0_26, %c0_27, %c0_28], %80 {strides = array<i32>} : memref<1x1x128xf32, #tpu.memory_space<vmem>>, vector<1x1x128xf32>,
    return
  }
  func.func @transform_0(%arg0: i32) -> (i32, i32) {
    %c0_i32 = arith.constant 0 : i32
    %c0_i32_0 = arith.constant 0 : i32
    %c0_i32_1 = arith.constant 0 : i32
    return %c0_i32, %c0_i32_0 : i32, i32
  }
  func.func @transform_1(%arg0: i32) -> (i32, i32) {
    %c0_i32 = arith.constant 0 : i32
    %c0_i32_0 = arith.constant 0 : i32
    %c0_i32_1 = arith.constant 0 : i32
    return %c0_i32, %c0_i32_0 : i32, i32
  }
  func.func @transform_2(%arg0: i32) -> (i32, i32) {
    %c0_i32 = arith.constant 0 : i32
    %c0_i32_0 = arith.constant 0 : i32
    %c0_i32_1 = arith.constant 0 : i32
    return %c0_i32, %c0_i32_0 : i32, i32
  }
  func.func @transform_3(%arg0: i32) -> (i32, i32) {
    %c0_i32 = arith.constant 0 : i32
    %c0_i32_0 = arith.constant 0 : i32
    %c0_i32_1 = arith.constant 0 : i32
    return %c0_i32, %c0_i32_0 : i32, i32
  }
  func.func @transform_4(%arg0: i32) -> (i32, i32) {
    %c0_i32 = arith.constant 0 : i32
    %c0_i32_0 = arith.constant 0 : i32
    %c0_i32_1 = arith.constant 0 : i32
    return %c0_i32, %c0_i32_0 : i32, i32
  }
  func.func @transform_5(%arg0: i32) -> (i32, i32, i32) {
    %c0_i32 = arith.constant 0 : i32
    %c0_i32_0 = arith.constant 0 : i32
    %c0_i32_1 = arith.constant 0 : i32
    return %arg0, %c0_i32, %c0_i32_0 : i32, i32, i32
  }
  func.func @transform_6(%arg0: i32) -> (i32, i32, i32) {
    %c0_i32 = arith.constant 0 : i32
    %c0_i32_0 = arith.constant 0 : i32
    %c0_i32_1 = arith.constant 0 : i32
    return %arg0, %c0_i32, %c0_i32_0 : i32, i32, i32
  }
}

</mosaic_0001>

<llo_original>
// kernel: tpu_custom_call.1
$region0: #{tpu_custom_call.1}
  #allocation0 [shape = 'u32[]', space=smem, size = 0x4, offset = 0x4, fixed_abs, tag = 'smem constant byte address 0x4 - core index']
  #allocation1 [shape = 'u32[144,128]{1,0:T(1,128)}', space=vmem, size = 0x12000, scoped, tag = 'internal scratch']
  %s0 = inlined_call_operand.vmem [shape: f32[128,32], index: 0, kind: input, shape index: {}]
  %s1 = inlined_call_operand.vmem [shape: s32[1,128], index: 1, kind: input, shape index: {}]
  %s2 = inlined_call_operand.vmem [shape: s32[128,1], index: 2, kind: input, shape index: {}]
  %s3 = inlined_call_operand.vmem [shape: f32[1,128], index: 3, kind: input, shape index: {}]
  %s4 = inlined_call_operand.vmem [shape: f32[128,1], index: 4, kind: input, shape index: {}]
  %s5 = inlined_call_operand.hbm [shape: f32[1,1,128], index: 5, kind: output, shape index: {0}]
  %s6 = inlined_call_operand.hbm [shape: f32[1,1,128], index: 6, kind: output, shape index: {1}]
  %7 = xla_tuple %s5, %s6
  %s8 = sld [smem:[#allocation0]]
  $region38: #{tpu_custom_call.1} parent=0
    _
  %s10 = ssub.s32 1, %s8
  %s11 = scalar_select 0, %s10, %s8
  $region1: #{tpu_custom_call.1} parent=0
    #allocation2 [shape = 'u8[512]{0}', space=vmem, size = 0x400, scoped, tag = 'output window, operand 0, single buffered']
    #allocation3 [shape = 's32[1]{0}', space=sflag, size = 0x4, scoped, tag = 'scoped memory for tpu_custom_call.1']
    #allocation4 [shape = 'u8[512]{0}', space=vmem, size = 0x400, scoped, tag = 'output window, operand 1, single buffered']
    #allocation5 [shape = 's32[1]{0}', space=sflag, size = 0x4, scoped, tag = 'scoped memory for tpu_custom_call.1']
    %12 = vsyncpa [#allocation3], 0
    %13 = vsyncpa [#allocation5], 0
    // Predicated region
    $region2: #{tpu_custom_call.1} parent=1 // pred_check
      _
    $region3: #{tpu_custom_call.1} parent=1 // pred_check_branch
      %15 = sbr.rel (0) target = $region5
    $region4: #{tpu_custom_call.1} parent=1 // pred_region
      _
    $region5: #{tpu_custom_call.1} parent=1 // pred_fallthru
      _
    // Predicated region
    $region6: #{tpu_custom_call.1} parent=1 // pred_check
      _
    $region7: #{tpu_custom_call.1} parent=1 // pred_check_branch
      %17 = sbr.rel (0) target = $region9
    $region8: #{tpu_custom_call.1} parent=1 // pred_region
      _
    $region9: #{tpu_custom_call.1} parent=1 // pred_fallthru
      _
    // Predicated region
    $region10: #{tpu_custom_call.1} parent=1 // pred_check
      _
    $region11: #{tpu_custom_call.1} parent=1 // pred_check_branch
      %19 = sbr.rel (0) target = $region13
    $region12: #{tpu_custom_call.1} parent=1 // pred_region
      _
    $region13: #{tpu_custom_call.1} parent=1 // pred_fallthru
      _
    // Predicated region
    $region14: #{tpu_custom_call.1} parent=1 // pred_check
      _
    $region15: #{tpu_custom_call.1} parent=1 // pred_check_branch
      %21 = sbr.rel (0) target = $region17
    $region16: #{tpu_custom_call.1} parent=1 // pred_region
      _
    $region17: #{tpu_custom_call.1} parent=1 // pred_fallthru
      _
    // Predicated region
    $region18: #{tpu_custom_call.1} parent=1 // pred_check
      _
    $region19: #{tpu_custom_call.1} parent=1 // pred_check_branch
      %23 = sbr.rel (0) target = $region21
    $region20: #{tpu_custom_call.1} parent=1 // pred_region
      _
    $region21: #{tpu_custom_call.1} parent=1 // pred_fallthru
      _
    %s24 = smul.u32 0, 8
    %s25 = scalar_lea.vmem %s0, %s24
    %v26 = vld [vmem:[%s25] sm:$0xff]
    %v27 = vld [vmem:[%s0] sm:$0xff]
    %v28 = vld [vmem:[%s0 + $0x8] sm:$0xff]
    %v29 = vld [vmem:[%s0 + $0x10] sm:$0xff]
    %v30 = vld [vmem:[%s0 + $0x18] sm:$0xff]
    %v31 = vld [vmem:[%s0 + $0x20] sm:$0xff]
    %v32 = vld [vmem:[%s0 + $0x28] sm:$0xff]
    %v33 = vld [vmem:[%s0 + $0x30] sm:$0xff]
    %v34 = vld [vmem:[%s0 + $0x38] sm:$0xff]
    %v35 = vld [vmem:[%s0 + $0x40] sm:$0xff]
    %v36 = vld [vmem:[%s0 + $0x48] sm:$0xff]
    %v37 = vld [vmem:[%s0 + $0x50] sm:$0xff]
    %v38 = vld [vmem:[%s0 + $0x58] sm:$0xff]
    %v39 = vld [vmem:[%s0 + $0x60] sm:$0xff]
    %v40 = vld [vmem:[%s0 + $0x68] sm:$0xff]
    %v41 = vld [vmem:[%s0 + $0x70] sm:$0xff]
    %v42 = vld [vmem:[%s0 + $0x78] sm:$0xff]
    %vm43 = vcmask 261120
    %v45 = vsel %vm43, %v26, 0
    %v48 = vsel %vm43, %v27, 0
    %v51 = vsel %vm43, %v28, 0
    %v54 = vsel %vm43, %v29, 0
    %v57 = vsel %vm43, %v30, 0
    %v60 = vsel %vm43, %v31, 0
    %v63 = vsel %vm43, %v32, 0
    %v66 = vsel %vm43, %v33, 0
    %v69 = vsel %vm43, %v34, 0
    %v72 = vsel %vm43, %v35, 0
    %v75 = vsel %vm43, %v36, 0
    %v78 = vsel %vm43, %v37, 0
    %v81 = vsel %vm43, %v38, 0
    %v84 = vsel %vm43, %v39, 0
    %v87 = vsel %vm43, %v40, 0
    %v90 = vsel %vm43, %v41, 0
    %v93 = vsel %vm43, %v42, 0
    %95 = vmatprep.subr.mxu0 0.0
    %96 = vmatpush1.xpose.msra.mxu0 %v48
    %97 = vmatprep.subr.mxu0 0.0
    %98 = vmatpush1.xpose.msra.mxu0 %v51
    %99 = vmatprep.subr.mxu0 0.0
    %100 = vmatpush1.xpose.msra.mxu0 %v54
    %101 = vmatprep.subr.mxu0 0.0
    %102 = vmatpush1.xpose.msra.mxu0 %v57
    %103 = vmatprep.subr.mxu0 0.0
    %104 = vmatpush1.xpose.msra.mxu0 %v60
    %105 = vmatprep.subr.mxu0 0.0
    %106 = vmatpush1.xpose.msra.mxu0 %v63
    %107 = vmatprep.subr.mxu0 0.0
    %108 = vmatpush1.xpose.msra.mxu0 %v66
    %109 = vmatprep.subr.mxu0 0.0
    %110 = vmatpush1.xpose.msra.mxu0 %v69
    %111 = vmatprep.subr.mxu0 0.0
    %112 = vmatpush1.xpose.msra.mxu0 %v72
    %113 = vmatprep.subr.mxu0 0.0
    %114 = vmatpush1.xpose.msra.mxu0 %v75
    %115 = vmatprep.subr.mxu0 0.0
    %116 = vmatpush1.xpose.msra.mxu0 %v78
    %117 = vmatprep.subr.mxu0 0.0
    %118 = vmatpush1.xpose.msra.mxu0 %v81
    %119 = vmatprep.subr.mxu0 0.0
    %120 = vmatpush1.xpose.msra.mxu0 %v84
    %121 = vmatprep.subr.mxu0 0.0
    %122 = vmatpush1.xpose.msra.mxu0 %v87
    %123 = vmatprep.subr.mxu0 0.0
    %124 = vmatpush1.xpose.msra.mxu0 %v90
    %125 = vmatprep.subr.mxu0 0.0
    %126 = vmatpush1.xpose.msra.mxu0 %v93
    %127 = vmatprep.subr.mxu0 0.0
    %128 = vmatpush1.xpose.msra.mxu0 0.0
    %129 = vmatprep.subr.mxu0 0.0
    %130 = vmatpush1.xpose.msra.mxu0 0.0
    %131 = vmatprep.subr.mxu0 0.0
    %132 = vmatpush1.xpose.msra.mxu0 0.0
    %133 = vmatprep.subr.mxu0 0.0
    %134 = vmatpush1.xpose.msra.mxu0 0.0
    %135 = vmatprep.subr.mxu0 0.0
    %136 = vmatpush1.xpose.msra.mxu0 0.0
    %137 = vmatprep.subr.mxu0 0.0
    %138 = vmatpush1.xpose.msra.mxu0 0.0
    %139 = vmatprep.subr.mxu0 0.0
    %140 = vmatpush1.xpose.msra.mxu0 0.0
    %141 = vmatprep.subr.mxu0 0.0
    %142 = vmatpush1.xpose.msra.mxu0 0.0
    %143 = vmatprep.subr.mxu0 0.0
    %144 = vmatpush1.xpose.msra.mxu0 0.0
    %145 = vmatprep.subr.mxu0 0.0
    %146 = vmatpush1.xpose.msra.mxu0 0.0
    %147 = vmatprep.subr.mxu0 0.0
    %148 = vmatpush1.xpose.msra.mxu0 0.0
    %149 = vmatprep.subr.mxu0 0.0
    %150 = vmatpush1.xpose.msra.mxu0 0.0
    %151 = vmatprep.subr.mxu0 0.0
    %152 = vmatpush1.xpose.msra.mxu0 0.0
    %153 = vmatprep.subr.mxu0 0.0
    %154 = vmatpush1.xpose.msra.mxu0 0.0
    %155 = vmatprep.subr.mxu0 0.0
    %156 = vmatpush1.xpose.msra.mxu0 0.0
    %157 = vmatprep.subr.mxu0 0.0
    %158 = vmatpush1.xpose.msra.mxu0 0.0
    %159 = vmatprep.mubr.f32.mxu0 0.0
    %160 = vmatmul.mubr.f32.gmra.mrb[0].mxu0 %v45
    %v161 = vpop.f32.mrb[0].mxu0
    %v162 = vadd.f32 0.0, %v161
    %v163 = vpop.f32.mrb[0].mxu0
    %164 = vdwg.mxu0
    %s165 = scalar_lea.vmem %s4, %s24
    %v166 = vld [vmem:[%s165] sm:$0xff]
    %v167 = vld [vmem:[%s3] sm:$0x1]
    %169 = vset.pattern.permute.xlu0 0
    %170 = vperm.xlu0 %169, %v166
    %v171 = vpop.permute.xlu0 %170
    %v174 = vlaneseq
    %v175 = vshrl.u32 %v174, 7
    %v176 = vsub.s32 0, %v175
    %v177 = vrot.slane %v167, %v176
    %v179 = vadd.f32 %v171, %v177
    %v180 = vmul.f32 %v162, 2.0
    %v181 = vsub.f32 %v179, %v180
    %v182 = vmax.f32 %v181, 0.0
    %v183 = vrsqrt.pop %v182
    %v184 = vmul.f32 %v182, %v183
    %vm185 = vcmp.eq.f32.partialorder %v182, inf
    %v186 = vsel %vm185, %v182, %v184
    %vm187 = vcmp.eq.f32.partialorder %v182, 0.0
    %v188 = vand.u32 %v182, 2147483648
    %v189 = vsel %vm187, %v188, %v186
    %s190 = scalar_lea.vmem %s2, %s24
    %v191 = vld [vmem:[%s190] sm:$0xff]
    %v192 = vcombine.high %v191, %v191
    %v194 = vunpack.c.l.s4 1966171168
    %v195 = vunpack.c.0.s8 %v194
    %v196 = vlaneseq
    %v197 = vshrl.u32 %v196, 7
    %v198 = vsub.s32 %v195, %v197
    %v199 = vrot.slane %v191, %v198
    %v201 = vunpack.c.l.s4 1966171168
    %v202 = vunpack.c.0.s8 %v201
    %v203 = vlaneseq
    %v204 = vshrl.u32 %v203, 7
    %v205 = vsub.s32 %v202, %v204
    %v206 = vrot.slane %v192, %v205
    %v207 = vcombine.high %v199, %v199
    %v208 = vcombine.high %v206, %v206
    %v210 = vunpack.c.l.s4 1966171168
    %v211 = vunpack.c.0.s8 %v210
    %v212 = vlaneseq
    %v213 = vshrl.u32 %v212, 7
    %v214 = vsub.s32 %v211, %v213
    %v215 = vrot.slane %v199, %v214
    %v217 = vunpack.c.l.s4 1966171168
    %v218 = vunpack.c.0.s8 %v217
    %v219 = vlaneseq
    %v220 = vshrl.u32 %v219, 7
    %v221 = vsub.s32 %v218, %v220
    %v222 = vrot.slane %v206, %v221
    %v224 = vunpack.c.l.s4 1966171168
    %v225 = vunpack.c.0.s8 %v224
    %v226 = vlaneseq
    %v227 = vshrl.u32 %v226, 7
    %v228 = vsub.s32 %v225, %v227
    %v229 = vrot.slane %v207, %v228
    %v231 = vunpack.c.l.s4 1966171168
    %v232 = vunpack.c.0.s8 %v231
    %v233 = vlaneseq
    %v234 = vshrl.u32 %v233, 7
    %v235 = vsub.s32 %v232, %v234
    %v236 = vrot.slane %v208, %v235
    %v237 = vcombine.high %v215, %v215
    %v238 = vcombine.high %v222, %v222
    %v239 = vcombine.high %v229, %v229
    %v240 = vcombine.high %v236, %v236
    %v241 = vlaneseq
    %v242 = vshrl.u32 %v241, 7
    %v243 = vstv %s24
    %v244 = vadd.s32 %v243, %v242
    %v245 = vlaneseq
    %v246 = vshrl.u32 %v245, 7
    %v247 = vsub.s32 0, %v246
    %v248 = vrot.slane %v244, %v247
    %v249 = vlaneseq
    %v250 = vshrl.u32 %v249, 7
    %v251 = vsub.s32 1, %v250
    %v252 = vrot.slane %v244, %v251
    %v253 = vlaneseq
    %v254 = vshrl.u32 %v253, 7
    %v255 = vsub.s32 2, %v254
    %v256 = vrot.slane %v244, %v255
    %v257 = vlaneseq
    %v258 = vshrl.u32 %v257, 7
    %v259 = vsub.s32 3, %v258
    %v260 = vrot.slane %v244, %v259
    %v261 = vlaneseq
    %v262 = vshrl.u32 %v261, 7
    %v263 = vsub.s32 4, %v262
    %v264 = vrot.slane %v244, %v263
    %v265 = vlaneseq
    %v266 = vshrl.u32 %v265, 7
    %v267 = vsub.s32 5, %v266
    %v268 = vrot.slane %v244, %v267
    %v269 = vlaneseq
    %v270 = vshrl.u32 %v269, 7
    %v271 = vsub.s32 6, %v270
    %v272 = vrot.slane %v244, %v271
    %v273 = vlaneseq
    %v274 = vshrl.u32 %v273, 7
    %v275 = vsub.s32 7, %v274
    %v276 = vrot.slane %v244, %v275
    %v277 = vadd.s32 %v242, 8
    %v278 = vadd.s32 %v242, 16
    %v279 = vadd.s32 %v242, 24
    %v280 = vadd.s32 %v242, 32
    %v281 = vadd.s32 %v242, 40
    %v282 = vadd.s32 %v242, 48
    %v283 = vadd.s32 %v242, 56
    %v284 = vadd.s32 %v242, 64
    %v285 = vadd.s32 %v242, 72
    %v286 = vadd.s32 %v242, 80
    %v287 = vadd.s32 %v242, 88
    %v288 = vadd.s32 %v242, 96
    %v289 = vadd.s32 %v242, 104
    %v290 = vadd.s32 %v242, 112
    %v291 = vadd.s32 %v242, 120
    %v292 = vlaneseq
    %v293 = vand.u32 %v292, 127
    %vm294 = vcmp.ne.s32.totalorder %v248, %v242
    %vm295 = vcmp.ne.s32.totalorder %v248, %v277
    %vm296 = vcmp.ne.s32.totalorder %v248, %v278
    %vm297 = vcmp.ne.s32.totalorder %v248, %v279
    %vm298 = vcmp.ne.s32.totalorder %v248, %v280
    %vm299 = vcmp.ne.s32.totalorder %v248, %v281
    %vm300 = vcmp.ne.s32.totalorder %v248, %v282
    %vm301 = vcmp.ne.s32.totalorder %v248, %v283
    %vm302 = vcmp.ne.s32.totalorder %v248, %v284
    %vm303 = vcmp.ne.s32.totalorder %v248, %v285
    %vm304 = vcmp.ne.s32.totalorder %v248, %v286
    %vm305 = vcmp.ne.s32.totalorder %v248, %v287
    %vm306 = vcmp.ne.s32.totalorder %v248, %v288
    %vm307 = vcmp.ne.s32.totalorder %v248, %v289
    %vm308 = vcmp.ne.s32.totalorder %v248, %v290
    %vm309 = vcmp.ne.s32.totalorder %v248, %v291
    %vm310 = vcmp.ne.s32.totalorder %v252, %v242
    %vm311 = vcmp.ne.s32.totalorder %v252, %v277
    %vm312 = vcmp.ne.s32.totalorder %v252, %v278
    %vm313 = vcmp.ne.s32.totalorder %v252, %v279
    %vm314 = vcmp.ne.s32.totalorder %v252, %v280
    %vm315 = vcmp.ne.s32.totalorder %v252, %v281
    %vm316 = vcmp.ne.s32.totalorder %v252, %v282
    %vm317 = vcmp.ne.s32.totalorder %v252, %v283
    %vm318 = vcmp.ne.s32.totalorder %v252, %v284
    %vm319 = vcmp.ne.s32.totalorder %v252, %v285
    %vm320 = vcmp.ne.s32.totalorder %v252, %v286
    %vm321 = vcmp.ne.s32.totalorder %v252, %v287
    %vm322 = vcmp.ne.s32.totalorder %v252, %v288
    %vm323 = vcmp.ne.s32.totalorder %v252, %v289
    %vm324 = vcmp.ne.s32.totalorder %v252, %v290
    %vm325 = vcmp.ne.s32.totalorder %v252, %v291
    %vm326 = vcmp.ne.s32.totalorder %v256, %v242
    %vm327 = vcmp.ne.s32.totalorder %v256, %v277
    %vm328 = vcmp.ne.s32.totalorder %v256, %v278
    %vm329 = vcmp.ne.s32.totalorder %v256, %v279
    %vm330 = vcmp.ne.s32.totalorder %v256, %v280
    %vm331 = vcmp.ne.s32.totalorder %v256, %v281
    %vm332 = vcmp.ne.s32.totalorder %v256, %v282
    %vm333 = vcmp.ne.s32.totalorder %v256, %v283
    %vm334 = vcmp.ne.s32.totalorder %v256, %v284
    %vm335 = vcmp.ne.s32.totalorder %v256, %v285
    %vm336 = vcmp.ne.s32.totalorder %v256, %v286
    %vm337 = vcmp.ne.s32.totalorder %v256, %v287
    %vm338 = vcmp.ne.s32.totalorder %v256, %v288
    %vm339 = vcmp.ne.s32.totalorder %v256, %v289
    %vm340 = vcmp.ne.s32.totalorder %v256, %v290
    %vm341 = vcmp.ne.s32.totalorder %v256, %v291
    %vm342 = vcmp.ne.s32.totalorder %v260, %v242
    %vm343 = vcmp.ne.s32.totalorder %v260, %v277
    %vm344 = vcmp.ne.s32.totalorder %v260, %v278
    %vm345 = vcmp.ne.s32.totalorder %v260, %v279
    %vm346 = vcmp.ne.s32.totalorder %v260, %v280
    %vm347 = vcmp.ne.s32.totalorder %v260, %v281
    %vm348 = vcmp.ne.s32.totalorder %v260, %v282
    %vm349 = vcmp.ne.s32.totalorder %v260, %v283
    %vm350 = vcmp.ne.s32.totalorder %v260, %v284
    %vm351 = vcmp.ne.s32.totalorder %v260, %v285
    %vm352 = vcmp.ne.s32.totalorder %v260, %v286
    %vm353 = vcmp.ne.s32.totalorder %v260, %v287
    %vm354 = vcmp.ne.s32.totalorder %v260, %v288
    %vm355 = vcmp.ne.s32.totalorder %v260, %v289
    %vm356 = vcmp.ne.s32.totalorder %v260, %v290
    %vm357 = vcmp.ne.s32.totalorder %v260, %v291
    %vm358 = vcmp.ne.s32.totalorder %v264, %v242
    %vm359 = vcmp.ne.s32.totalorder %v264, %v277
    %vm360 = vcmp.ne.s32.totalorder %v264, %v278
    %vm361 = vcmp.ne.s32.totalorder %v264, %v279
    %vm362 = vcmp.ne.s32.totalorder %v264, %v280
    %vm363 = vcmp.ne.s32.totalorder %v264, %v281
    %vm364 = vcmp.ne.s32.totalorder %v264, %v282
    %vm365 = vcmp.ne.s32.totalorder %v264, %v283
    %vm366 = vcmp.ne.s32.totalorder %v264, %v284
    %vm367 = vcmp.ne.s32.totalorder %v264, %v285
    %vm368 = vcmp.ne.s32.totalorder %v264, %v286
    %vm369 = vcmp.ne.s32.totalorder %v264, %v287
    %vm370 = vcmp.ne.s32.totalorder %v264, %v288
    %vm371 = vcmp.ne.s32.totalorder %v264, %v289
    %vm372 = vcmp.ne.s32.totalorder %v264, %v290
    %vm373 = vcmp.ne.s32.totalorder %v264, %v291
    %vm374 = vcmp.ne.s32.totalorder %v268, %v242
    %vm375 = vcmp.ne.s32.totalorder %v268, %v277
    %vm376 = vcmp.ne.s32.totalorder %v268, %v278
    %vm377 = vcmp.ne.s32.totalorder %v268, %v279
    %vm378 = vcmp.ne.s32.totalorder %v268, %v280
    %vm379 = vcmp.ne.s32.totalorder %v268, %v281
    %vm380 = vcmp.ne.s32.totalorder %v268, %v282
    %vm381 = vcmp.ne.s32.totalorder %v268, %v283
    %vm382 = vcmp.ne.s32.totalorder %v268, %v284
    %vm383 = vcmp.ne.s32.totalorder %v268, %v285
    %vm384 = vcmp.ne.s32.totalorder %v268, %v286
    %vm385 = vcmp.ne.s32.totalorder %v268, %v287
    %vm386 = vcmp.ne.s32.totalorder %v268, %v288
    %vm387 = vcmp.ne.s32.totalorder %v268, %v289
    %vm388 = vcmp.ne.s32.totalorder %v268, %v290
    %vm389 = vcmp.ne.s32.totalorder %v268, %v291
    %vm390 = vcmp.ne.s32.totalorder %v272, %v242
    %vm391 = vcmp.ne.s32.totalorder %v272, %v277
    %vm392 = vcmp.ne.s32.totalorder %v272, %v278
    %vm393 = vcmp.ne.s32.totalorder %v272, %v279
    %vm394 = vcmp.ne.s32.totalorder %v272, %v280
    %vm395 = vcmp.ne.s32.totalorder %v272, %v281
    %vm396 = vcmp.ne.s32.totalorder %v272, %v282
    %vm397 = vcmp.ne.s32.totalorder %v272, %v283
    %vm398 = vcmp.ne.s32.totalorder %v272, %v284
    %vm399 = vcmp.ne.s32.totalorder %v272, %v285
    %vm400 = vcmp.ne.s32.totalorder %v272, %v286
    %vm401 = vcmp.ne.s32.totalorder %v272, %v287
    %vm402 = vcmp.ne.s32.totalorder %v272, %v288
    %vm403 = vcmp.ne.s32.totalorder %v272, %v289
    %vm404 = vcmp.ne.s32.totalorder %v272, %v290
    %vm405 = vcmp.ne.s32.totalorder %v272, %v291
    %vm406 = vcmp.ne.s32.totalorder %v276, %v242
    %vm407 = vcmp.ne.s32.totalorder %v276, %v277
    %vm408 = vcmp.ne.s32.totalorder %v276, %v278
    %vm409 = vcmp.ne.s32.totalorder %v276, %v279
    %vm410 = vcmp.ne.s32.totalorder %v276, %v280
    %vm411 = vcmp.ne.s32.totalorder %v276, %v281
    %vm412 = vcmp.ne.s32.totalorder %v276, %v282
    %vm413 = vcmp.ne.s32.totalorder %v276, %v283
    %vm414 = vcmp.ne.s32.totalorder %v276, %v284
    %vm415 = vcmp.ne.s32.totalorder %v276, %v285
    %vm416 = vcmp.ne.s32.totalorder %v276, %v286
    %vm417 = vcmp.ne.s32.totalorder %v276, %v287
    %vm418 = vcmp.ne.s32.totalorder %v276, %v288
    %vm419 = vcmp.ne.s32.totalorder %v276, %v289
    %vm420 = vcmp.ne.s32.totalorder %v276, %v290
    %vm421 = vcmp.ne.s32.totalorder %v276, %v291
    %v422 = vld [vmem:[%s2] sm:$0xff]
    %v423 = vld [vmem:[%s2 + $0x8] sm:$0xff]
    %v424 = vld [vmem:[%s2 + $0x10] sm:$0xff]
    %v425 = vld [vmem:[%s2 + $0x18] sm:$0xff]
    %v426 = vld [vmem:[%s2 + $0x20] sm:$0xff]
    %v427 = vld [vmem:[%s2 + $0x28] sm:$0xff]
    %v428 = vld [vmem:[%s2 + $0x30] sm:$0xff]
    %v429 = vld [vmem:[%s2 + $0x38] sm:$0xff]
    %v430 = vld [vmem:[%s2 + $0x40] sm:$0xff]
    %v431 = vld [vmem:[%s2 + $0x48] sm:$0xff]
    %v432 = vld [vmem:[%s2 + $0x50] sm:$0xff]
    %v433 = vld [vmem:[%s2 + $0x58] sm:$0xff]
    %v434 = vld [vmem:[%s2 + $0x60] sm:$0xff]
    %v435 = vld [vmem:[%s2 + $0x68] sm:$0xff]
    %v436 = vld [vmem:[%s2 + $0x70] sm:$0xff]
    %v437 = vld [vmem:[%s2 + $0x78] sm:$0xff]
    %v438 = vlaneseq
    %v439 = vshrl.u32 %v438, 7
    %v440 = vsub.s32 0, %v439
    %v441 = vrot.slane %v215, %v440
    %v442 = vlaneseq
    %v443 = vshrl.u32 %v442, 7
    %v444 = vsub.s32 0, %v443
    %v445 = vrot.slane %v229, %v444
    %v446 = vlaneseq
    %v447 = vshrl.u32 %v446, 7
    %v448 = vsub.s32 0, %v447
    %v449 = vrot.slane %v237, %v448
    %v450 = vlaneseq
    %v451 = vshrl.u32 %v450, 7
    %v452 = vsub.s32 0, %v451
    %v453 = vrot.slane %v239, %v452
    %v454 = vlaneseq
    %v455 = vshrl.u32 %v454, 7
    %v456 = vsub.s32 0, %v455
    %v457 = vrot.slane %v222, %v456
    %v458 = vlaneseq
    %v459 = vshrl.u32 %v458, 7
    %v460 = vsub.s32 0, %v459
    %v461 = vrot.slane %v236, %v460
    %v462 = vlaneseq
    %v463 = vshrl.u32 %v462, 7
    %v464 = vsub.s32 0, %v463
    %v465 = vrot.slane %v238, %v464
    %v466 = vlaneseq
    %v467 = vshrl.u32 %v466, 7
    %v468 = vsub.s32 0, %v467
    %v469 = vrot.slane %v240, %v468
    %vm470 = vcmp.eq.s32.totalorder %v441, %v422
    %vm471 = vcmp.eq.s32.totalorder %v441, %v423
    %vm472 = vcmp.eq.s32.totalorder %v441, %v424
    %vm473 = vcmp.eq.s32.totalorder %v441, %v425
    %vm474 = vcmp.eq.s32.totalorder %v441, %v426
    %vm475 = vcmp.eq.s32.totalorder %v441, %v427
    %vm476 = vcmp.eq.s32.totalorder %v441, %v428
    %vm477 = vcmp.eq.s32.totalorder %v441, %v429
    %vm478 = vcmp.eq.s32.totalorder %v441, %v430
    %vm479 = vcmp.eq.s32.totalorder %v441, %v431
    %vm480 = vcmp.eq.s32.totalorder %v441, %v432
    %vm481 = vcmp.eq.s32.totalorder %v441, %v433
    %vm482 = vcmp.eq.s32.totalorder %v441, %v434
    %vm483 = vcmp.eq.s32.totalorder %v441, %v435
    %vm484 = vcmp.eq.s32.totalorder %v441, %v436
    %vm485 = vcmp.eq.s32.totalorder %v441, %v437
    %vm486 = vcmp.eq.s32.totalorder %v445, %v422
    %vm487 = vcmp.eq.s32.totalorder %v445, %v423
    %vm488 = vcmp.eq.s32.totalorder %v445, %v424
    %vm489 = vcmp.eq.s32.totalorder %v445, %v425
    %vm490 = vcmp.eq.s32.totalorder %v445, %v426
    %vm491 = vcmp.eq.s32.totalorder %v445, %v427
    %vm492 = vcmp.eq.s32.totalorder %v445, %v428
    %vm493 = vcmp.eq.s32.totalorder %v445, %v429
    %vm494 = vcmp.eq.s32.totalorder %v445, %v430
    %vm495 = vcmp.eq.s32.totalorder %v445, %v431
    %vm496 = vcmp.eq.s32.totalorder %v445, %v432
    %vm497 = vcmp.eq.s32.totalorder %v445, %v433
    %vm498 = vcmp.eq.s32.totalorder %v445, %v434
    %vm499 = vcmp.eq.s32.totalorder %v445, %v435
    %vm500 = vcmp.eq.s32.totalorder %v445, %v436
    %vm501 = vcmp.eq.s32.totalorder %v445, %v437
    %vm502 = vcmp.eq.s32.totalorder %v449, %v422
    %vm503 = vcmp.eq.s32.totalorder %v449, %v423
    %vm504 = vcmp.eq.s32.totalorder %v449, %v424
    %vm505 = vcmp.eq.s32.totalorder %v449, %v425
    %vm506 = vcmp.eq.s32.totalorder %v449, %v426
    %vm507 = vcmp.eq.s32.totalorder %v449, %v427
    %vm508 = vcmp.eq.s32.totalorder %v449, %v428
    %vm509 = vcmp.eq.s32.totalorder %v449, %v429
    %vm510 = vcmp.eq.s32.totalorder %v449, %v430
    %vm511 = vcmp.eq.s32.totalorder %v449, %v431
    %vm512 = vcmp.eq.s32.totalorder %v449, %v432
    %vm513 = vcmp.eq.s32.totalorder %v449, %v433
    %vm514 = vcmp.eq.s32.totalorder %v449, %v434
    %vm515 = vcmp.eq.s32.totalorder %v449, %v435
    %vm516 = vcmp.eq.s32.totalorder %v449, %v436
    %vm517 = vcmp.eq.s32.totalorder %v449, %v437
    %vm518 = vcmp.eq.s32.totalorder %v453, %v422
    %vm519 = vcmp.eq.s32.totalorder %v453, %v423
    %vm520 = vcmp.eq.s32.totalorder %v453, %v424
    %vm521 = vcmp.eq.s32.totalorder %v453, %v425
    %vm522 = vcmp.eq.s32.totalorder %v453, %v426
    %vm523 = vcmp.eq.s32.totalorder %v453, %v427
    %vm524 = vcmp.eq.s32.totalorder %v453, %v428
    %vm525 = vcmp.eq.s32.totalorder %v453, %v429
    %vm526 = vcmp.eq.s32.totalorder %v453, %v430
    %vm527 = vcmp.eq.s32.totalorder %v453, %v431
    %vm528 = vcmp.eq.s32.totalorder %v453, %v432
    %vm529 = vcmp.eq.s32.totalorder %v453, %v433
    %vm530 = vcmp.eq.s32.totalorder %v453, %v434
    %vm531 = vcmp.eq.s32.totalorder %v453, %v435
    %vm532 = vcmp.eq.s32.totalorder %v453, %v436
    %vm533 = vcmp.eq.s32.totalorder %v453, %v437
    %vm534 = vcmp.eq.s32.totalorder %v457, %v422
    %vm535 = vcmp.eq.s32.totalorder %v457, %v423
    %vm536 = vcmp.eq.s32.totalorder %v457, %v424
    %vm537 = vcmp.eq.s32.totalorder %v457, %v425
    %vm538 = vcmp.eq.s32.totalorder %v457, %v426
    %vm539 = vcmp.eq.s32.totalorder %v457, %v427
    %vm540 = vcmp.eq.s32.totalorder %v457, %v428
    %vm541 = vcmp.eq.s32.totalorder %v457, %v429
    %vm542 = vcmp.eq.s32.totalorder %v457, %v430
    %vm543 = vcmp.eq.s32.totalorder %v457, %v431
    %vm544 = vcmp.eq.s32.totalorder %v457, %v432
    %vm545 = vcmp.eq.s32.totalorder %v457, %v433
    %vm546 = vcmp.eq.s32.totalorder %v457, %v434
    %vm547 = vcmp.eq.s32.totalorder %v457, %v435
    %vm548 = vcmp.eq.s32.totalorder %v457, %v436
    %vm549 = vcmp.eq.s32.totalorder %v457, %v437
    %vm550 = vcmp.eq.s32.totalorder %v461, %v422
    %vm551 = vcmp.eq.s32.totalorder %v461, %v423
    %vm552 = vcmp.eq.s32.totalorder %v461, %v424
    %vm553 = vcmp.eq.s32.totalorder %v461, %v425
    %vm554 = vcmp.eq.s32.totalorder %v461, %v426
    %vm555 = vcmp.eq.s32.totalorder %v461, %v427
    %vm556 = vcmp.eq.s32.totalorder %v461, %v428
    %vm557 = vcmp.eq.s32.totalorder %v461, %v429
    %vm558 = vcmp.eq.s32.totalorder %v461, %v430
    %vm559 = vcmp.eq.s32.totalorder %v461, %v431
    %vm560 = vcmp.eq.s32.totalorder %v461, %v432
    %vm561 = vcmp.eq.s32.totalorder %v461, %v433
    %vm562 = vcmp.eq.s32.totalorder %v461, %v434
    %vm563 = vcmp.eq.s32.totalorder %v461, %v435
    %vm564 = vcmp.eq.s32.totalorder %v461, %v436
    %vm565 = vcmp.eq.s32.totalorder %v461, %v437
    %vm566 = vcmp.eq.s32.totalorder %v465, %v422
    %vm567 = vcmp.eq.s32.totalorder %v465, %v423
    %vm568 = vcmp.eq.s32.totalorder %v465, %v424
    %vm569 = vcmp.eq.s32.totalorder %v465, %v425
    %vm570 = vcmp.eq.s32.totalorder %v465, %v426
    %vm571 = vcmp.eq.s32.totalorder %v465, %v427
    %vm572 = vcmp.eq.s32.totalorder %v465, %v428
    %vm573 = vcmp.eq.s32.totalorder %v465, %v429
    %vm574 = vcmp.eq.s32.totalorder %v465, %v430
    %vm575 = vcmp.eq.s32.totalorder %v465, %v431
    %vm576 = vcmp.eq.s32.totalorder %v465, %v432
    %vm577 = vcmp.eq.s32.totalorder %v465, %v433
    %vm578 = vcmp.eq.s32.totalorder %v465, %v434
    %vm579 = vcmp.eq.s32.totalorder %v465, %v435
    %vm580 = vcmp.eq.s32.totalorder %v465, %v436
    %vm581 = vcmp.eq.s32.totalorder %v465, %v437
    %vm582 = vcmp.eq.s32.totalorder %v469, %v422
    %vm583 = vcmp.eq.s32.totalorder %v469, %v423
    %vm584 = vcmp.eq.s32.totalorder %v469, %v424
    %vm585 = vcmp.eq.s32.totalorder %v469, %v425
    %vm586 = vcmp.eq.s32.totalorder %v469, %v426
    %vm587 = vcmp.eq.s32.totalorder %v469, %v427
    %vm588 = vcmp.eq.s32.totalorder %v469, %v428
    %vm589 = vcmp.eq.s32.totalorder %v469, %v429
    %vm590 = vcmp.eq.s32.totalorder %v469, %v430
    %vm591 = vcmp.eq.s32.totalorder %v469, %v431
    %vm592 = vcmp.eq.s32.totalorder %v469, %v432
    %vm593 = vcmp.eq.s32.totalorder %v469, %v433
    %vm594 = vcmp.eq.s32.totalorder %v469, %v434
    %vm595 = vcmp.eq.s32.totalorder %v469, %v435
    %vm596 = vcmp.eq.s32.totalorder %v469, %v436
    %vm597 = vcmp.eq.s32.totalorder %v469, %v437
    %vm598 = vmand %vm294, %vm470
    %vm599 = vmand %vm295, %vm471
    %vm600 = vmand %vm296, %vm472
    %vm601 = vmand %vm297, %vm473
    %vm602 = vmand %vm298, %vm474
    %vm603 = vmand %vm299, %vm475
    %vm604 = vmand %vm300, %vm476
    %vm605 = vmand %vm301, %vm477
    %vm606 = vmand %vm302, %vm478
    %vm607 = vmand %vm303, %vm479
    %vm608 = vmand %vm304, %vm480
    %vm609 = vmand %vm305, %vm481
    %vm610 = vmand %vm306, %vm482
    %vm611 = vmand %vm307, %vm483
    %vm612 = vmand %vm308, %vm484
    %vm613 = vmand %vm309, %vm485
    %vm614 = vmand %vm310, %vm486
    %vm615 = vmand %vm311, %vm487
    %vm616 = vmand %vm312, %vm488
    %vm617 = vmand %vm313, %vm489
    %vm618 = vmand %vm314, %vm490
    %vm619 = vmand %vm315, %vm491
    %vm620 = vmand %vm316, %vm492
    %vm621 = vmand %vm317, %vm493
    %vm622 = vmand %vm318, %vm494
    %vm623 = vmand %vm319, %vm495
    %vm624 = vmand %vm320, %vm496
    %vm625 = vmand %vm321, %vm497
    %vm626 = vmand %vm322, %vm498
    %vm627 = vmand %vm323, %vm499
    %vm628 = vmand %vm324, %vm500
    %vm629 = vmand %vm325, %vm501
    %vm630 = vmand %vm326, %vm502
    %vm631 = vmand %vm327, %vm503
    %vm632 = vmand %vm328, %vm504
    %vm633 = vmand %vm329, %vm505
    %vm634 = vmand %vm330, %vm506
    %vm635 = vmand %vm331, %vm507
    %vm636 = vmand %vm332, %vm508
    %vm637 = vmand %vm333, %vm509
    %vm638 = vmand %vm334, %vm510
    %vm639 = vmand %vm335, %vm511
    %vm640 = vmand %vm336, %vm512
    %vm641 = vmand %vm337, %vm513
    %vm642 = vmand %vm338, %vm514
    %vm643 = vmand %vm339, %vm515
    %vm644 = vmand %vm340, %vm516
    %vm645 = vmand %vm341, %vm517
    %vm646 = vmand %vm342, %vm518
    %vm647 = vmand %vm343, %vm519
    %vm648 = vmand %vm344, %vm520
    %vm649 = vmand %vm345, %vm521
    %vm650 = vmand %vm346, %vm522
    %vm651 = vmand %vm347, %vm523
    %vm652 = vmand %vm348, %vm524
    %vm653 = vmand %vm349, %vm525
    %vm654 = vmand %vm350, %vm526
    %vm655 = vmand %vm351, %vm527
    %vm656 = vmand %vm352, %vm528
    %vm657 = vmand %vm353, %vm529
    %vm658 = vmand %vm354, %vm530
    %vm659 = vmand %vm355, %vm531
    %vm660 = vmand %vm356, %vm532
    %vm661 = vmand %vm357, %vm533
    %vm662 = vmand %vm358, %vm534
    %vm663 = vmand %vm359, %vm535
    %vm664 = vmand %vm360, %vm536
    %vm665 = vmand %vm361, %vm537
    %vm666 = vmand %vm362, %vm538
    %vm667 = vmand %vm363, %vm539
    %vm668 = vmand %vm364, %vm540
    %vm669 = vmand %vm365, %vm541
    %vm670 = vmand %vm366, %vm542
    %vm671 = vmand %vm367, %vm543
    %vm672 = vmand %vm368, %vm544
    %vm673 = vmand %vm369, %vm545
    %vm674 = vmand %vm370, %vm546
    %vm675 = vmand %vm371, %vm547
    %vm676 = vmand %vm372, %vm548
    %vm677 = vmand %vm373, %vm549
    %vm678 = vmand %vm374, %vm550
    %vm679 = vmand %vm375, %vm551
    %vm680 = vmand %vm376, %vm552
    %vm681 = vmand %vm377, %vm553
    %vm682 = vmand %vm378, %vm554
    %vm683 = vmand %vm379, %vm555
    %vm684 = vmand %vm380, %vm556
    %vm685 = vmand %vm381, %vm557
    %vm686 = vmand %vm382, %vm558
    %vm687 = vmand %vm383, %vm559
    %vm688 = vmand %vm384, %vm560
    %vm689 = vmand %vm385, %vm561
    %vm690 = vmand %vm386, %vm562
    %vm691 = vmand %vm387, %vm563
    %vm692 = vmand %vm388, %vm564
    %vm693 = vmand %vm389, %vm565
    %vm694 = vmand %vm390, %vm566
    %vm695 = vmand %vm391, %vm567
    %vm696 = vmand %vm392, %vm568
    %vm697 = vmand %vm393, %vm569
    %vm698 = vmand %vm394, %vm570
    %vm699 = vmand %vm395, %vm571
    %vm700 = vmand %vm396, %vm572
    %vm701 = vmand %vm397, %vm573
    %vm702 = vmand %vm398, %vm574
    %vm703 = vmand %vm399, %vm575
    %vm704 = vmand %vm400, %vm576
    %vm705 = vmand %vm401, %vm577
    %vm706 = vmand %vm402, %vm578
    %vm707 = vmand %vm403, %vm579
    %vm708 = vmand %vm404, %vm580
    %vm709 = vmand %vm405, %vm581
    %vm710 = vmand %vm406, %vm582
    %vm711 = vmand %vm407, %vm583
    %vm712 = vmand %vm408, %vm584
    %vm713 = vmand %vm409, %vm585
    %vm714 = vmand %vm410, %vm586
    %vm715 = vmand %vm411, %vm587
    %vm716 = vmand %vm412, %vm588
    %vm717 = vmand %vm413, %vm589
    %vm718 = vmand %vm414, %vm590
    %vm719 = vmand %vm415, %vm591
    %vm720 = vmand %vm416, %vm592
    %vm721 = vmand %vm417, %vm593
    %vm722 = vmand %vm418, %vm594
    %vm723 = vmand %vm419, %vm595
    %vm724 = vmand %vm420, %vm596
    %vm725 = vmand %vm421, %vm597
    %vm726 = vcmp.lt.s32.totalorder %v242, 8
    %vm727 = vcmp.lt.s32.totalorder %v277, 8
    %vm728 = vcmp.lt.s32.totalorder %v278, 8
    %vm729 = vcmp.lt.s32.totalorder %v279, 8
    %vm730 = vcmp.lt.s32.totalorder %v280, 8
    %vm731 = vcmp.lt.s32.totalorder %v281, 8
    %vm732 = vcmp.lt.s32.totalorder %v282, 8
    %vm733 = vcmp.lt.s32.totalorder %v283, 8
    %vm734 = vcmp.lt.s32.totalorder %v284, 8
    %vm735 = vcmp.lt.s32.totalorder %v285, 8
    %vm736 = vcmp.lt.s32.totalorder %v286, 8
    %vm737 = vcmp.lt.s32.totalorder %v287, 8
    %vm738 = vcmp.lt.s32.totalorder %v288, 8
    %vm739 = vcmp.lt.s32.totalorder %v289, 8
    %vm740 = vcmp.lt.s32.totalorder %v290, 8
    %vm741 = vcmp.lt.s32.totalorder %v291, 8
    %v742 = vsel %vm726, 1, 0
    %v743 = vsel %vm727, 1, 0
    %v744 = vsel %vm728, 1, 0
    %v745 = vsel %vm729, 1, 0
    %v746 = vsel %vm730, 1, 0
    %v747 = vsel %vm731, 1, 0
    %v748 = vsel %vm732, 1, 0
    %v749 = vsel %vm733, 1, 0
    %v750 = vsel %vm734, 1, 0
    %v751 = vsel %vm735, 1, 0
    %v752 = vsel %vm736, 1, 0
    %v753 = vsel %vm737, 1, 0
    %v754 = vsel %vm738, 1, 0
    %v755 = vsel %vm739, 1, 0
    %v756 = vsel %vm740, 1, 0
    %v757 = vsel %vm741, 1, 0
    %vm758 = vcmp.eq.s32.totalorder %v742, 1
    %vm759 = vcmp.eq.s32.totalorder %v743, 1
    %vm760 = vcmp.eq.s32.totalorder %v744, 1
    %vm761 = vcmp.eq.s32.totalorder %v745, 1
    %vm762 = vcmp.eq.s32.totalorder %v746, 1
    %vm763 = vcmp.eq.s32.totalorder %v747, 1
    %vm764 = vcmp.eq.s32.totalorder %v748, 1
    %vm765 = vcmp.eq.s32.totalorder %v749, 1
    %vm766 = vcmp.eq.s32.totalorder %v750, 1
    %vm767 = vcmp.eq.s32.totalorder %v751, 1
    %vm768 = vcmp.eq.s32.totalorder %v752, 1
    %vm769 = vcmp.eq.s32.totalorder %v753, 1
    %vm770 = vcmp.eq.s32.totalorder %v754, 1
    %vm771 = vcmp.eq.s32.totalorder %v755, 1
    %vm772 = vcmp.eq.s32.totalorder %v756, 1
    %vm773 = vcmp.eq.s32.totalorder %v757, 1
    %vm774 = vmand %vm598, %vm758
    %vm775 = vmand %vm599, %vm759
    %vm776 = vmand %vm600, %vm760
    %vm777 = vmand %vm601, %vm761
    %vm778 = vmand %vm602, %vm762
    %vm779 = vmand %vm603, %vm763
    %vm780 = vmand %vm604, %vm764
    %vm781 = vmand %vm605, %vm765
    %vm782 = vmand %vm606, %vm766
    %vm783 = vmand %vm607, %vm767
    %vm784 = vmand %vm608, %vm768
    %vm785 = vmand %vm609, %vm769
    %vm786 = vmand %vm610, %vm770
    %vm787 = vmand %vm611, %vm771
    %vm788 = vmand %vm612, %vm772
    %vm789 = vmand %vm613, %vm773
    %vm790 = vmand %vm614, %vm758
    %vm791 = vmand %vm615, %vm759
    %vm792 = vmand %vm616, %vm760
    %vm793 = vmand %vm617, %vm761
    %vm794 = vmand %vm618, %vm762
    %vm795 = vmand %vm619, %vm763
    %vm796 = vmand %vm620, %vm764
    %vm797 = vmand %vm621, %vm765
    %vm798 = vmand %vm622, %vm766
    %vm799 = vmand %vm623, %vm767
    %vm800 = vmand %vm624, %vm768
    %vm801 = vmand %vm625, %vm769
    %vm802 = vmand %vm626, %vm770
    %vm803 = vmand %vm627, %vm771
    %vm804 = vmand %vm628, %vm772
    %vm805 = vmand %vm629, %vm773
    %vm806 = vmand %vm630, %vm758
    %vm807 = vmand %vm631, %vm759
    %vm808 = vmand %vm632, %vm760
    %vm809 = vmand %vm633, %vm761
    %vm810 = vmand %vm634, %vm762
    %vm811 = vmand %vm635, %vm763
    %vm812 = vmand %vm636, %vm764
    %vm813 = vmand %vm637, %vm765
    %vm814 = vmand %vm638, %vm766
    %vm815 = vmand %vm639, %vm767
    %vm816 = vmand %vm640, %vm768
    %vm817 = vmand %vm641, %vm769
    %vm818 = vmand %vm642, %vm770
    %vm819 = vmand %vm643, %vm771
    %vm820 = vmand %vm644, %vm772
    %vm821 = vmand %vm645, %vm773
    %vm822 = vmand %vm646, %vm758
    %vm823 = vmand %vm647, %vm759
    %vm824 = vmand %vm648, %vm760
    %vm825 = vmand %vm649, %vm761
    %vm826 = vmand %vm650, %vm762
    %vm827 = vmand %vm651, %vm763
    %vm828 = vmand %vm652, %vm764
    %vm829 = vmand %vm653, %vm765
    %vm830 = vmand %vm654, %vm766
    %vm831 = vmand %vm655, %vm767
    %vm832 = vmand %vm656, %vm768
    %vm833 = vmand %vm657, %vm769
    %vm834 = vmand %vm658, %vm770
    %vm835 = vmand %vm659, %vm771
    %vm836 = vmand %vm660, %vm772
    %vm837 = vmand %vm661, %vm773
    %vm838 = vmand %vm662, %vm758
    %vm839 = vmand %vm663, %vm759
    %vm840 = vmand %vm664, %vm760
    %vm841 = vmand %vm665, %vm761
    %vm842 = vmand %vm666, %vm762
    %vm843 = vmand %vm667, %vm763
    %vm844 = vmand %vm668, %vm764
    %vm845 = vmand %vm669, %vm765
    %vm846 = vmand %vm670, %vm766
    %vm847 = vmand %vm671, %vm767
    %vm848 = vmand %vm672, %vm768
    %vm849 = vmand %vm673, %vm769
    %vm850 = vmand %vm674, %vm770
    %vm851 = vmand %vm675, %vm771
    %vm852 = vmand %vm676, %vm772
    %vm853 = vmand %vm677, %vm773
    %vm854 = vmand %vm678, %vm758
    %vm855 = vmand %vm679, %vm759
    %vm856 = vmand %vm680, %vm760
    %vm857 = vmand %vm681, %vm761
    %vm858 = vmand %vm682, %vm762
    %vm859 = vmand %vm683, %vm763
    %vm860 = vmand %vm684, %vm764
    %vm861 = vmand %vm685, %vm765
    %vm862 = vmand %vm686, %vm766
    %vm863 = vmand %vm687, %vm767
    %vm864 = vmand %vm688, %vm768
    %vm865 = vmand %vm689, %vm769
    %vm866 = vmand %vm690, %vm770
    %vm867 = vmand %vm691, %vm771
    %vm868 = vmand %vm692, %vm772
    %vm869 = vmand %vm693, %vm773
    %vm870 = vmand %vm694, %vm758
    %vm871 = vmand %vm695, %vm759
    %vm872 = vmand %vm696, %vm760
    %vm873 = vmand %vm697, %vm761
    %vm874 = vmand %vm698, %vm762
    %vm875 = vmand %vm699, %vm763
    %vm876 = vmand %vm700, %vm764
    %vm877 = vmand %vm701, %vm765
    %vm878 = vmand %vm702, %vm766
    %vm879 = vmand %vm703, %vm767
    %vm880 = vmand %vm704, %vm768
    %vm881 = vmand %vm705, %vm769
    %vm882 = vmand %vm706, %vm770
    %vm883 = vmand %vm707, %vm771
    %vm884 = vmand %vm708, %vm772
    %vm885 = vmand %vm709, %vm773
    %vm886 = vmand %vm710, %vm758
    %vm887 = vmand %vm711, %vm759
    %vm888 = vmand %vm712, %vm760
    %vm889 = vmand %vm713, %vm761
    %vm890 = vmand %vm714, %vm762
    %vm891 = vmand %vm715, %vm763
    %vm892 = vmand %vm716, %vm764
    %vm893 = vmand %vm717, %vm765
    %vm894 = vmand %vm718, %vm766
    %vm895 = vmand %vm719, %vm767
    %vm896 = vmand %vm720, %vm768
    %vm897 = vmand %vm721, %vm769
    %vm898 = vmand %vm722, %vm770
    %vm899 = vmand %vm723, %vm771
    %vm900 = vmand %vm724, %vm772
    %vm901 = vmand %vm725, %vm773
    %vm902 = vcmp.lt.s32.totalorder %v248, 8
    %vm903 = vcmp.lt.s32.totalorder %v252, 8
    %vm904 = vcmp.lt.s32.totalorder %v256, 8
    %vm905 = vcmp.lt.s32.totalorder %v260, 8
    %vm906 = vcmp.lt.s32.totalorder %v264, 8
    %vm907 = vcmp.lt.s32.totalorder %v268, 8
    %vm908 = vcmp.lt.s32.totalorder %v272, 8
    %vm909 = vcmp.lt.s32.totalorder %v276, 8
    %v910 = vsel %vm902, 1, 0
    %v911 = vsel %vm903, 1, 0
    %v912 = vsel %vm904, 1, 0
    %v913 = vsel %vm905, 1, 0
    %v914 = vsel %vm906, 1, 0
    %v915 = vsel %vm907, 1, 0
    %v916 = vsel %vm908, 1, 0
    %v917 = vsel %vm909, 1, 0
    %vm918 = vcmp.eq.s32.totalorder %v910, 1
    %vm919 = vcmp.eq.s32.totalorder %v911, 1
    %vm920 = vcmp.eq.s32.totalorder %v912, 1
    %vm921 = vcmp.eq.s32.totalorder %v913, 1
    %vm922 = vcmp.eq.s32.totalorder %v914, 1
    %vm923 = vcmp.eq.s32.totalorder %v915, 1
    %vm924 = vcmp.eq.s32.totalorder %v916, 1
    %vm925 = vcmp.eq.s32.totalorder %v917, 1
    %vm926 = vmand %vm774, %vm918
    %vm927 = vmand %vm775, %vm918
    %vm928 = vmand %vm776, %vm918
    %vm929 = vmand %vm777, %vm918
    %vm930 = vmand %vm778, %vm918
    %vm931 = vmand %vm779, %vm918
    %vm932 = vmand %vm780, %vm918
    %vm933 = vmand %vm781, %vm918
    %vm934 = vmand %vm782, %vm918
    %vm935 = vmand %vm783, %vm918
    %vm936 = vmand %vm784, %vm918
    %vm937 = vmand %vm785, %vm918
    %vm938 = vmand %vm786, %vm918
    %vm939 = vmand %vm787, %vm918
    %vm940 = vmand %vm788, %vm918
    %vm941 = vmand %vm789, %vm918
    %vm942 = vmand %vm790, %vm919
    %vm943 = vmand %vm791, %vm919
    %vm944 = vmand %vm792, %vm919
    %vm945 = vmand %vm793, %vm919
    %vm946 = vmand %vm794, %vm919
    %vm947 = vmand %vm795, %vm919
    %vm948 = vmand %vm796, %vm919
    %vm949 = vmand %vm797, %vm919
    %vm950 = vmand %vm798, %vm919
    %vm951 = vmand %vm799, %vm919
    %vm952 = vmand %vm800, %vm919
    %vm953 = vmand %vm801, %vm919
    %vm954 = vmand %vm802, %vm919
    %vm955 = vmand %vm803, %vm919
    %vm956 = vmand %vm804, %vm919
    %vm957 = vmand %vm805, %vm919
    %vm958 = vmand %vm806, %vm920
    %vm959 = vmand %vm807, %vm920
    %vm960 = vmand %vm808, %vm920
    %vm961 = vmand %vm809, %vm920
    %vm962 = vmand %vm810, %vm920
    %vm963 = vmand %vm811, %vm920
    %vm964 = vmand %vm812, %vm920
    %vm965 = vmand %vm813, %vm920
    %vm966 = vmand %vm814, %vm920
    %vm967 = vmand %vm815, %vm920
    %vm968 = vmand %vm816, %vm920
    %vm969 = vmand %vm817, %vm920
    %vm970 = vmand %vm818, %vm920
    %vm971 = vmand %vm819, %vm920
    %vm972 = vmand %vm820, %vm920
    %vm973 = vmand %vm821, %vm920
    %vm974 = vmand %vm822, %vm921
    %vm975 = vmand %vm823, %vm921
    %vm976 = vmand %vm824, %vm921
    %vm977 = vmand %vm825, %vm921
    %vm978 = vmand %vm826, %vm921
    %vm979 = vmand %vm827, %vm921
    %vm980 = vmand %vm828, %vm921
    %vm981 = vmand %vm829, %vm921
    %vm982 = vmand %vm830, %vm921
    %vm983 = vmand %vm831, %vm921
    %vm984 = vmand %vm832, %vm921
    %vm985 = vmand %vm833, %vm921
    %vm986 = vmand %vm834, %vm921
    %vm987 = vmand %vm835, %vm921
    %vm988 = vmand %vm836, %vm921
    %vm989 = vmand %vm837, %vm921
    %vm990 = vmand %vm838, %vm922
    %vm991 = vmand %vm839, %vm922
    %vm992 = vmand %vm840, %vm922
    %vm993 = vmand %vm841, %vm922
    %vm994 = vmand %vm842, %vm922
    %vm995 = vmand %vm843, %vm922
    %vm996 = vmand %vm844, %vm922
    %vm997 = vmand %vm845, %vm922
    %vm998 = vmand %vm846, %vm922
    %vm999 = vmand %vm847, %vm922
    %vm1000 = vmand %vm848, %vm922
    %vm1001 = vmand %vm849, %vm922
    %vm1002 = vmand %vm850, %vm922
    %vm1003 = vmand %vm851, %vm922
    %vm1004 = vmand %vm852, %vm922
    %vm1005 = vmand %vm853, %vm922
    %vm1006 = vmand %vm854, %vm923
    %vm1007 = vmand %vm855, %vm923
    %vm1008 = vmand %vm856, %vm923
    %vm1009 = vmand %vm857, %vm923
    %vm1010 = vmand %vm858, %vm923
    %vm1011 = vmand %vm859, %vm923
    %vm1012 = vmand %vm860, %vm923
    %vm1013 = vmand %vm861, %vm923
    %vm1014 = vmand %vm862, %vm923
    %vm1015 = vmand %vm863, %vm923
    %vm1016 = vmand %vm864, %vm923
    %vm1017 = vmand %vm865, %vm923
    %vm1018 = vmand %vm866, %vm923
    %vm1019 = vmand %vm867, %vm923
    %vm1020 = vmand %vm868, %vm923
    %vm1021 = vmand %vm869, %vm923
    %vm1022 = vmand %vm870, %vm924
    %vm1023 = vmand %vm871, %vm924
    %vm1024 = vmand %vm872, %vm924
    %vm1025 = vmand %vm873, %vm924
    %vm1026 = vmand %vm874, %vm924
    %vm1027 = vmand %vm875, %vm924
    %vm1028 = vmand %vm876, %vm924
    %vm1029 = vmand %vm877, %vm924
    %vm1030 = vmand %vm878, %vm924
    %vm1031 = vmand %vm879, %vm924
    %vm1032 = vmand %vm880, %vm924
    %vm1033 = vmand %vm881, %vm924
    %vm1034 = vmand %vm882, %vm924
    %vm1035 = vmand %vm883, %vm924
    %vm1036 = vmand %vm884, %vm924
    %vm1037 = vmand %vm885, %vm924
    %vm1038 = vmand %vm886, %vm925
    %vm1039 = vmand %vm887, %vm925
    %vm1040 = vmand %vm888, %vm925
    %vm1041 = vmand %vm889, %vm925
    %vm1042 = vmand %vm890, %vm925
    %vm1043 = vmand %vm891, %vm925
    %vm1044 = vmand %vm892, %vm925
    %vm1045 = vmand %vm893, %vm925
    %vm1046 = vmand %vm894, %vm925
    %vm1047 = vmand %vm895, %vm925
    %vm1048 = vmand %vm896, %vm925
    %vm1049 = vmand %vm897, %vm925
    %vm1050 = vmand %vm898, %vm925
    %vm1051 = vmand %vm899, %vm925
    %vm1052 = vmand %vm900, %vm925
    %vm1053 = vmand %vm901, %vm925
    %v1054 = vld [vmem:[%s1] sm:$0x1]
    %1055 = vset.pattern.permute.xlu0 0
    %1056 = vperm.xlu0 %1055, %v215
    %v1057 = vpop.permute.xlu0 %1056
    %v1058 = vlaneseq
    %v1059 = vshrl.u32 %v1058, 7
    %v1060 = vsub.s32 0, %v1059
    %v1061 = vrot.slane %v1057, %v1060
    %1062 = vset.pattern.permute.xlu0 0
    %1063 = vperm.xlu0 %1062, %v229
    %v1064 = vpop.permute.xlu0 %1063
    %v1065 = vlaneseq
    %v1066 = vshrl.u32 %v1065, 7
    %v1067 = vsub.s32 0, %v1066
    %v1068 = vrot.slane %v1064, %v1067
    %1069 = vset.pattern.permute.xlu0 0
    %1070 = vperm.xlu0 %1069, %v237
    %v1071 = vpop.permute.xlu0 %1070
    %v1072 = vlaneseq
    %v1073 = vshrl.u32 %v1072, 7
    %v1074 = vsub.s32 0, %v1073
    %v1075 = vrot.slane %v1071, %v1074
    %1076 = vset.pattern.permute.xlu0 0
    %1077 = vperm.xlu0 %1076, %v239
    %v1078 = vpop.permute.xlu0 %1077
    %v1079 = vlaneseq
    %v1080 = vshrl.u32 %v1079, 7
    %v1081 = vsub.s32 0, %v1080
    %v1082 = vrot.slane %v1078, %v1081
    %1083 = vset.pattern.permute.xlu0 0
    %1084 = vperm.xlu0 %1083, %v222
    %v1085 = vpop.permute.xlu0 %1084
    %v1086 = vlaneseq
    %v1087 = vshrl.u32 %v1086, 7
    %v1088 = vsub.s32 0, %v1087
    %v1089 = vrot.slane %v1085, %v1088
    %1090 = vset.pattern.permute.xlu0 0
    %1091 = vperm.xlu0 %1090, %v236
    %v1092 = vpop.permute.xlu0 %1091
    %v1093 = vlaneseq
    %v1094 = vshrl.u32 %v1093, 7
    %v1095 = vsub.s32 0, %v1094
    %v1096 = vrot.slane %v1092, %v1095
    %1097 = vset.pattern.permute.xlu0 0
    %1098 = vperm.xlu0 %1097, %v238
    %v1099 = vpop.permute.xlu0 %1098
    %v1100 = vlaneseq
    %v1101 = vshrl.u32 %v1100, 7
    %v1102 = vsub.s32 0, %v1101
    %v1103 = vrot.slane %v1099, %v1102
    %1104 = vset.pattern.permute.xlu0 0
    %1105 = vperm.xlu0 %1104, %v240
    %v1106 = vpop.permute.xlu0 %1105
    %v1107 = vlaneseq
    %v1108 = vshrl.u32 %v1107, 7
    %v1109 = vsub.s32 0, %v1108
    %v1110 = vrot.slane %v1106, %v1109
    %vm1111 = vcmp.ne.s32.totalorder %v1061, %v1054
    %vm1112 = vcmp.ne.s32.totalorder %v1068, %v1054
    %vm1113 = vcmp.ne.s32.totalorder %v1075, %v1054
    %vm1114 = vcmp.ne.s32.totalorder %v1082, %v1054
    %vm1115 = vcmp.ne.s32.totalorder %v1089, %v1054
    %vm1116 = vcmp.ne.s32.totalorder %v1096, %v1054
    %vm1117 = vcmp.ne.s32.totalorder %v1103, %v1054
    %vm1118 = vcmp.ne.s32.totalorder %v1110, %v1054
    %vm1119 = vcmp.lt.s32.totalorder %v293, 8
    %v1120 = vsel %vm1119, 1, 0
    %vm1121 = vcmp.eq.s32.totalorder %v1120, 1
    %vm1122 = vmand %vm1111, %vm1121
    %vm1123 = vmand %vm1112, %vm1121
    %vm1124 = vmand %vm1113, %vm1121
    %vm1125 = vmand %vm1114, %vm1121
    %vm1126 = vmand %vm1115, %vm1121
    %vm1127 = vmand %vm1116, %vm1121
    %vm1128 = vmand %vm1117, %vm1121
    %vm1129 = vmand %vm1118, %vm1121
    %v1130 = vlaneseq
    %v1131 = vshrl.u32 %v1130, 7
    %v1132 = vsub.s32 0, %v1131
    %v1133 = vrot.slane %v189, %v1132
    %1135 = vbcast.lane.b32.xlu0 %v1133, 256
    %v1136 = vpop.permute.xlu0 %1135
    %s1138 = sor.u32 256, 8
    %1139 = vbcast.lane.b32.xlu0 %v1133, %s1138
    %v1140 = vpop.permute.xlu0 %1139
    %s1142 = sor.u32 256, 16
    %1143 = vbcast.lane.b32.xlu0 %v1133, %s1142
    %v1144 = vpop.permute.xlu0 %1143
    %s1146 = sor.u32 256, 24
    %1147 = vbcast.lane.b32.xlu0 %v1133, %s1146
    %v1148 = vpop.permute.xlu0 %1147
    %s1150 = sor.u32 256, 32
    %1151 = vbcast.lane.b32.xlu0 %v1133, %s1150
    %v1152 = vpop.permute.xlu0 %1151
    %s1154 = sor.u32 256, 40
    %1155 = vbcast.lane.b32.xlu0 %v1133, %s1154
    %v1156 = vpop.permute.xlu0 %1155
    %s1158 = sor.u32 256, 48
    %1159 = vbcast.lane.b32.xlu0 %v1133, %s1158
    %v1160 = vpop.permute.xlu0 %1159
    %s1162 = sor.u32 256, 56
    %1163 = vbcast.lane.b32.xlu0 %v1133, %s1162
    %v1164 = vpop.permute.xlu0 %1163
    %s1166 = sor.u32 256, 64
    %1167 = vbcast.lane.b32.xlu0 %v1133, %s1166
    %v1168 = vpop.permute.xlu0 %1167
    %s1170 = sor.u32 256, 72
    %1171 = vbcast.lane.b32.xlu0 %v1133, %s1170
    %v1172 = vpop.permute.xlu0 %1171
    %s1174 = sor.u32 256, 80
    %1175 = vbcast.lane.b32.xlu0 %v1133, %s1174
    %v1176 = vpop.permute.xlu0 %1175
    %s1178 = sor.u32 256, 88
    %1179 = vbcast.lane.b32.xlu0 %v1133, %s1178
    %v1180 = vpop.permute.xlu0 %1179
    %s1182 = sor.u32 256, 96
    %1183 = vbcast.lane.b32.xlu0 %v1133, %s1182
    %v1184 = vpop.permute.xlu0 %1183
    %s1186 = sor.u32 256, 104
    %1187 = vbcast.lane.b32.xlu0 %v1133, %s1186
    %v1188 = vpop.permute.xlu0 %1187
    %s1190 = sor.u32 256, 112
    %1191 = vbcast.lane.b32.xlu0 %v1133, %s1190
    %v1192 = vpop.permute.xlu0 %1191
    %s1194 = sor.u32 256, 120
    %1195 = vbcast.lane.b32.xlu0 %v1133, %s1194
    %v1196 = vpop.permute.xlu0 %1195
    %v1197 = vlaneseq
    %v1198 = vshrl.u32 %v1197, 7
    %v1199 = vsub.s32 1, %v1198
    %v1200 = vrot.slane %v189, %v1199
    %1202 = vbcast.lane.b32.xlu0 %v1200, 256
    %v1203 = vpop.permute.xlu0 %1202
    %s1205 = sor.u32 256, 8
    %1206 = vbcast.lane.b32.xlu0 %v1200, %s1205
    %v1207 = vpop.permute.xlu0 %1206
    %s1209 = sor.u32 256, 16
    %1210 = vbcast.lane.b32.xlu0 %v1200, %s1209
    %v1211 = vpop.permute.xlu0 %1210
    %s1213 = sor.u32 256, 24
    %1214 = vbcast.lane.b32.xlu0 %v1200, %s1213
    %v1215 = vpop.permute.xlu0 %1214
    %s1217 = sor.u32 256, 32
    %1218 = vbcast.lane.b32.xlu0 %v1200, %s1217
    %v1219 = vpop.permute.xlu0 %1218
    %s1221 = sor.u32 256, 40
    %1222 = vbcast.lane.b32.xlu0 %v1200, %s1221
    %v1223 = vpop.permute.xlu0 %1222
    %s1225 = sor.u32 256, 48
    %1226 = vbcast.lane.b32.xlu0 %v1200, %s1225
    %v1227 = vpop.permute.xlu0 %1226
    %s1229 = sor.u32 256, 56
    %1230 = vbcast.lane.b32.xlu0 %v1200, %s1229
    %v1231 = vpop.permute.xlu0 %1230
    %s1233 = sor.u32 256, 64
    %1234 = vbcast.lane.b32.xlu0 %v1200, %s1233
    %v1235 = vpop.permute.xlu0 %1234
    %s1237 = sor.u32 256, 72
    %1238 = vbcast.lane.b32.xlu0 %v1200, %s1237
    %v1239 = vpop.permute.xlu0 %1238
    %s1241 = sor.u32 256, 80
    %1242 = vbcast.lane.b32.xlu0 %v1200, %s1241
    %v1243 = vpop.permute.xlu0 %1242
    %s1245 = sor.u32 256, 88
    %1246 = vbcast.lane.b32.xlu0 %v1200, %s1245
    %v1247 = vpop.permute.xlu0 %1246
    %s1249 = sor.u32 256, 96
    %1250 = vbcast.lane.b32.xlu0 %v1200, %s1249
    %v1251 = vpop.permute.xlu0 %1250
    %s1253 = sor.u32 256, 104
    %1254 = vbcast.lane.b32.xlu0 %v1200, %s1253
    %v1255 = vpop.permute.xlu0 %1254
    %s1257 = sor.u32 256, 112
    %1258 = vbcast.lane.b32.xlu0 %v1200, %s1257
    %v1259 = vpop.permute.xlu0 %1258
    %s1261 = sor.u32 256, 120
    %1262 = vbcast.lane.b32.xlu0 %v1200, %s1261
    %v1263 = vpop.permute.xlu0 %1262
    %v1264 = vlaneseq
    %v1265 = vshrl.u32 %v1264, 7
    %v1266 = vsub.s32 2, %v1265
    %v1267 = vrot.slane %v189, %v1266
    %1269 = vbcast.lane.b32.xlu0 %v1267, 256
    %v1270 = vpop.permute.xlu0 %1269
    %s1272 = sor.u32 256, 8
    %1273 = vbcast.lane.b32.xlu0 %v1267, %s1272
    %v1274 = vpop.permute.xlu0 %1273
    %s1276 = sor.u32 256, 16
    %1277 = vbcast.lane.b32.xlu0 %v1267, %s1276
    %v1278 = vpop.permute.xlu0 %1277
    %s1280 = sor.u32 256, 24
    %1281 = vbcast.lane.b32.xlu0 %v1267, %s1280
    %v1282 = vpop.permute.xlu0 %1281
    %s1284 = sor.u32 256, 32
    %1285 = vbcast.lane.b32.xlu0 %v1267, %s1284
    %v1286 = vpop.permute.xlu0 %1285
    %s1288 = sor.u32 256, 40
    %1289 = vbcast.lane.b32.xlu0 %v1267, %s1288
    %v1290 = vpop.permute.xlu0 %1289
    %s1292 = sor.u32 256, 48
    %1293 = vbcast.lane.b32.xlu0 %v1267, %s1292
    %v1294 = vpop.permute.xlu0 %1293
    %s1296 = sor.u32 256, 56
    %1297 = vbcast.lane.b32.xlu0 %v1267, %s1296
    %v1298 = vpop.permute.xlu0 %1297
    %s1300 = sor.u32 256, 64
    %1301 = vbcast.lane.b32.xlu0 %v1267, %s1300
    %v1302 = vpop.permute.xlu0 %1301
    %s1304 = sor.u32 256, 72
    %1305 = vbcast.lane.b32.xlu0 %v1267, %s1304
    %v1306 = vpop.permute.xlu0 %1305
    %s1308 = sor.u32 256, 80
    %1309 = vbcast.lane.b32.xlu0 %v1267, %s1308
    %v1310 = vpop.permute.xlu0 %1309
    %s1312 = sor.u32 256, 88
    %1313 = vbcast.lane.b32.xlu0 %v1267, %s1312
    %v1314 = vpop.permute.xlu0 %1313
    %s1316 = sor.u32 256, 96
    %1317 = vbcast.lane.b32.xlu0 %v1267, %s1316
    %v1318 = vpop.permute.xlu0 %1317
    %s1320 = sor.u32 256, 104
    %1321 = vbcast.lane.b32.xlu0 %v1267, %s1320
    %v1322 = vpop.permute.xlu0 %1321
    %s1324 = sor.u32 256, 112
    %1325 = vbcast.lane.b32.xlu0 %v1267, %s1324
    %v1326 = vpop.permute.xlu0 %1325
    %s1328 = sor.u32 256, 120
    %1329 = vbcast.lane.b32.xlu0 %v1267, %s1328
    %v1330 = vpop.permute.xlu0 %1329
    %v1331 = vlaneseq
    %v1332 = vshrl.u32 %v1331, 7
    %v1333 = vsub.s32 3, %v1332
    %v1334 = vrot.slane %v189, %v1333
    %1336 = vbcast.lane.b32.xlu0 %v1334, 256
    %v1337 = vpop.permute.xlu0 %1336
    %s1339 = sor.u32 256, 8
    %1340 = vbcast.lane.b32.xlu0 %v1334, %s1339
    %v1341 = vpop.permute.xlu0 %1340
    %s1343 = sor.u32 256, 16
    %1344 = vbcast.lane.b32.xlu0 %v1334, %s1343
    %v1345 = vpop.permute.xlu0 %1344
    %s1347 = sor.u32 256, 24
    %1348 = vbcast.lane.b32.xlu0 %v1334, %s1347
    %v1349 = vpop.permute.xlu0 %1348
    %s1351 = sor.u32 256, 32
    %1352 = vbcast.lane.b32.xlu0 %v1334, %s1351
    %v1353 = vpop.permute.xlu0 %1352
    %s1355 = sor.u32 256, 40
    %1356 = vbcast.lane.b32.xlu0 %v1334, %s1355
    %v1357 = vpop.permute.xlu0 %1356
    %s1359 = sor.u32 256, 48
    %1360 = vbcast.lane.b32.xlu0 %v1334, %s1359
    %v1361 = vpop.permute.xlu0 %1360
    %s1363 = sor.u32 256, 56
    %1364 = vbcast.lane.b32.xlu0 %v1334, %s1363
    %v1365 = vpop.permute.xlu0 %1364
    %s1367 = sor.u32 256, 64
    %1368 = vbcast.lane.b32.xlu0 %v1334, %s1367
    %v1369 = vpop.permute.xlu0 %1368
    %s1371 = sor.u32 256, 72
    %1372 = vbcast.lane.b32.xlu0 %v1334, %s1371
    %v1373 = vpop.permute.xlu0 %1372
    %s1375 = sor.u32 256, 80
    %1376 = vbcast.lane.b32.xlu0 %v1334, %s1375
    %v1377 = vpop.permute.xlu0 %1376
    %s1379 = sor.u32 256, 88
    %1380 = vbcast.lane.b32.xlu0 %v1334, %s1379
    %v1381 = vpop.permute.xlu0 %1380
    %s1383 = sor.u32 256, 96
    %1384 = vbcast.lane.b32.xlu0 %v1334, %s1383
    %v1385 = vpop.permute.xlu0 %1384
    %s1387 = sor.u32 256, 104
    %1388 = vbcast.lane.b32.xlu0 %v1334, %s1387
    %v1389 = vpop.permute.xlu0 %1388
    %s1391 = sor.u32 256, 112
    %1392 = vbcast.lane.b32.xlu0 %v1334, %s1391
    %v1393 = vpop.permute.xlu0 %1392
    %s1395 = sor.u32 256, 120
    %1396 = vbcast.lane.b32.xlu0 %v1334, %s1395
    %v1397 = vpop.permute.xlu0 %1396
    %v1398 = vlaneseq
    %v1399 = vshrl.u32 %v1398, 7
    %v1400 = vsub.s32 4, %v1399
    %v1401 = vrot.slane %v189, %v1400
    %1403 = vbcast.lane.b32.xlu0 %v1401, 256
    %v1404 = vpop.permute.xlu0 %1403
    %s1406 = sor.u32 256, 8
    %1407 = vbcast.lane.b32.xlu0 %v1401, %s1406
    %v1408 = vpop.permute.xlu0 %1407
    %s1410 = sor.u32 256, 16
    %1411 = vbcast.lane.b32.xlu0 %v1401, %s1410
    %v1412 = vpop.permute.xlu0 %1411
    %s1414 = sor.u32 256, 24
    %1415 = vbcast.lane.b32.xlu0 %v1401, %s1414
    %v1416 = vpop.permute.xlu0 %1415
    %s1418 = sor.u32 256, 32
    %1419 = vbcast.lane.b32.xlu0 %v1401, %s1418
    %v1420 = vpop.permute.xlu0 %1419
    %s1422 = sor.u32 256, 40
    %1423 = vbcast.lane.b32.xlu0 %v1401, %s1422
    %v1424 = vpop.permute.xlu0 %1423
    %s1426 = sor.u32 256, 48
    %1427 = vbcast.lane.b32.xlu0 %v1401, %s1426
    %v1428 = vpop.permute.xlu0 %1427
    %s1430 = sor.u32 256, 56
    %1431 = vbcast.lane.b32.xlu0 %v1401, %s1430
    %v1432 = vpop.permute.xlu0 %1431
    %s1434 = sor.u32 256, 64
    %1435 = vbcast.lane.b32.xlu0 %v1401, %s1434
    %v1436 = vpop.permute.xlu0 %1435
    %s1438 = sor.u32 256, 72
    %1439 = vbcast.lane.b32.xlu0 %v1401, %s1438
    %v1440 = vpop.permute.xlu0 %1439
    %s1442 = sor.u32 256, 80
    %1443 = vbcast.lane.b32.xlu0 %v1401, %s1442
    %v1444 = vpop.permute.xlu0 %1443
    %s1446 = sor.u32 256, 88
    %1447 = vbcast.lane.b32.xlu0 %v1401, %s1446
    %v1448 = vpop.permute.xlu0 %1447
    %s1450 = sor.u32 256, 96
    %1451 = vbcast.lane.b32.xlu0 %v1401, %s1450
    %v1452 = vpop.permute.xlu0 %1451
    %s1454 = sor.u32 256, 104
    %1455 = vbcast.lane.b32.xlu0 %v1401, %s1454
    %v1456 = vpop.permute.xlu0 %1455
    %s1458 = sor.u32 256, 112
    %1459 = vbcast.lane.b32.xlu0 %v1401, %s1458
    %v1460 = vpop.permute.xlu0 %1459
    %s1462 = sor.u32 256, 120
    %1463 = vbcast.lane.b32.xlu0 %v1401, %s1462
    %v1464 = vpop.permute.xlu0 %1463
    %v1465 = vlaneseq
    %v1466 = vshrl.u32 %v1465, 7
    %v1467 = vsub.s32 5, %v1466
    %v1468 = vrot.slane %v189, %v1467
    %1470 = vbcast.lane.b32.xlu0 %v1468, 256
    %v1471 = vpop.permute.xlu0 %1470
    %s1473 = sor.u32 256, 8
    %1474 = vbcast.lane.b32.xlu0 %v1468, %s1473
    %v1475 = vpop.permute.xlu0 %1474
    %s1477 = sor.u32 256, 16
    %1478 = vbcast.lane.b32.xlu0 %v1468, %s1477
    %v1479 = vpop.permute.xlu0 %1478
    %s1481 = sor.u32 256, 24
    %1482 = vbcast.lane.b32.xlu0 %v1468, %s1481
    %v1483 = vpop.permute.xlu0 %1482
    %s1485 = sor.u32 256, 32
    %1486 = vbcast.lane.b32.xlu0 %v1468, %s1485
    %v1487 = vpop.permute.xlu0 %1486
    %s1489 = sor.u32 256, 40
    %1490 = vbcast.lane.b32.xlu0 %v1468, %s1489
    %v1491 = vpop.permute.xlu0 %1490
    %s1493 = sor.u32 256, 48
    %1494 = vbcast.lane.b32.xlu0 %v1468, %s1493
    %v1495 = vpop.permute.xlu0 %1494
    %s1497 = sor.u32 256, 56
    %1498 = vbcast.lane.b32.xlu0 %v1468, %s1497
    %v1499 = vpop.permute.xlu0 %1498
    %s1501 = sor.u32 256, 64
    %1502 = vbcast.lane.b32.xlu0 %v1468, %s1501
    %v1503 = vpop.permute.xlu0 %1502
    %s1505 = sor.u32 256, 72
    %1506 = vbcast.lane.b32.xlu0 %v1468, %s1505
    %v1507 = vpop.permute.xlu0 %1506
    %s1509 = sor.u32 256, 80
    %1510 = vbcast.lane.b32.xlu0 %v1468, %s1509
    %v1511 = vpop.permute.xlu0 %1510
    %s1513 = sor.u32 256, 88
    %1514 = vbcast.lane.b32.xlu0 %v1468, %s1513
    %v1515 = vpop.permute.xlu0 %1514
    %s1517 = sor.u32 256, 96
    %1518 = vbcast.lane.b32.xlu0 %v1468, %s1517
    %v1519 = vpop.permute.xlu0 %1518
    %s1521 = sor.u32 256, 104
    %1522 = vbcast.lane.b32.xlu0 %v1468, %s1521
    %v1523 = vpop.permute.xlu0 %1522
    %s1525 = sor.u32 256, 112
    %1526 = vbcast.lane.b32.xlu0 %v1468, %s1525
    %v1527 = vpop.permute.xlu0 %1526
    %s1529 = sor.u32 256, 120
    %1530 = vbcast.lane.b32.xlu0 %v1468, %s1529
    %v1531 = vpop.permute.xlu0 %1530
    %v1532 = vlaneseq
    %v1533 = vshrl.u32 %v1532, 7
    %v1534 = vsub.s32 6, %v1533
    %v1535 = vrot.slane %v189, %v1534
    %1537 = vbcast.lane.b32.xlu0 %v1535, 256
    %v1538 = vpop.permute.xlu0 %1537
    %s1540 = sor.u32 256, 8
    %1541 = vbcast.lane.b32.xlu0 %v1535, %s1540
    %v1542 = vpop.permute.xlu0 %1541
    %s1544 = sor.u32 256, 16
    %1545 = vbcast.lane.b32.xlu0 %v1535, %s1544
    %v1546 = vpop.permute.xlu0 %1545
    %s1548 = sor.u32 256, 24
    %1549 = vbcast.lane.b32.xlu0 %v1535, %s1548
    %v1550 = vpop.permute.xlu0 %1549
    %s1552 = sor.u32 256, 32
    %1553 = vbcast.lane.b32.xlu0 %v1535, %s1552
    %v1554 = vpop.permute.xlu0 %1553
    %s1556 = sor.u32 256, 40
    %1557 = vbcast.lane.b32.xlu0 %v1535, %s1556
    %v1558 = vpop.permute.xlu0 %1557
    %s1560 = sor.u32 256, 48
    %1561 = vbcast.lane.b32.xlu0 %v1535, %s1560
    %v1562 = vpop.permute.xlu0 %1561
    %s1564 = sor.u32 256, 56
    %1565 = vbcast.lane.b32.xlu0 %v1535, %s1564
    %v1566 = vpop.permute.xlu0 %1565
    %s1568 = sor.u32 256, 64
    %1569 = vbcast.lane.b32.xlu0 %v1535, %s1568
    %v1570 = vpop.permute.xlu0 %1569
    %s1572 = sor.u32 256, 72
    %1573 = vbcast.lane.b32.xlu0 %v1535, %s1572
    %v1574 = vpop.permute.xlu0 %1573
    %s1576 = sor.u32 256, 80
    %1577 = vbcast.lane.b32.xlu0 %v1535, %s1576
    %v1578 = vpop.permute.xlu0 %1577
    %s1580 = sor.u32 256, 88
    %1581 = vbcast.lane.b32.xlu0 %v1535, %s1580
    %v1582 = vpop.permute.xlu0 %1581
    %s1584 = sor.u32 256, 96
    %1585 = vbcast.lane.b32.xlu0 %v1535, %s1584
    %v1586 = vpop.permute.xlu0 %1585
    %s1588 = sor.u32 256, 104
    %1589 = vbcast.lane.b32.xlu0 %v1535, %s1588
    %v1590 = vpop.permute.xlu0 %1589
    %s1592 = sor.u32 256, 112
    %1593 = vbcast.lane.b32.xlu0 %v1535, %s1592
    %v1594 = vpop.permute.xlu0 %1593
    %s1596 = sor.u32 256, 120
    %1597 = vbcast.lane.b32.xlu0 %v1535, %s1596
    %v1598 = vpop.permute.xlu0 %1597
    %v1599 = vlaneseq
    %v1600 = vshrl.u32 %v1599, 7
    %v1601 = vsub.s32 7, %v1600
    %v1602 = vrot.slane %v189, %v1601
    %1604 = vbcast.lane.b32.xlu0 %v1602, 256
    %v1605 = vpop.permute.xlu0 %1604
    %s1607 = sor.u32 256, 8
    %1608 = vbcast.lane.b32.xlu0 %v1602, %s1607
    %v1609 = vpop.permute.xlu0 %1608
    %s1611 = sor.u32 256, 16
    %1612 = vbcast.lane.b32.xlu0 %v1602, %s1611
    %v1613 = vpop.permute.xlu0 %1612
    %s1615 = sor.u32 256, 24
    %1616 = vbcast.lane.b32.xlu0 %v1602, %s1615
    %v1617 = vpop.permute.xlu0 %1616
    %s1619 = sor.u32 256, 32
    %1620 = vbcast.lane.b32.xlu0 %v1602, %s1619
    %v1621 = vpop.permute.xlu0 %1620
    %s1623 = sor.u32 256, 40
    %1624 = vbcast.lane.b32.xlu0 %v1602, %s1623
    %v1625 = vpop.permute.xlu0 %1624
    %s1627 = sor.u32 256, 48
    %1628 = vbcast.lane.b32.xlu0 %v1602, %s1627
    %v1629 = vpop.permute.xlu0 %1628
    %s1631 = sor.u32 256, 56
    %1632 = vbcast.lane.b32.xlu0 %v1602, %s1631
    %v1633 = vpop.permute.xlu0 %1632
    %s1635 = sor.u32 256, 64
    %1636 = vbcast.lane.b32.xlu0 %v1602, %s1635
    %v1637 = vpop.permute.xlu0 %1636
    %s1639 = sor.u32 256, 72
    %1640 = vbcast.lane.b32.xlu0 %v1602, %s1639
    %v1641 = vpop.permute.xlu0 %1640
    %s1643 = sor.u32 256, 80
    %1644 = vbcast.lane.b32.xlu0 %v1602, %s1643
    %v1645 = vpop.permute.xlu0 %1644
    %s1647 = sor.u32 256, 88
    %1648 = vbcast.lane.b32.xlu0 %v1602, %s1647
    %v1649 = vpop.permute.xlu0 %1648
    %s1651 = sor.u32 256, 96
    %1652 = vbcast.lane.b32.xlu0 %v1602, %s1651
    %v1653 = vpop.permute.xlu0 %1652
    %s1655 = sor.u32 256, 104
    %1656 = vbcast.lane.b32.xlu0 %v1602, %s1655
    %v1657 = vpop.permute.xlu0 %1656
    %s1659 = sor.u32 256, 112
    %1660 = vbcast.lane.b32.xlu0 %v1602, %s1659
    %v1661 = vpop.permute.xlu0 %1660
    %s1663 = sor.u32 256, 120
    %1664 = vbcast.lane.b32.xlu0 %v1602, %s1663
    %v1665 = vpop.permute.xlu0 %1664
    %v1667 = vcombine.high %v189, %v189
    %v1669 = vunpack.c.l.s4 1966171168
    %v1670 = vunpack.c.0.s8 %v1669
    %v1671 = vlaneseq
    %v1672 = vshrl.u32 %v1671, 7
    %v1673 = vsub.s32 %v1670, %v1672
    %v1674 = vrot.slane %v189, %v1673
    %v1676 = vunpack.c.l.s4 1966171168
    %v1677 = vunpack.c.0.s8 %v1676
    %v1678 = vlaneseq
    %v1679 = vshrl.u32 %v1678, 7
    %v1680 = vsub.s32 %v1677, %v1679
    %v1681 = vrot.slane %v1667, %v1680
    %v1682 = vcombine.high %v1674, %v1674
    %v1683 = vcombine.high %v1681, %v1681
    %v1685 = vunpack.c.l.s4 1966171168
    %v1686 = vunpack.c.0.s8 %v1685
    %v1687 = vlaneseq
    %v1688 = vshrl.u32 %v1687, 7
    %v1689 = vsub.s32 %v1686, %v1688
    %v1690 = vrot.slane %v1674, %v1689
    %v1692 = vunpack.c.l.s4 1966171168
    %v1693 = vunpack.c.0.s8 %v1692
    %v1694 = vlaneseq
    %v1695 = vshrl.u32 %v1694, 7
    %v1696 = vsub.s32 %v1693, %v1695
    %v1697 = vrot.slane %v1681, %v1696
    %v1699 = vunpack.c.l.s4 1966171168
    %v1700 = vunpack.c.0.s8 %v1699
    %v1701 = vlaneseq
    %v1702 = vshrl.u32 %v1701, 7
    %v1703 = vsub.s32 %v1700, %v1702
    %v1704 = vrot.slane %v1682, %v1703
    %v1706 = vunpack.c.l.s4 1966171168
    %v1707 = vunpack.c.0.s8 %v1706
    %v1708 = vlaneseq
    %v1709 = vshrl.u32 %v1708, 7
    %v1710 = vsub.s32 %v1707, %v1709
    %v1711 = vrot.slane %v1683, %v1710
    %v1712 = vcombine.high %v1690, %v1690
    %v1713 = vcombine.high %v1697, %v1697
    %v1714 = vcombine.high %v1704, %v1704
    %v1715 = vcombine.high %v1711, %v1711
    %v1716 = vlaneseq
    %v1717 = vshrl.u32 %v1716, 7
    %v1718 = vsub.s32 0, %v1717
    %v1719 = vrot.slane %v1690, %v1718
    %v1720 = vlaneseq
    %v1721 = vshrl.u32 %v1720, 7
    %v1722 = vsub.s32 0, %v1721
    %v1723 = vrot.slane %v1704, %v1722
    %v1724 = vlaneseq
    %v1725 = vshrl.u32 %v1724, 7
    %v1726 = vsub.s32 0, %v1725
    %v1727 = vrot.slane %v1712, %v1726
    %v1728 = vlaneseq
    %v1729 = vshrl.u32 %v1728, 7
    %v1730 = vsub.s32 0, %v1729
    %v1731 = vrot.slane %v1714, %v1730
    %v1732 = vlaneseq
    %v1733 = vshrl.u32 %v1732, 7
    %v1734 = vsub.s32 0, %v1733
    %v1735 = vrot.slane %v1697, %v1734
    %v1736 = vlaneseq
    %v1737 = vshrl.u32 %v1736, 7
    %v1738 = vsub.s32 0, %v1737
    %v1739 = vrot.slane %v1711, %v1738
    %v1740 = vlaneseq
    %v1741 = vshrl.u32 %v1740, 7
    %v1742 = vsub.s32 0, %v1741
    %v1743 = vrot.slane %v1713, %v1742
    %v1744 = vlaneseq
    %v1745 = vshrl.u32 %v1744, 7
    %v1746 = vsub.s32 0, %v1745
    %v1747 = vrot.slane %v1715, %v1746
    %v1756 = vsub.f32 %v1136, %v1719
    %v1757 = vsub.f32 %v1140, %v1719
    %v1758 = vsub.f32 %v1144, %v1719
    %v1759 = vsub.f32 %v1148, %v1719
    %v1760 = vsub.f32 %v1152, %v1719
    %v1761 = vsub.f32 %v1156, %v1719
    %v1762 = vsub.f32 %v1160, %v1719
    %v1763 = vsub.f32 %v1164, %v1719
    %v1764 = vsub.f32 %v1168, %v1719
    %v1765 = vsub.f32 %v1172, %v1719
    %v1766 = vsub.f32 %v1176, %v1719
    %v1767 = vsub.f32 %v1180, %v1719
    %v1768 = vsub.f32 %v1184, %v1719
    %v1769 = vsub.f32 %v1188, %v1719
    %v1770 = vsub.f32 %v1192, %v1719
    %v1771 = vsub.f32 %v1196, %v1719
    %v1772 = vsub.f32 %v1203, %v1723
    %v1773 = vsub.f32 %v1207, %v1723
    %v1774 = vsub.f32 %v1211, %v1723
    %v1775 = vsub.f32 %v1215, %v1723
    %v1776 = vsub.f32 %v1219, %v1723
    %v1777 = vsub.f32 %v1223, %v1723
    %v1778 = vsub.f32 %v1227, %v1723
    %v1779 = vsub.f32 %v1231, %v1723
    %v1780 = vsub.f32 %v1235, %v1723
    %v1781 = vsub.f32 %v1239, %v1723
    %v1782 = vsub.f32 %v1243, %v1723
    %v1783 = vsub.f32 %v1247, %v1723
    %v1784 = vsub.f32 %v1251, %v1723
    %v1785 = vsub.f32 %v1255, %v1723
    %v1786 = vsub.f32 %v1259, %v1723
    %v1787 = vsub.f32 %v1263, %v1723
    %v1788 = vsub.f32 %v1270, %v1727
    %v1789 = vsub.f32 %v1274, %v1727
    %v1790 = vsub.f32 %v1278, %v1727
    %v1791 = vsub.f32 %v1282, %v1727
    %v1792 = vsub.f32 %v1286, %v1727
    %v1793 = vsub.f32 %v1290, %v1727
    %v1794 = vsub.f32 %v1294, %v1727
    %v1795 = vsub.f32 %v1298, %v1727
    %v1796 = vsub.f32 %v1302, %v1727
    %v1797 = vsub.f32 %v1306, %v1727
    %v1798 = vsub.f32 %v1310, %v1727
    %v1799 = vsub.f32 %v1314, %v1727
    %v1800 = vsub.f32 %v1318, %v1727
    %v1801 = vsub.f32 %v1322, %v1727
    %v1802 = vsub.f32 %v1326, %v1727
    %v1803 = vsub.f32 %v1330, %v1727
    %v1804 = vsub.f32 %v1337, %v1731
    %v1805 = vsub.f32 %v1341, %v1731
    %v1806 = vsub.f32 %v1345, %v1731
    %v1807 = vsub.f32 %v1349, %v1731
    %v1808 = vsub.f32 %v1353, %v1731
    %v1809 = vsub.f32 %v1357, %v1731
    %v1810 = vsub.f32 %v1361, %v1731
    %v1811 = vsub.f32 %v1365, %v1731
    %v1812 = vsub.f32 %v1369, %v1731
    %v1813 = vsub.f32 %v1373, %v1731
    %v1814 = vsub.f32 %v1377, %v1731
    %v1815 = vsub.f32 %v1381, %v1731
    %v1816 = vsub.f32 %v1385, %v1731
    %v1817 = vsub.f32 %v1389, %v1731
    %v1818 = vsub.f32 %v1393, %v1731
    %v1819 = vsub.f32 %v1397, %v1731
    %v1820 = vsub.f32 %v1404, %v1735
    %v1821 = vsub.f32 %v1408, %v1735
    %v1822 = vsub.f32 %v1412, %v1735
    %v1823 = vsub.f32 %v1416, %v1735
    %v1824 = vsub.f32 %v1420, %v1735
    %v1825 = vsub.f32 %v1424, %v1735
    %v1826 = vsub.f32 %v1428, %v1735
    %v1827 = vsub.f32 %v1432, %v1735
    %v1828 = vsub.f32 %v1436, %v1735
    %v1829 = vsub.f32 %v1440, %v1735
    %v1830 = vsub.f32 %v1444, %v1735
    %v1831 = vsub.f32 %v1448, %v1735
    %v1832 = vsub.f32 %v1452, %v1735
    %v1833 = vsub.f32 %v1456, %v1735
    %v1834 = vsub.f32 %v1460, %v1735
    %v1835 = vsub.f32 %v1464, %v1735
    %v1836 = vsub.f32 %v1471, %v1739
    %v1837 = vsub.f32 %v1475, %v1739
    %v1838 = vsub.f32 %v1479, %v1739
    %v1839 = vsub.f32 %v1483, %v1739
    %v1840 = vsub.f32 %v1487, %v1739
    %v1841 = vsub.f32 %v1491, %v1739
    %v1842 = vsub.f32 %v1495, %v1739
    %v1843 = vsub.f32 %v1499, %v1739
    %v1844 = vsub.f32 %v1503, %v1739
    %v1845 = vsub.f32 %v1507, %v1739
    %v1846 = vsub.f32 %v1511, %v1739
    %v1847 = vsub.f32 %v1515, %v1739
    %v1848 = vsub.f32 %v1519, %v1739
    %v1849 = vsub.f32 %v1523, %v1739
    %v1850 = vsub.f32 %v1527, %v1739
    %v1851 = vsub.f32 %v1531, %v1739
    %v1852 = vsub.f32 %v1538, %v1743
    %v1853 = vsub.f32 %v1542, %v1743
    %v1854 = vsub.f32 %v1546, %v1743
    %v1855 = vsub.f32 %v1550, %v1743
    %v1856 = vsub.f32 %v1554, %v1743
    %v1857 = vsub.f32 %v1558, %v1743
    %v1858 = vsub.f32 %v1562, %v1743
    %v1859 = vsub.f32 %v1566, %v1743
    %v1860 = vsub.f32 %v1570, %v1743
    %v1861 = vsub.f32 %v1574, %v1743
    %v1862 = vsub.f32 %v1578, %v1743
    %v1863 = vsub.f32 %v1582, %v1743
    %v1864 = vsub.f32 %v1586, %v1743
    %v1865 = vsub.f32 %v1590, %v1743
    %v1866 = vsub.f32 %v1594, %v1743
    %v1867 = vsub.f32 %v1598, %v1743
    %v1868 = vsub.f32 %v1605, %v1747
    %v1869 = vsub.f32 %v1609, %v1747
    %v1870 = vsub.f32 %v1613, %v1747
    %v1871 = vsub.f32 %v1617, %v1747
    %v1872 = vsub.f32 %v1621, %v1747
    %v1873 = vsub.f32 %v1625, %v1747
    %v1874 = vsub.f32 %v1629, %v1747
    %v1875 = vsub.f32 %v1633, %v1747
    %v1876 = vsub.f32 %v1637, %v1747
    %v1877 = vsub.f32 %v1641, %v1747
    %v1878 = vsub.f32 %v1645, %v1747
    %v1879 = vsub.f32 %v1649, %v1747
    %v1880 = vsub.f32 %v1653, %v1747
    %v1881 = vsub.f32 %v1657, %v1747
    %v1882 = vsub.f32 %v1661, %v1747
    %v1883 = vsub.f32 %v1665, %v1747
    %v1884 = vadd.f32 %v1756, 1.0
    %v1885 = vadd.f32 %v1757, 1.0
    %v1886 = vadd.f32 %v1758, 1.0
    %v1887 = vadd.f32 %v1759, 1.0
    %v1888 = vadd.f32 %v1760, 1.0
    %v1889 = vadd.f32 %v1761, 1.0
    %v1890 = vadd.f32 %v1762, 1.0
    %v1891 = vadd.f32 %v1763, 1.0
    %v1892 = vadd.f32 %v1764, 1.0
    %v1893 = vadd.f32 %v1765, 1.0
    %v1894 = vadd.f32 %v1766, 1.0
    %v1895 = vadd.f32 %v1767, 1.0
    %v1896 = vadd.f32 %v1768, 1.0
    %v1897 = vadd.f32 %v1769, 1.0
    %v1898 = vadd.f32 %v1770, 1.0
    %v1899 = vadd.f32 %v1771, 1.0
    %v1900 = vadd.f32 %v1772, 1.0
    %v1901 = vadd.f32 %v1773, 1.0
    %v1902 = vadd.f32 %v1774, 1.0
    %v1903 = vadd.f32 %v1775, 1.0
    %v1904 = vadd.f32 %v1776, 1.0
    %v1905 = vadd.f32 %v1777, 1.0
    %v1906 = vadd.f32 %v1778, 1.0
    %v1907 = vadd.f32 %v1779, 1.0
    %v1908 = vadd.f32 %v1780, 1.0
    %v1909 = vadd.f32 %v1781, 1.0
    %v1910 = vadd.f32 %v1782, 1.0
    %v1911 = vadd.f32 %v1783, 1.0
    %v1912 = vadd.f32 %v1784, 1.0
    %v1913 = vadd.f32 %v1785, 1.0
    %v1914 = vadd.f32 %v1786, 1.0
    %v1915 = vadd.f32 %v1787, 1.0
    %v1916 = vadd.f32 %v1788, 1.0
    %v1917 = vadd.f32 %v1789, 1.0
    %v1918 = vadd.f32 %v1790, 1.0
    %v1919 = vadd.f32 %v1791, 1.0
    %v1920 = vadd.f32 %v1792, 1.0
    %v1921 = vadd.f32 %v1793, 1.0
    %v1922 = vadd.f32 %v1794, 1.0
    %v1923 = vadd.f32 %v1795, 1.0
    %v1924 = vadd.f32 %v1796, 1.0
    %v1925 = vadd.f32 %v1797, 1.0
    %v1926 = vadd.f32 %v1798, 1.0
    %v1927 = vadd.f32 %v1799, 1.0
    %v1928 = vadd.f32 %v1800, 1.0
    %v1929 = vadd.f32 %v1801, 1.0
    %v1930 = vadd.f32 %v1802, 1.0
    %v1931 = vadd.f32 %v1803, 1.0
    %v1932 = vadd.f32 %v1804, 1.0
    %v1933 = vadd.f32 %v1805, 1.0
    %v1934 = vadd.f32 %v1806, 1.0
    %v1935 = vadd.f32 %v1807, 1.0
    %v1936 = vadd.f32 %v1808, 1.0
    %v1937 = vadd.f32 %v1809, 1.0
    %v1938 = vadd.f32 %v1810, 1.0
    %v1939 = vadd.f32 %v1811, 1.0
    %v1940 = vadd.f32 %v1812, 1.0
    %v1941 = vadd.f32 %v1813, 1.0
    %v1942 = vadd.f32 %v1814, 1.0
    %v1943 = vadd.f32 %v1815, 1.0
    %v1944 = vadd.f32 %v1816, 1.0
    %v1945 = vadd.f32 %v1817, 1.0
    %v1946 = vadd.f32 %v1818, 1.0
    %v1947 = vadd.f32 %v1819, 1.0
    %v1948 = vadd.f32 %v1820, 1.0
    %v1949 = vadd.f32 %v1821, 1.0
    %v1950 = vadd.f32 %v1822, 1.0
    %v1951 = vadd.f32 %v1823, 1.0
    %v1952 = vadd.f32 %v1824, 1.0
    %v1953 = vadd.f32 %v1825, 1.0
    %v1954 = vadd.f32 %v1826, 1.0
    %v1955 = vadd.f32 %v1827, 1.0
    %v1956 = vadd.f32 %v1828, 1.0
    %v1957 = vadd.f32 %v1829, 1.0
    %v1958 = vadd.f32 %v1830, 1.0
    %v1959 = vadd.f32 %v1831, 1.0
    %v1960 = vadd.f32 %v1832, 1.0
    %v1961 = vadd.f32 %v1833, 1.0
    %v1962 = vadd.f32 %v1834, 1.0
    %v1963 = vadd.f32 %v1835, 1.0
    %v1964 = vadd.f32 %v1836, 1.0
    %v1965 = vadd.f32 %v1837, 1.0
    %v1966 = vadd.f32 %v1838, 1.0
    %v1967 = vadd.f32 %v1839, 1.0
    %v1968 = vadd.f32 %v1840, 1.0
    %v1969 = vadd.f32 %v1841, 1.0
    %v1970 = vadd.f32 %v1842, 1.0
    %v1971 = vadd.f32 %v1843, 1.0
    %v1972 = vadd.f32 %v1844, 1.0
    %v1973 = vadd.f32 %v1845, 1.0
    %v1974 = vadd.f32 %v1846, 1.0
    %v1975 = vadd.f32 %v1847, 1.0
    %v1976 = vadd.f32 %v1848, 1.0
    %v1977 = vadd.f32 %v1849, 1.0
    %v1978 = vadd.f32 %v1850, 1.0
    %v1979 = vadd.f32 %v1851, 1.0
    %v1980 = vadd.f32 %v1852, 1.0
    %v1981 = vadd.f32 %v1853, 1.0
    %v1982 = vadd.f32 %v1854, 1.0
    %v1983 = vadd.f32 %v1855, 1.0
    %v1984 = vadd.f32 %v1856, 1.0
    %v1985 = vadd.f32 %v1857, 1.0
    %v1986 = vadd.f32 %v1858, 1.0
    %v1987 = vadd.f32 %v1859, 1.0
    %v1988 = vadd.f32 %v1860, 1.0
    %v1989 = vadd.f32 %v1861, 1.0
    %v1990 = vadd.f32 %v1862, 1.0
    %v1991 = vadd.f32 %v1863, 1.0
    %v1992 = vadd.f32 %v1864, 1.0
    %v1993 = vadd.f32 %v1865, 1.0
    %v1994 = vadd.f32 %v1866, 1.0
    %v1995 = vadd.f32 %v1867, 1.0
    %v1996 = vadd.f32 %v1868, 1.0
    %v1997 = vadd.f32 %v1869, 1.0
    %v1998 = vadd.f32 %v1870, 1.0
    %v1999 = vadd.f32 %v1871, 1.0
    %v2000 = vadd.f32 %v1872, 1.0
    %v2001 = vadd.f32 %v1873, 1.0
    %v2002 = vadd.f32 %v1874, 1.0
    %v2003 = vadd.f32 %v1875, 1.0
    %v2004 = vadd.f32 %v1876, 1.0
    %v2005 = vadd.f32 %v1877, 1.0
    %v2006 = vadd.f32 %v1878, 1.0
    %v2007 = vadd.f32 %v1879, 1.0
    %v2008 = vadd.f32 %v1880, 1.0
    %v2009 = vadd.f32 %v1881, 1.0
    %v2010 = vadd.f32 %v1882, 1.0
    %v2011 = vadd.f32 %v1883, 1.0
    %v2012 = vsel %vm926, 1, 0
    %v2013 = vsel %vm927, 1, 0
    %v2014 = vsel %vm928, 1, 0
    %v2015 = vsel %vm929, 1, 0
    %v2016 = vsel %vm930, 1, 0
    %v2017 = vsel %vm931, 1, 0
    %v2018 = vsel %vm932, 1, 0
    %v2019 = vsel %vm933, 1, 0
    %v2020 = vsel %vm934, 1, 0
    %v2021 = vsel %vm935, 1, 0
    %v2022 = vsel %vm936, 1, 0
    %v2023 = vsel %vm937, 1, 0
    %v2024 = vsel %vm938, 1, 0
    %v2025 = vsel %vm939, 1, 0
    %v2026 = vsel %vm940, 1, 0
    %v2027 = vsel %vm941, 1, 0
    %v2028 = vsel %vm942, 1, 0
    %v2029 = vsel %vm943, 1, 0
    %v2030 = vsel %vm944, 1, 0
    %v2031 = vsel %vm945, 1, 0
    %v2032 = vsel %vm946, 1, 0
    %v2033 = vsel %vm947, 1, 0
    %v2034 = vsel %vm948, 1, 0
    %v2035 = vsel %vm949, 1, 0
    %v2036 = vsel %vm950, 1, 0
    %v2037 = vsel %vm951, 1, 0
    %v2038 = vsel %vm952, 1, 0
    %v2039 = vsel %vm953, 1, 0
    %v2040 = vsel %vm954, 1, 0
    %v2041 = vsel %vm955, 1, 0
    %v2042 = vsel %vm956, 1, 0
    %v2043 = vsel %vm957, 1, 0
    %v2044 = vsel %vm958, 1, 0
    %v2045 = vsel %vm959, 1, 0
    %v2046 = vsel %vm960, 1, 0
    %v2047 = vsel %vm961, 1, 0
    %v2048 = vsel %vm962, 1, 0
    %v2049 = vsel %vm963, 1, 0
    %v2050 = vsel %vm964, 1, 0
    %v2051 = vsel %vm965, 1, 0
    %v2052 = vsel %vm966, 1, 0
    %v2053 = vsel %vm967, 1, 0
    %v2054 = vsel %vm968, 1, 0
    %v2055 = vsel %vm969, 1, 0
    %v2056 = vsel %vm970, 1, 0
    %v2057 = vsel %vm971, 1, 0
    %v2058 = vsel %vm972, 1, 0
    %v2059 = vsel %vm973, 1, 0
    %v2060 = vsel %vm974, 1, 0
    %v2061 = vsel %vm975, 1, 0
    %v2062 = vsel %vm976, 1, 0
    %v2063 = vsel %vm977, 1, 0
    %v2064 = vsel %vm978, 1, 0
    %v2065 = vsel %vm979, 1, 0
    %v2066 = vsel %vm980, 1, 0
    %v2067 = vsel %vm981, 1, 0
    %v2068 = vsel %vm982, 1, 0
    %v2069 = vsel %vm983, 1, 0
    %v2070 = vsel %vm984, 1, 0
    %v2071 = vsel %vm985, 1, 0
    %v2072 = vsel %vm986, 1, 0
    %v2073 = vsel %vm987, 1, 0
    %v2074 = vsel %vm988, 1, 0
    %v2075 = vsel %vm989, 1, 0
    %v2076 = vsel %vm990, 1, 0
    %v2077 = vsel %vm991, 1, 0
    %v2078 = vsel %vm992, 1, 0
    %v2079 = vsel %vm993, 1, 0
    %v2080 = vsel %vm994, 1, 0
    %v2081 = vsel %vm995, 1, 0
    %v2082 = vsel %vm996, 1, 0
    %v2083 = vsel %vm997, 1, 0
    %v2084 = vsel %vm998, 1, 0
    %v2085 = vsel %vm999, 1, 0
    %v2086 = vsel %vm1000, 1, 0
    %v2087 = vsel %vm1001, 1, 0
    %v2088 = vsel %vm1002, 1, 0
    %v2089 = vsel %vm1003, 1, 0
    %v2090 = vsel %vm1004, 1, 0
    %v2091 = vsel %vm1005, 1, 0
    %v2092 = vsel %vm1006, 1, 0
    %v2093 = vsel %vm1007, 1, 0
    %v2094 = vsel %vm1008, 1, 0
    %v2095 = vsel %vm1009, 1, 0
    %v2096 = vsel %vm1010, 1, 0
    %v2097 = vsel %vm1011, 1, 0
    %v2098 = vsel %vm1012, 1, 0
    %v2099 = vsel %vm1013, 1, 0
    %v2100 = vsel %vm1014, 1, 0
    %v2101 = vsel %vm1015, 1, 0
    %v2102 = vsel %vm1016, 1, 0
    %v2103 = vsel %vm1017, 1, 0
    %v2104 = vsel %vm1018, 1, 0
    %v2105 = vsel %vm1019, 1, 0
    %v2106 = vsel %vm1020, 1, 0
    %v2107 = vsel %vm1021, 1, 0
    %v2108 = vsel %vm1022, 1, 0
    %v2109 = vsel %vm1023, 1, 0
    %v2110 = vsel %vm1024, 1, 0
    %v2111 = vsel %vm1025, 1, 0
    %v2112 = vsel %vm1026, 1, 0
    %v2113 = vsel %vm1027, 1, 0
    %v2114 = vsel %vm1028, 1, 0
    %v2115 = vsel %vm1029, 1, 0
    %v2116 = vsel %vm1030, 1, 0
    %v2117 = vsel %vm1031, 1, 0
    %v2118 = vsel %vm1032, 1, 0
    %v2119 = vsel %vm1033, 1, 0
    %v2120 = vsel %vm1034, 1, 0
    %v2121 = vsel %vm1035, 1, 0
    %v2122 = vsel %vm1036, 1, 0
    %v2123 = vsel %vm1037, 1, 0
    %v2124 = vsel %vm1038, 1, 0
    %v2125 = vsel %vm1039, 1, 0
    %v2126 = vsel %vm1040, 1, 0
    %v2127 = vsel %vm1041, 1, 0
    %v2128 = vsel %vm1042, 1, 0
    %v2129 = vsel %vm1043, 1, 0
    %v2130 = vsel %vm1044, 1, 0
    %v2131 = vsel %vm1045, 1, 0
    %v2132 = vsel %vm1046, 1, 0
    %v2133 = vsel %vm1047, 1, 0
    %v2134 = vsel %vm1048, 1, 0
    %v2135 = vsel %vm1049, 1, 0
    %v2136 = vsel %vm1050, 1, 0
    %v2137 = vsel %vm1051, 1, 0
    %v2138 = vsel %vm1052, 1, 0
    %v2139 = vsel %vm1053, 1, 0
    %2140 = vset.pattern.permute.xlu0 0
    %2141 = vperm.xlu0 %2140, %v2012
    %v2142 = vpop.permute.xlu0 %2141
    %2143 = vset.pattern.permute.xlu0 0
    %2144 = vperm.xlu0 %2143, %v2013
    %v2145 = vpop.permute.xlu0 %2144
    %2146 = vset.pattern.permute.xlu0 0
    %2147 = vperm.xlu0 %2146, %v2014
    %v2148 = vpop.permute.xlu0 %2147
    %2149 = vset.pattern.permute.xlu0 0
    %2150 = vperm.xlu0 %2149, %v2015
    %v2151 = vpop.permute.xlu0 %2150
    %2152 = vset.pattern.permute.xlu0 0
    %2153 = vperm.xlu0 %2152, %v2016
    %v2154 = vpop.permute.xlu0 %2153
    %2155 = vset.pattern.permute.xlu0 0
    %2156 = vperm.xlu0 %2155, %v2017
    %v2157 = vpop.permute.xlu0 %2156
    %2158 = vset.pattern.permute.xlu0 0
    %2159 = vperm.xlu0 %2158, %v2018
    %v2160 = vpop.permute.xlu0 %2159
    %2161 = vset.pattern.permute.xlu0 0
    %2162 = vperm.xlu0 %2161, %v2019
    %v2163 = vpop.permute.xlu0 %2162
    %2164 = vset.pattern.permute.xlu0 0
    %2165 = vperm.xlu0 %2164, %v2020
    %v2166 = vpop.permute.xlu0 %2165
    %2167 = vset.pattern.permute.xlu0 0
    %2168 = vperm.xlu0 %2167, %v2021
    %v2169 = vpop.permute.xlu0 %2168
    %2170 = vset.pattern.permute.xlu0 0
    %2171 = vperm.xlu0 %2170, %v2022
    %v2172 = vpop.permute.xlu0 %2171
    %2173 = vset.pattern.permute.xlu0 0
    %2174 = vperm.xlu0 %2173, %v2023
    %v2175 = vpop.permute.xlu0 %2174
    %2176 = vset.pattern.permute.xlu0 0
    %2177 = vperm.xlu0 %2176, %v2024
    %v2178 = vpop.permute.xlu0 %2177
    %2179 = vset.pattern.permute.xlu0 0
    %2180 = vperm.xlu0 %2179, %v2025
    %v2181 = vpop.permute.xlu0 %2180
    %2182 = vset.pattern.permute.xlu0 0
    %2183 = vperm.xlu0 %2182, %v2026
    %v2184 = vpop.permute.xlu0 %2183
    %2185 = vset.pattern.permute.xlu0 0
    %2186 = vperm.xlu0 %2185, %v2027
    %v2187 = vpop.permute.xlu0 %2186
    %2188 = vset.pattern.permute.xlu0 0
    %2189 = vperm.xlu0 %2188, %v2028
    %v2190 = vpop.permute.xlu0 %2189
    %2191 = vset.pattern.permute.xlu0 0
    %2192 = vperm.xlu0 %2191, %v2029
    %v2193 = vpop.permute.xlu0 %2192
    %2194 = vset.pattern.permute.xlu0 0
    %2195 = vperm.xlu0 %2194, %v2030
    %v2196 = vpop.permute.xlu0 %2195
    %2197 = vset.pattern.permute.xlu0 0
    %2198 = vperm.xlu0 %2197, %v2031
    %v2199 = vpop.permute.xlu0 %2198
    %2200 = vset.pattern.permute.xlu0 0
    %2201 = vperm.xlu0 %2200, %v2032
    %v2202 = vpop.permute.xlu0 %2201
    %2203 = vset.pattern.permute.xlu0 0
    %2204 = vperm.xlu0 %2203, %v2033
    %v2205 = vpop.permute.xlu0 %2204
    %2206 = vset.pattern.permute.xlu0 0
    %2207 = vperm.xlu0 %2206, %v2034
    %v2208 = vpop.permute.xlu0 %2207
    %2209 = vset.pattern.permute.xlu0 0
    %2210 = vperm.xlu0 %2209, %v2035
    %v2211 = vpop.permute.xlu0 %2210
    %2212 = vset.pattern.permute.xlu0 0
    %2213 = vperm.xlu0 %2212, %v2036
    %v2214 = vpop.permute.xlu0 %2213
    %2215 = vset.pattern.permute.xlu0 0
    %2216 = vperm.xlu0 %2215, %v2037
    %v2217 = vpop.permute.xlu0 %2216
    %2218 = vset.pattern.permute.xlu0 0
    %2219 = vperm.xlu0 %2218, %v2038
    %v2220 = vpop.permute.xlu0 %2219
    %2221 = vset.pattern.permute.xlu0 0
    %2222 = vperm.xlu0 %2221, %v2039
    %v2223 = vpop.permute.xlu0 %2222
    %2224 = vset.pattern.permute.xlu0 0
    %2225 = vperm.xlu0 %2224, %v2040
    %v2226 = vpop.permute.xlu0 %2225
    %2227 = vset.pattern.permute.xlu0 0
    %2228 = vperm.xlu0 %2227, %v2041
    %v2229 = vpop.permute.xlu0 %2228
    %2230 = vset.pattern.permute.xlu0 0
    %2231 = vperm.xlu0 %2230, %v2042
    %v2232 = vpop.permute.xlu0 %2231
    %2233 = vset.pattern.permute.xlu0 0
    %2234 = vperm.xlu0 %2233, %v2043
    %v2235 = vpop.permute.xlu0 %2234
    %2236 = vset.pattern.permute.xlu0 0
    %2237 = vperm.xlu0 %2236, %v2044
    %v2238 = vpop.permute.xlu0 %2237
    %2239 = vset.pattern.permute.xlu0 0
    %2240 = vperm.xlu0 %2239, %v2045
    %v2241 = vpop.permute.xlu0 %2240
    %2242 = vset.pattern.permute.xlu0 0
    %2243 = vperm.xlu0 %2242, %v2046
    %v2244 = vpop.permute.xlu0 %2243
    %2245 = vset.pattern.permute.xlu0 0
    %2246 = vperm.xlu0 %2245, %v2047
    %v2247 = vpop.permute.xlu0 %2246
    %2248 = vset.pattern.permute.xlu0 0
    %2249 = vperm.xlu0 %2248, %v2048
    %v2250 = vpop.permute.xlu0 %2249
    %2251 = vset.pattern.permute.xlu0 0
    %2252 = vperm.xlu0 %2251, %v2049
    %v2253 = vpop.permute.xlu0 %2252
    %2254 = vset.pattern.permute.xlu0 0
    %2255 = vperm.xlu0 %2254, %v2050
    %v2256 = vpop.permute.xlu0 %2255
    %2257 = vset.pattern.permute.xlu0 0
    %2258 = vperm.xlu0 %2257, %v2051
    %v2259 = vpop.permute.xlu0 %2258
    %2260 = vset.pattern.permute.xlu0 0
    %2261 = vperm.xlu0 %2260, %v2052
    %v2262 = vpop.permute.xlu0 %2261
    %2263 = vset.pattern.permute.xlu0 0
    %2264 = vperm.xlu0 %2263, %v2053
    %v2265 = vpop.permute.xlu0 %2264
    %2266 = vset.pattern.permute.xlu0 0
    %2267 = vperm.xlu0 %2266, %v2054
    %v2268 = vpop.permute.xlu0 %2267
    %2269 = vset.pattern.permute.xlu0 0
    %2270 = vperm.xlu0 %2269, %v2055
    %v2271 = vpop.permute.xlu0 %2270
    %2272 = vset.pattern.permute.xlu0 0
    %2273 = vperm.xlu0 %2272, %v2056
    %v2274 = vpop.permute.xlu0 %2273
    %2275 = vset.pattern.permute.xlu0 0
    %2276 = vperm.xlu0 %2275, %v2057
    %v2277 = vpop.permute.xlu0 %2276
    %2278 = vset.pattern.permute.xlu0 0
    %2279 = vperm.xlu0 %2278, %v2058
    %v2280 = vpop.permute.xlu0 %2279
    %2281 = vset.pattern.permute.xlu0 0
    %2282 = vperm.xlu0 %2281, %v2059
    %v2283 = vpop.permute.xlu0 %2282
    %2284 = vset.pattern.permute.xlu0 0
    %2285 = vperm.xlu0 %2284, %v2060
    %v2286 = vpop.permute.xlu0 %2285
    %2287 = vset.pattern.permute.xlu0 0
    %2288 = vperm.xlu0 %2287, %v2061
    %v2289 = vpop.permute.xlu0 %2288
    %2290 = vset.pattern.permute.xlu0 0
    %2291 = vperm.xlu0 %2290, %v2062
    %v2292 = vpop.permute.xlu0 %2291
    %2293 = vset.pattern.permute.xlu0 0
    %2294 = vperm.xlu0 %2293, %v2063
    %v2295 = vpop.permute.xlu0 %2294
    %2296 = vset.pattern.permute.xlu0 0
    %2297 = vperm.xlu0 %2296, %v2064
    %v2298 = vpop.permute.xlu0 %2297
    %2299 = vset.pattern.permute.xlu0 0
    %2300 = vperm.xlu0 %2299, %v2065
    %v2301 = vpop.permute.xlu0 %2300
    %2302 = vset.pattern.permute.xlu0 0
    %2303 = vperm.xlu0 %2302, %v2066
    %v2304 = vpop.permute.xlu0 %2303
    %2305 = vset.pattern.permute.xlu0 0
    %2306 = vperm.xlu0 %2305, %v2067
    %v2307 = vpop.permute.xlu0 %2306
    %2308 = vset.pattern.permute.xlu0 0
    %2309 = vperm.xlu0 %2308, %v2068
    %v2310 = vpop.permute.xlu0 %2309
    %2311 = vset.pattern.permute.xlu0 0
    %2312 = vperm.xlu0 %2311, %v2069
    %v2313 = vpop.permute.xlu0 %2312
    %2314 = vset.pattern.permute.xlu0 0
    %2315 = vperm.xlu0 %2314, %v2070
    %v2316 = vpop.permute.xlu0 %2315
    %2317 = vset.pattern.permute.xlu0 0
    %2318 = vperm.xlu0 %2317, %v2071
    %v2319 = vpop.permute.xlu0 %2318
    %2320 = vset.pattern.permute.xlu0 0
    %2321 = vperm.xlu0 %2320, %v2072
    %v2322 = vpop.permute.xlu0 %2321
    %2323 = vset.pattern.permute.xlu0 0
    %2324 = vperm.xlu0 %2323, %v2073
    %v2325 = vpop.permute.xlu0 %2324
    %2326 = vset.pattern.permute.xlu0 0
    %2327 = vperm.xlu0 %2326, %v2074
    %v2328 = vpop.permute.xlu0 %2327
    %2329 = vset.pattern.permute.xlu0 0
    %2330 = vperm.xlu0 %2329, %v2075
    %v2331 = vpop.permute.xlu0 %2330
    %2332 = vset.pattern.permute.xlu0 0
    %2333 = vperm.xlu0 %2332, %v2076
    %v2334 = vpop.permute.xlu0 %2333
    %2335 = vset.pattern.permute.xlu0 0
    %2336 = vperm.xlu0 %2335, %v2077
    %v2337 = vpop.permute.xlu0 %2336
    %2338 = vset.pattern.permute.xlu0 0
    %2339 = vperm.xlu0 %2338, %v2078
    %v2340 = vpop.permute.xlu0 %2339
    %2341 = vset.pattern.permute.xlu0 0
    %2342 = vperm.xlu0 %2341, %v2079
    %v2343 = vpop.permute.xlu0 %2342
    %2344 = vset.pattern.permute.xlu0 0
    %2345 = vperm.xlu0 %2344, %v2080
    %v2346 = vpop.permute.xlu0 %2345
    %2347 = vset.pattern.permute.xlu0 0
    %2348 = vperm.xlu0 %2347, %v2081
    %v2349 = vpop.permute.xlu0 %2348
    %2350 = vset.pattern.permute.xlu0 0
    %2351 = vperm.xlu0 %2350, %v2082
    %v2352 = vpop.permute.xlu0 %2351
    %2353 = vset.pattern.permute.xlu0 0
    %2354 = vperm.xlu0 %2353, %v2083
    %v2355 = vpop.permute.xlu0 %2354
    %2356 = vset.pattern.permute.xlu0 0
    %2357 = vperm.xlu0 %2356, %v2084
    %v2358 = vpop.permute.xlu0 %2357
    %2359 = vset.pattern.permute.xlu0 0
    %2360 = vperm.xlu0 %2359, %v2085
    %v2361 = vpop.permute.xlu0 %2360
    %2362 = vset.pattern.permute.xlu0 0
    %2363 = vperm.xlu0 %2362, %v2086
    %v2364 = vpop.permute.xlu0 %2363
    %2365 = vset.pattern.permute.xlu0 0
    %2366 = vperm.xlu0 %2365, %v2087
    %v2367 = vpop.permute.xlu0 %2366
    %2368 = vset.pattern.permute.xlu0 0
    %2369 = vperm.xlu0 %2368, %v2088
    %v2370 = vpop.permute.xlu0 %2369
    %2371 = vset.pattern.permute.xlu0 0
    %2372 = vperm.xlu0 %2371, %v2089
    %v2373 = vpop.permute.xlu0 %2372
    %2374 = vset.pattern.permute.xlu0 0
    %2375 = vperm.xlu0 %2374, %v2090
    %v2376 = vpop.permute.xlu0 %2375
    %2377 = vset.pattern.permute.xlu0 0
    %2378 = vperm.xlu0 %2377, %v2091
    %v2379 = vpop.permute.xlu0 %2378
    %2380 = vset.pattern.permute.xlu0 0
    %2381 = vperm.xlu0 %2380, %v2092
    %v2382 = vpop.permute.xlu0 %2381
    %2383 = vset.pattern.permute.xlu0 0
    %2384 = vperm.xlu0 %2383, %v2093
    %v2385 = vpop.permute.xlu0 %2384
    %2386 = vset.pattern.permute.xlu0 0
    %2387 = vperm.xlu0 %2386, %v2094
    %v2388 = vpop.permute.xlu0 %2387
    %2389 = vset.pattern.permute.xlu0 0
    %2390 = vperm.xlu0 %2389, %v2095
    %v2391 = vpop.permute.xlu0 %2390
    %2392 = vset.pattern.permute.xlu0 0
    %2393 = vperm.xlu0 %2392, %v2096
    %v2394 = vpop.permute.xlu0 %2393
    %2395 = vset.pattern.permute.xlu0 0
    %2396 = vperm.xlu0 %2395, %v2097
    %v2397 = vpop.permute.xlu0 %2396
    %2398 = vset.pattern.permute.xlu0 0
    %2399 = vperm.xlu0 %2398, %v2098
    %v2400 = vpop.permute.xlu0 %2399
    %2401 = vset.pattern.permute.xlu0 0
    %2402 = vperm.xlu0 %2401, %v2099
    %v2403 = vpop.permute.xlu0 %2402
    %2404 = vset.pattern.permute.xlu0 0
    %2405 = vperm.xlu0 %2404, %v2100
    %v2406 = vpop.permute.xlu0 %2405
    %2407 = vset.pattern.permute.xlu0 0
    %2408 = vperm.xlu0 %2407, %v2101
    %v2409 = vpop.permute.xlu0 %2408
    %2410 = vset.pattern.permute.xlu0 0
    %2411 = vperm.xlu0 %2410, %v2102
    %v2412 = vpop.permute.xlu0 %2411
    %2413 = vset.pattern.permute.xlu0 0
    %2414 = vperm.xlu0 %2413, %v2103
    %v2415 = vpop.permute.xlu0 %2414
    %2416 = vset.pattern.permute.xlu0 0
    %2417 = vperm.xlu0 %2416, %v2104
    %v2418 = vpop.permute.xlu0 %2417
    %2419 = vset.pattern.permute.xlu0 0
    %2420 = vperm.xlu0 %2419, %v2105
    %v2421 = vpop.permute.xlu0 %2420
    %2422 = vset.pattern.permute.xlu0 0
    %2423 = vperm.xlu0 %2422, %v2106
    %v2424 = vpop.permute.xlu0 %2423
    %2425 = vset.pattern.permute.xlu0 0
    %2426 = vperm.xlu0 %2425, %v2107
    %v2427 = vpop.permute.xlu0 %2426
    %2428 = vset.pattern.permute.xlu0 0
    %2429 = vperm.xlu0 %2428, %v2108
    %v2430 = vpop.permute.xlu0 %2429
    %2431 = vset.pattern.permute.xlu0 0
    %2432 = vperm.xlu0 %2431, %v2109
    %v2433 = vpop.permute.xlu0 %2432
    %2434 = vset.pattern.permute.xlu0 0
    %2435 = vperm.xlu0 %2434, %v2110
    %v2436 = vpop.permute.xlu0 %2435
    %2437 = vset.pattern.permute.xlu0 0
    %2438 = vperm.xlu0 %2437, %v2111
    %v2439 = vpop.permute.xlu0 %2438
    %2440 = vset.pattern.permute.xlu0 0
    %2441 = vperm.xlu0 %2440, %v2112
    %v2442 = vpop.permute.xlu0 %2441
    %2443 = vset.pattern.permute.xlu0 0
    %2444 = vperm.xlu0 %2443, %v2113
    %v2445 = vpop.permute.xlu0 %2444
    %2446 = vset.pattern.permute.xlu0 0
    %2447 = vperm.xlu0 %2446, %v2114
    %v2448 = vpop.permute.xlu0 %2447
    %2449 = vset.pattern.permute.xlu0 0
    %2450 = vperm.xlu0 %2449, %v2115
    %v2451 = vpop.permute.xlu0 %2450
    %2452 = vset.pattern.permute.xlu0 0
    %2453 = vperm.xlu0 %2452, %v2116
    %v2454 = vpop.permute.xlu0 %2453
    %2455 = vset.pattern.permute.xlu0 0
    %2456 = vperm.xlu0 %2455, %v2117
    %v2457 = vpop.permute.xlu0 %2456
    %2458 = vset.pattern.permute.xlu0 0
    %2459 = vperm.xlu0 %2458, %v2118
    %v2460 = vpop.permute.xlu0 %2459
    %2461 = vset.pattern.permute.xlu0 0
    %2462 = vperm.xlu0 %2461, %v2119
    %v2463 = vpop.permute.xlu0 %2462
    %2464 = vset.pattern.permute.xlu0 0
    %2465 = vperm.xlu0 %2464, %v2120
    %v2466 = vpop.permute.xlu0 %2465
    %2467 = vset.pattern.permute.xlu0 0
    %2468 = vperm.xlu0 %2467, %v2121
    %v2469 = vpop.permute.xlu0 %2468
    %2470 = vset.pattern.permute.xlu0 0
    %2471 = vperm.xlu0 %2470, %v2122
    %v2472 = vpop.permute.xlu0 %2471
    %2473 = vset.pattern.permute.xlu0 0
    %2474 = vperm.xlu0 %2473, %v2123
    %v2475 = vpop.permute.xlu0 %2474
    %2476 = vset.pattern.permute.xlu0 0
    %2477 = vperm.xlu0 %2476, %v2124
    %v2478 = vpop.permute.xlu0 %2477
    %2479 = vset.pattern.permute.xlu0 0
    %2480 = vperm.xlu0 %2479, %v2125
    %v2481 = vpop.permute.xlu0 %2480
    %2482 = vset.pattern.permute.xlu0 0
    %2483 = vperm.xlu0 %2482, %v2126
    %v2484 = vpop.permute.xlu0 %2483
    %2485 = vset.pattern.permute.xlu0 0
    %2486 = vperm.xlu0 %2485, %v2127
    %v2487 = vpop.permute.xlu0 %2486
    %2488 = vset.pattern.permute.xlu0 0
    %2489 = vperm.xlu0 %2488, %v2128
    %v2490 = vpop.permute.xlu0 %2489
    %2491 = vset.pattern.permute.xlu0 0
    %2492 = vperm.xlu0 %2491, %v2129
    %v2493 = vpop.permute.xlu0 %2492
    %2494 = vset.pattern.permute.xlu0 0
    %2495 = vperm.xlu0 %2494, %v2130
    %v2496 = vpop.permute.xlu0 %2495
    %2497 = vset.pattern.permute.xlu0 0
    %2498 = vperm.xlu0 %2497, %v2131
    %v2499 = vpop.permute.xlu0 %2498
    %2500 = vset.pattern.permute.xlu0 0
    %2501 = vperm.xlu0 %2500, %v2132
    %v2502 = vpop.permute.xlu0 %2501
    %2503 = vset.pattern.permute.xlu0 0
    %2504 = vperm.xlu0 %2503, %v2133
    %v2505 = vpop.permute.xlu0 %2504
    %2506 = vset.pattern.permute.xlu0 0
    %2507 = vperm.xlu0 %2506, %v2134
    %v2508 = vpop.permute.xlu0 %2507
    %2509 = vset.pattern.permute.xlu0 0
    %2510 = vperm.xlu0 %2509, %v2135
    %v2511 = vpop.permute.xlu0 %2510
    %2512 = vset.pattern.permute.xlu0 0
    %2513 = vperm.xlu0 %2512, %v2136
    %v2514 = vpop.permute.xlu0 %2513
    %2515 = vset.pattern.permute.xlu0 0
    %2516 = vperm.xlu0 %2515, %v2137
    %v2517 = vpop.permute.xlu0 %2516
    %2518 = vset.pattern.permute.xlu0 0
    %2519 = vperm.xlu0 %2518, %v2138
    %v2520 = vpop.permute.xlu0 %2519
    %2521 = vset.pattern.permute.xlu0 0
    %2522 = vperm.xlu0 %2521, %v2139
    %v2523 = vpop.permute.xlu0 %2522
    %vm2524 = vcmp.eq.s32.totalorder %v2142, 1
    %vm2525 = vcmp.eq.s32.totalorder %v2145, 1
    %vm2526 = vcmp.eq.s32.totalorder %v2148, 1
    %vm2527 = vcmp.eq.s32.totalorder %v2151, 1
    %vm2528 = vcmp.eq.s32.totalorder %v2154, 1
    %vm2529 = vcmp.eq.s32.totalorder %v2157, 1
    %vm2530 = vcmp.eq.s32.totalorder %v2160, 1
    %vm2531 = vcmp.eq.s32.totalorder %v2163, 1
    %vm2532 = vcmp.eq.s32.totalorder %v2166, 1
    %vm2533 = vcmp.eq.s32.totalorder %v2169, 1
    %vm2534 = vcmp.eq.s32.totalorder %v2172, 1
    %vm2535 = vcmp.eq.s32.totalorder %v2175, 1
    %vm2536 = vcmp.eq.s32.totalorder %v2178, 1
    %vm2537 = vcmp.eq.s32.totalorder %v2181, 1
    %vm2538 = vcmp.eq.s32.totalorder %v2184, 1
    %vm2539 = vcmp.eq.s32.totalorder %v2187, 1
    %vm2540 = vcmp.eq.s32.totalorder %v2190, 1
    %vm2541 = vcmp.eq.s32.totalorder %v2193, 1
    %vm2542 = vcmp.eq.s32.totalorder %v2196, 1
    %vm2543 = vcmp.eq.s32.totalorder %v2199, 1
    %vm2544 = vcmp.eq.s32.totalorder %v2202, 1
    %vm2545 = vcmp.eq.s32.totalorder %v2205, 1
    %vm2546 = vcmp.eq.s32.totalorder %v2208, 1
    %vm2547 = vcmp.eq.s32.totalorder %v2211, 1
    %vm2548 = vcmp.eq.s32.totalorder %v2214, 1
    %vm2549 = vcmp.eq.s32.totalorder %v2217, 1
    %vm2550 = vcmp.eq.s32.totalorder %v2220, 1
    %vm2551 = vcmp.eq.s32.totalorder %v2223, 1
    %vm2552 = vcmp.eq.s32.totalorder %v2226, 1
    %vm2553 = vcmp.eq.s32.totalorder %v2229, 1
    %vm2554 = vcmp.eq.s32.totalorder %v2232, 1
    %vm2555 = vcmp.eq.s32.totalorder %v2235, 1
    %vm2556 = vcmp.eq.s32.totalorder %v2238, 1
    %vm2557 = vcmp.eq.s32.totalorder %v2241, 1
    %vm2558 = vcmp.eq.s32.totalorder %v2244, 1
    %vm2559 = vcmp.eq.s32.totalorder %v2247, 1
    %vm2560 = vcmp.eq.s32.totalorder %v2250, 1
    %vm2561 = vcmp.eq.s32.totalorder %v2253, 1
    %vm2562 = vcmp.eq.s32.totalorder %v2256, 1
    %vm2563 = vcmp.eq.s32.totalorder %v2259, 1
    %vm2564 = vcmp.eq.s32.totalorder %v2262, 1
    %vm2565 = vcmp.eq.s32.totalorder %v2265, 1
    %vm2566 = vcmp.eq.s32.totalorder %v2268, 1
    %vm2567 = vcmp.eq.s32.totalorder %v2271, 1
    %vm2568 = vcmp.eq.s32.totalorder %v2274, 1
    %vm2569 = vcmp.eq.s32.totalorder %v2277, 1
    %vm2570 = vcmp.eq.s32.totalorder %v2280, 1
    %vm2571 = vcmp.eq.s32.totalorder %v2283, 1
    %vm2572 = vcmp.eq.s32.totalorder %v2286, 1
    %vm2573 = vcmp.eq.s32.totalorder %v2289, 1
    %vm2574 = vcmp.eq.s32.totalorder %v2292, 1
    %vm2575 = vcmp.eq.s32.totalorder %v2295, 1
    %vm2576 = vcmp.eq.s32.totalorder %v2298, 1
    %vm2577 = vcmp.eq.s32.totalorder %v2301, 1
    %vm2578 = vcmp.eq.s32.totalorder %v2304, 1
    %vm2579 = vcmp.eq.s32.totalorder %v2307, 1
    %vm2580 = vcmp.eq.s32.totalorder %v2310, 1
    %vm2581 = vcmp.eq.s32.totalorder %v2313, 1
    %vm2582 = vcmp.eq.s32.totalorder %v2316, 1
    %vm2583 = vcmp.eq.s32.totalorder %v2319, 1
    %vm2584 = vcmp.eq.s32.totalorder %v2322, 1
    %vm2585 = vcmp.eq.s32.totalorder %v2325, 1
    %vm2586 = vcmp.eq.s32.totalorder %v2328, 1
    %vm2587 = vcmp.eq.s32.totalorder %v2331, 1
    %vm2588 = vcmp.eq.s32.totalorder %v2334, 1
    %vm2589 = vcmp.eq.s32.totalorder %v2337, 1
    %vm2590 = vcmp.eq.s32.totalorder %v2340, 1
    %vm2591 = vcmp.eq.s32.totalorder %v2343, 1
    %vm2592 = vcmp.eq.s32.totalorder %v2346, 1
    %vm2593 = vcmp.eq.s32.totalorder %v2349, 1
    %vm2594 = vcmp.eq.s32.totalorder %v2352, 1
    %vm2595 = vcmp.eq.s32.totalorder %v2355, 1
    %vm2596 = vcmp.eq.s32.totalorder %v2358, 1
    %vm2597 = vcmp.eq.s32.totalorder %v2361, 1
    %vm2598 = vcmp.eq.s32.totalorder %v2364, 1
    %vm2599 = vcmp.eq.s32.totalorder %v2367, 1
    %vm2600 = vcmp.eq.s32.totalorder %v2370, 1
    %vm2601 = vcmp.eq.s32.totalorder %v2373, 1
    %vm2602 = vcmp.eq.s32.totalorder %v2376, 1
    %vm2603 = vcmp.eq.s32.totalorder %v2379, 1
    %vm2604 = vcmp.eq.s32.totalorder %v2382, 1
    %vm2605 = vcmp.eq.s32.totalorder %v2385, 1
    %vm2606 = vcmp.eq.s32.totalorder %v2388, 1
    %vm2607 = vcmp.eq.s32.totalorder %v2391, 1
    %vm2608 = vcmp.eq.s32.totalorder %v2394, 1
    %vm2609 = vcmp.eq.s32.totalorder %v2397, 1
    %vm2610 = vcmp.eq.s32.totalorder %v2400, 1
    %vm2611 = vcmp.eq.s32.totalorder %v2403, 1
    %vm2612 = vcmp.eq.s32.totalorder %v2406, 1
    %vm2613 = vcmp.eq.s32.totalorder %v2409, 1
    %vm2614 = vcmp.eq.s32.totalorder %v2412, 1
    %vm2615 = vcmp.eq.s32.totalorder %v2415, 1
    %vm2616 = vcmp.eq.s32.totalorder %v2418, 1
    %vm2617 = vcmp.eq.s32.totalorder %v2421, 1
    %vm2618 = vcmp.eq.s32.totalorder %v2424, 1
    %vm2619 = vcmp.eq.s32.totalorder %v2427, 1
    %vm2620 = vcmp.eq.s32.totalorder %v2430, 1
    %vm2621 = vcmp.eq.s32.totalorder %v2433, 1
    %vm2622 = vcmp.eq.s32.totalorder %v2436, 1
    %vm2623 = vcmp.eq.s32.totalorder %v2439, 1
    %vm2624 = vcmp.eq.s32.totalorder %v2442, 1
    %vm2625 = vcmp.eq.s32.totalorder %v2445, 1
    %vm2626 = vcmp.eq.s32.totalorder %v2448, 1
    %vm2627 = vcmp.eq.s32.totalorder %v2451, 1
    %vm2628 = vcmp.eq.s32.totalorder %v2454, 1
    %vm2629 = vcmp.eq.s32.totalorder %v2457, 1
    %vm2630 = vcmp.eq.s32.totalorder %v2460, 1
    %vm2631 = vcmp.eq.s32.totalorder %v2463, 1
    %vm2632 = vcmp.eq.s32.totalorder %v2466, 1
    %vm2633 = vcmp.eq.s32.totalorder %v2469, 1
    %vm2634 = vcmp.eq.s32.totalorder %v2472, 1
    %vm2635 = vcmp.eq.s32.totalorder %v2475, 1
    %vm2636 = vcmp.eq.s32.totalorder %v2478, 1
    %vm2637 = vcmp.eq.s32.totalorder %v2481, 1
    %vm2638 = vcmp.eq.s32.totalorder %v2484, 1
    %vm2639 = vcmp.eq.s32.totalorder %v2487, 1
    %vm2640 = vcmp.eq.s32.totalorder %v2490, 1
    %vm2641 = vcmp.eq.s32.totalorder %v2493, 1
    %vm2642 = vcmp.eq.s32.totalorder %v2496, 1
    %vm2643 = vcmp.eq.s32.totalorder %v2499, 1
    %vm2644 = vcmp.eq.s32.totalorder %v2502, 1
    %vm2645 = vcmp.eq.s32.totalorder %v2505, 1
    %vm2646 = vcmp.eq.s32.totalorder %v2508, 1
    %vm2647 = vcmp.eq.s32.totalorder %v2511, 1
    %vm2648 = vcmp.eq.s32.totalorder %v2514, 1
    %vm2649 = vcmp.eq.s32.totalorder %v2517, 1
    %vm2650 = vcmp.eq.s32.totalorder %v2520, 1
    %vm2651 = vcmp.eq.s32.totalorder %v2523, 1
    %v2652 = vsel %vm1122, 1, 0
    %v2653 = vsel %vm1123, 1, 0
    %v2654 = vsel %vm1124, 1, 0
    %v2655 = vsel %vm1125, 1, 0
    %v2656 = vsel %vm1126, 1, 0
    %v2657 = vsel %vm1127, 1, 0
    %v2658 = vsel %vm1128, 1, 0
    %v2659 = vsel %vm1129, 1, 0
    %v2660 = vlaneseq
    %v2661 = vshrl.u32 %v2660, 7
    %v2662 = vsub.s32 0, %v2661
    %v2663 = vrot.slane %v2652, %v2662
    %v2664 = vlaneseq
    %v2665 = vshrl.u32 %v2664, 7
    %v2666 = vsub.s32 0, %v2665
    %v2667 = vrot.slane %v2653, %v2666
    %v2668 = vlaneseq
    %v2669 = vshrl.u32 %v2668, 7
    %v2670 = vsub.s32 0, %v2669
    %v2671 = vrot.slane %v2654, %v2670
    %v2672 = vlaneseq
    %v2673 = vshrl.u32 %v2672, 7
    %v2674 = vsub.s32 0, %v2673
    %v2675 = vrot.slane %v2655, %v2674
    %v2676 = vlaneseq
    %v2677 = vshrl.u32 %v2676, 7
    %v2678 = vsub.s32 0, %v2677
    %v2679 = vrot.slane %v2656, %v2678
    %v2680 = vlaneseq
    %v2681 = vshrl.u32 %v2680, 7
    %v2682 = vsub.s32 0, %v2681
    %v2683 = vrot.slane %v2657, %v2682
    %v2684 = vlaneseq
    %v2685 = vshrl.u32 %v2684, 7
    %v2686 = vsub.s32 0, %v2685
    %v2687 = vrot.slane %v2658, %v2686
    %v2688 = vlaneseq
    %v2689 = vshrl.u32 %v2688, 7
    %v2690 = vsub.s32 0, %v2689
    %v2691 = vrot.slane %v2659, %v2690
    %vm2692 = vcmp.eq.s32.totalorder %v2663, 1
    %vm2693 = vcmp.eq.s32.totalorder %v2667, 1
    %vm2694 = vcmp.eq.s32.totalorder %v2671, 1
    %vm2695 = vcmp.eq.s32.totalorder %v2675, 1
    %vm2696 = vcmp.eq.s32.totalorder %v2679, 1
    %vm2697 = vcmp.eq.s32.totalorder %v2683, 1
    %vm2698 = vcmp.eq.s32.totalorder %v2687, 1
    %vm2699 = vcmp.eq.s32.totalorder %v2691, 1
    %vm2700 = vmand %vm2524, %vm2692
    %vm2701 = vmand %vm2525, %vm2692
    %vm2702 = vmand %vm2526, %vm2692
    %vm2703 = vmand %vm2527, %vm2692
    %vm2704 = vmand %vm2528, %vm2692
    %vm2705 = vmand %vm2529, %vm2692
    %vm2706 = vmand %vm2530, %vm2692
    %vm2707 = vmand %vm2531, %vm2692
    %vm2708 = vmand %vm2532, %vm2692
    %vm2709 = vmand %vm2533, %vm2692
    %vm2710 = vmand %vm2534, %vm2692
    %vm2711 = vmand %vm2535, %vm2692
    %vm2712 = vmand %vm2536, %vm2692
    %vm2713 = vmand %vm2537, %vm2692
    %vm2714 = vmand %vm2538, %vm2692
    %vm2715 = vmand %vm2539, %vm2692
    %vm2716 = vmand %vm2540, %vm2693
    %vm2717 = vmand %vm2541, %vm2693
    %vm2718 = vmand %vm2542, %vm2693
    %vm2719 = vmand %vm2543, %vm2693
    %vm2720 = vmand %vm2544, %vm2693
    %vm2721 = vmand %vm2545, %vm2693
    %vm2722 = vmand %vm2546, %vm2693
    %vm2723 = vmand %vm2547, %vm2693
    %vm2724 = vmand %vm2548, %vm2693
    %vm2725 = vmand %vm2549, %vm2693
    %vm2726 = vmand %vm2550, %vm2693
    %vm2727 = vmand %vm2551, %vm2693
    %vm2728 = vmand %vm2552, %vm2693
    %vm2729 = vmand %vm2553, %vm2693
    %vm2730 = vmand %vm2554, %vm2693
    %vm2731 = vmand %vm2555, %vm2693
    %vm2732 = vmand %vm2556, %vm2694
    %vm2733 = vmand %vm2557, %vm2694
    %vm2734 = vmand %vm2558, %vm2694
    %vm2735 = vmand %vm2559, %vm2694
    %vm2736 = vmand %vm2560, %vm2694
    %vm2737 = vmand %vm2561, %vm2694
    %vm2738 = vmand %vm2562, %vm2694
    %vm2739 = vmand %vm2563, %vm2694
    %vm2740 = vmand %vm2564, %vm2694
    %vm2741 = vmand %vm2565, %vm2694
    %vm2742 = vmand %vm2566, %vm2694
    %vm2743 = vmand %vm2567, %vm2694
    %vm2744 = vmand %vm2568, %vm2694
    %vm2745 = vmand %vm2569, %vm2694
    %vm2746 = vmand %vm2570, %vm2694
    %vm2747 = vmand %vm2571, %vm2694
    %vm2748 = vmand %vm2572, %vm2695
    %vm2749 = vmand %vm2573, %vm2695
    %vm2750 = vmand %vm2574, %vm2695
    %vm2751 = vmand %vm2575, %vm2695
    %vm2752 = vmand %vm2576, %vm2695
    %vm2753 = vmand %vm2577, %vm2695
    %vm2754 = vmand %vm2578, %vm2695
    %vm2755 = vmand %vm2579, %vm2695
    %vm2756 = vmand %vm2580, %vm2695
    %vm2757 = vmand %vm2581, %vm2695
    %vm2758 = vmand %vm2582, %vm2695
    %vm2759 = vmand %vm2583, %vm2695
    %vm2760 = vmand %vm2584, %vm2695
    %vm2761 = vmand %vm2585, %vm2695
    %vm2762 = vmand %vm2586, %vm2695
    %vm2763 = vmand %vm2587, %vm2695
    %vm2764 = vmand %vm2588, %vm2696
    %vm2765 = vmand %vm2589, %vm2696
    %vm2766 = vmand %vm2590, %vm2696
    %vm2767 = vmand %vm2591, %vm2696
    %vm2768 = vmand %vm2592, %vm2696
    %vm2769 = vmand %vm2593, %vm2696
    %vm2770 = vmand %vm2594, %vm2696
    %vm2771 = vmand %vm2595, %vm2696
    %vm2772 = vmand %vm2596, %vm2696
    %vm2773 = vmand %vm2597, %vm2696
    %vm2774 = vmand %vm2598, %vm2696
    %vm2775 = vmand %vm2599, %vm2696
    %vm2776 = vmand %vm2600, %vm2696
    %vm2777 = vmand %vm2601, %vm2696
    %vm2778 = vmand %vm2602, %vm2696
    %vm2779 = vmand %vm2603, %vm2696
    %vm2780 = vmand %vm2604, %vm2697
    %vm2781 = vmand %vm2605, %vm2697
    %vm2782 = vmand %vm2606, %vm2697
    %vm2783 = vmand %vm2607, %vm2697
    %vm2784 = vmand %vm2608, %vm2697
    %vm2785 = vmand %vm2609, %vm2697
    %vm2786 = vmand %vm2610, %vm2697
    %vm2787 = vmand %vm2611, %vm2697
    %vm2788 = vmand %vm2612, %vm2697
    %vm2789 = vmand %vm2613, %vm2697
    %vm2790 = vmand %vm2614, %vm2697
    %vm2791 = vmand %vm2615, %vm2697
    %vm2792 = vmand %vm2616, %vm2697
    %vm2793 = vmand %vm2617, %vm2697
    %vm2794 = vmand %vm2618, %vm2697
    %vm2795 = vmand %vm2619, %vm2697
    %vm2796 = vmand %vm2620, %vm2698
    %vm2797 = vmand %vm2621, %vm2698
    %vm2798 = vmand %vm2622, %vm2698
    %vm2799 = vmand %vm2623, %vm2698
    %vm2800 = vmand %vm2624, %vm2698
    %vm2801 = vmand %vm2625, %vm2698
    %vm2802 = vmand %vm2626, %vm2698
    %vm2803 = vmand %vm2627, %vm2698
    %vm2804 = vmand %vm2628, %vm2698
    %vm2805 = vmand %vm2629, %vm2698
    %vm2806 = vmand %vm2630, %vm2698
    %vm2807 = vmand %vm2631, %vm2698
    %vm2808 = vmand %vm2632, %vm2698
    %vm2809 = vmand %vm2633, %vm2698
    %vm2810 = vmand %vm2634, %vm2698
    %vm2811 = vmand %vm2635, %vm2698
    %vm2812 = vmand %vm2636, %vm2699
    %vm2813 = vmand %vm2637, %vm2699
    %vm2814 = vmand %vm2638, %vm2699
    %vm2815 = vmand %vm2639, %vm2699
    %vm2816 = vmand %vm2640, %vm2699
    %vm2817 = vmand %vm2641, %vm2699
    %vm2818 = vmand %vm2642, %vm2699
    %vm2819 = vmand %vm2643, %vm2699
    %vm2820 = vmand %vm2644, %vm2699
    %vm2821 = vmand %vm2645, %vm2699
    %vm2822 = vmand %vm2646, %vm2699
    %vm2823 = vmand %vm2647, %vm2699
    %vm2824 = vmand %vm2648, %vm2699
    %vm2825 = vmand %vm2649, %vm2699
    %vm2826 = vmand %vm2650, %vm2699
    %vm2827 = vmand %vm2651, %vm2699
    %v2828 = vmax.f32 %v1884, 0.0
    %v2829 = vmax.f32 %v1885, 0.0
    %v2830 = vmax.f32 %v1886, 0.0
    %v2831 = vmax.f32 %v1887, 0.0
    %v2832 = vmax.f32 %v1888, 0.0
    %v2833 = vmax.f32 %v1889, 0.0
    %v2834 = vmax.f32 %v1890, 0.0
    %v2835 = vmax.f32 %v1891, 0.0
    %v2836 = vmax.f32 %v1892, 0.0
    %v2837 = vmax.f32 %v1893, 0.0
    %v2838 = vmax.f32 %v1894, 0.0
    %v2839 = vmax.f32 %v1895, 0.0
    %v2840 = vmax.f32 %v1896, 0.0
    %v2841 = vmax.f32 %v1897, 0.0
    %v2842 = vmax.f32 %v1898, 0.0
    %v2843 = vmax.f32 %v1899, 0.0
    %v2844 = vmax.f32 %v1900, 0.0
    %v2845 = vmax.f32 %v1901, 0.0
    %v2846 = vmax.f32 %v1902, 0.0
    %v2847 = vmax.f32 %v1903, 0.0
    %v2848 = vmax.f32 %v1904, 0.0
    %v2849 = vmax.f32 %v1905, 0.0
    %v2850 = vmax.f32 %v1906, 0.0
    %v2851 = vmax.f32 %v1907, 0.0
    %v2852 = vmax.f32 %v1908, 0.0
    %v2853 = vmax.f32 %v1909, 0.0
    %v2854 = vmax.f32 %v1910, 0.0
    %v2855 = vmax.f32 %v1911, 0.0
    %v2856 = vmax.f32 %v1912, 0.0
    %v2857 = vmax.f32 %v1913, 0.0
    %v2858 = vmax.f32 %v1914, 0.0
    %v2859 = vmax.f32 %v1915, 0.0
    %v2860 = vmax.f32 %v1916, 0.0
    %v2861 = vmax.f32 %v1917, 0.0
    %v2862 = vmax.f32 %v1918, 0.0
    %v2863 = vmax.f32 %v1919, 0.0
    %v2864 = vmax.f32 %v1920, 0.0
    %v2865 = vmax.f32 %v1921, 0.0
    %v2866 = vmax.f32 %v1922, 0.0
    %v2867 = vmax.f32 %v1923, 0.0
    %v2868 = vmax.f32 %v1924, 0.0
    %v2869 = vmax.f32 %v1925, 0.0
    %v2870 = vmax.f32 %v1926, 0.0
    %v2871 = vmax.f32 %v1927, 0.0
    %v2872 = vmax.f32 %v1928, 0.0
    %v2873 = vmax.f32 %v1929, 0.0
    %v2874 = vmax.f32 %v1930, 0.0
    %v2875 = vmax.f32 %v1931, 0.0
    %v2876 = vmax.f32 %v1932, 0.0
    %v2877 = vmax.f32 %v1933, 0.0
    %v2878 = vmax.f32 %v1934, 0.0
    %v2879 = vmax.f32 %v1935, 0.0
    %v2880 = vmax.f32 %v1936, 0.0
    %v2881 = vmax.f32 %v1937, 0.0
    %v2882 = vmax.f32 %v1938, 0.0
    %v2883 = vmax.f32 %v1939, 0.0
    %v2884 = vmax.f32 %v1940, 0.0
    %v2885 = vmax.f32 %v1941, 0.0
    %v2886 = vmax.f32 %v1942, 0.0
    %v2887 = vmax.f32 %v1943, 0.0
    %v2888 = vmax.f32 %v1944, 0.0
    %v2889 = vmax.f32 %v1945, 0.0
    %v2890 = vmax.f32 %v1946, 0.0
    %v2891 = vmax.f32 %v1947, 0.0
    %v2892 = vmax.f32 %v1948, 0.0
    %v2893 = vmax.f32 %v1949, 0.0
    %v2894 = vmax.f32 %v1950, 0.0
    %v2895 = vmax.f32 %v1951, 0.0
    %v2896 = vmax.f32 %v1952, 0.0
    %v2897 = vmax.f32 %v1953, 0.0
    %v2898 = vmax.f32 %v1954, 0.0
    %v2899 = vmax.f32 %v1955, 0.0
    %v2900 = vmax.f32 %v1956, 0.0
    %v2901 = vmax.f32 %v1957, 0.0
    %v2902 = vmax.f32 %v1958, 0.0
    %v2903 = vmax.f32 %v1959, 0.0
    %v2904 = vmax.f32 %v1960, 0.0
    %v2905 = vmax.f32 %v1961, 0.0
    %v2906 = vmax.f32 %v1962, 0.0
    %v2907 = vmax.f32 %v1963, 0.0
    %v2908 = vmax.f32 %v1964, 0.0
    %v2909 = vmax.f32 %v1965, 0.0
    %v2910 = vmax.f32 %v1966, 0.0
    %v2911 = vmax.f32 %v1967, 0.0
    %v2912 = vmax.f32 %v1968, 0.0
    %v2913 = vmax.f32 %v1969, 0.0
    %v2914 = vmax.f32 %v1970, 0.0
    %v2915 = vmax.f32 %v1971, 0.0
    %v2916 = vmax.f32 %v1972, 0.0
    %v2917 = vmax.f32 %v1973, 0.0
    %v2918 = vmax.f32 %v1974, 0.0
    %v2919 = vmax.f32 %v1975, 0.0
    %v2920 = vmax.f32 %v1976, 0.0
    %v2921 = vmax.f32 %v1977, 0.0
    %v2922 = vmax.f32 %v1978, 0.0
    %v2923 = vmax.f32 %v1979, 0.0
    %v2924 = vmax.f32 %v1980, 0.0
    %v2925 = vmax.f32 %v1981, 0.0
    %v2926 = vmax.f32 %v1982, 0.0
    %v2927 = vmax.f32 %v1983, 0.0
    %v2928 = vmax.f32 %v1984, 0.0
    %v2929 = vmax.f32 %v1985, 0.0
    %v2930 = vmax.f32 %v1986, 0.0
    %v2931 = vmax.f32 %v1987, 0.0
    %v2932 = vmax.f32 %v1988, 0.0
    %v2933 = vmax.f32 %v1989, 0.0
    %v2934 = vmax.f32 %v1990, 0.0
    %v2935 = vmax.f32 %v1991, 0.0
    %v2936 = vmax.f32 %v1992, 0.0
    %v2937 = vmax.f32 %v1993, 0.0
    %v2938 = vmax.f32 %v1994, 0.0
    %v2939 = vmax.f32 %v1995, 0.0
    %v2940 = vmax.f32 %v1996, 0.0
    %v2941 = vmax.f32 %v1997, 0.0
    %v2942 = vmax.f32 %v1998, 0.0
    %v2943 = vmax.f32 %v1999, 0.0
    %v2944 = vmax.f32 %v2000, 0.0
    %v2945 = vmax.f32 %v2001, 0.0
    %v2946 = vmax.f32 %v2002, 0.0
    %v2947 = vmax.f32 %v2003, 0.0
    %v2948 = vmax.f32 %v2004, 0.0
    %v2949 = vmax.f32 %v2005, 0.0
    %v2950 = vmax.f32 %v2006, 0.0
    %v2951 = vmax.f32 %v2007, 0.0
    %v2952 = vmax.f32 %v2008, 0.0
    %v2953 = vmax.f32 %v2009, 0.0
    %v2954 = vmax.f32 %v2010, 0.0
    %v2955 = vmax.f32 %v2011, 0.0
    %v2956 = vsel %vm2700, %v2828, 0.0
    %v2957 = vsel %vm2701, %v2829, 0.0
    %v2958 = vsel %vm2702, %v2830, 0.0
    %v2959 = vsel %vm2703, %v2831, 0.0
    %v2960 = vsel %vm2704, %v2832, 0.0
    %v2961 = vsel %vm2705, %v2833, 0.0
    %v2962 = vsel %vm2706, %v2834, 0.0
    %v2963 = vsel %vm2707, %v2835, 0.0
    %v2964 = vsel %vm2708, %v2836, 0.0
    %v2965 = vsel %vm2709, %v2837, 0.0
    %v2966 = vsel %vm2710, %v2838, 0.0
    %v2967 = vsel %vm2711, %v2839, 0.0
    %v2968 = vsel %vm2712, %v2840, 0.0
    %v2969 = vsel %vm2713, %v2841, 0.0
    %v2970 = vsel %vm2714, %v2842, 0.0
    %v2971 = vsel %vm2715, %v2843, 0.0
    %v2972 = vsel %vm2716, %v2844, 0.0
    %v2973 = vsel %vm2717, %v2845, 0.0
    %v2974 = vsel %vm2718, %v2846, 0.0
    %v2975 = vsel %vm2719, %v2847, 0.0
    %v2976 = vsel %vm2720, %v2848, 0.0
    %v2977 = vsel %vm2721, %v2849, 0.0
    %v2978 = vsel %vm2722, %v2850, 0.0
    %v2979 = vsel %vm2723, %v2851, 0.0
    %v2980 = vsel %vm2724, %v2852, 0.0
    %v2981 = vsel %vm2725, %v2853, 0.0
    %v2982 = vsel %vm2726, %v2854, 0.0
    %v2983 = vsel %vm2727, %v2855, 0.0
    %v2984 = vsel %vm2728, %v2856, 0.0
    %v2985 = vsel %vm2729, %v2857, 0.0
    %v2986 = vsel %vm2730, %v2858, 0.0
    %v2987 = vsel %vm2731, %v2859, 0.0
    %v2988 = vsel %vm2732, %v2860, 0.0
    %v2989 = vsel %vm2733, %v2861, 0.0
    %v2990 = vsel %vm2734, %v2862, 0.0
    %v2991 = vsel %vm2735, %v2863, 0.0
    %v2992 = vsel %vm2736, %v2864, 0.0
    %v2993 = vsel %vm2737, %v2865, 0.0
    %v2994 = vsel %vm2738, %v2866, 0.0
    %v2995 = vsel %vm2739, %v2867, 0.0
    %v2996 = vsel %vm2740, %v2868, 0.0
    %v2997 = vsel %vm2741, %v2869, 0.0
    %v2998 = vsel %vm2742, %v2870, 0.0
    %v2999 = vsel %vm2743, %v2871, 0.0
    %v3000 = vsel %vm2744, %v2872, 0.0
    %v3001 = vsel %vm2745, %v2873, 0.0
    %v3002 = vsel %vm2746, %v2874, 0.0
    %v3003 = vsel %vm2747, %v2875, 0.0
    %v3004 = vsel %vm2748, %v2876, 0.0
    %v3005 = vsel %vm2749, %v2877, 0.0
    %v3006 = vsel %vm2750, %v2878, 0.0
    %v3007 = vsel %vm2751, %v2879, 0.0
    %v3008 = vsel %vm2752, %v2880, 0.0
    %v3009 = vsel %vm2753, %v2881, 0.0
    %v3010 = vsel %vm2754, %v2882, 0.0
    %v3011 = vsel %vm2755, %v2883, 0.0
    %v3012 = vsel %vm2756, %v2884, 0.0
    %v3013 = vsel %vm2757, %v2885, 0.0
    %v3014 = vsel %vm2758, %v2886, 0.0
    %v3015 = vsel %vm2759, %v2887, 0.0
    %v3016 = vsel %vm2760, %v2888, 0.0
    %v3017 = vsel %vm2761, %v2889, 0.0
    %v3018 = vsel %vm2762, %v2890, 0.0
    %v3019 = vsel %vm2763, %v2891, 0.0
    %v3020 = vsel %vm2764, %v2892, 0.0
    %v3021 = vsel %vm2765, %v2893, 0.0
    %v3022 = vsel %vm2766, %v2894, 0.0
    %v3023 = vsel %vm2767, %v2895, 0.0
    %v3024 = vsel %vm2768, %v2896, 0.0
    %v3025 = vsel %vm2769, %v2897, 0.0
    %v3026 = vsel %vm2770, %v2898, 0.0
    %v3027 = vsel %vm2771, %v2899, 0.0
    %v3028 = vsel %vm2772, %v2900, 0.0
    %v3029 = vsel %vm2773, %v2901, 0.0
    %v3030 = vsel %vm2774, %v2902, 0.0
    %v3031 = vsel %vm2775, %v2903, 0.0
    %v3032 = vsel %vm2776, %v2904, 0.0
    %v3033 = vsel %vm2777, %v2905, 0.0
    %v3034 = vsel %vm2778, %v2906, 0.0
    %v3035 = vsel %vm2779, %v2907, 0.0
    %v3036 = vsel %vm2780, %v2908, 0.0
    %v3037 = vsel %vm2781, %v2909, 0.0
    %v3038 = vsel %vm2782, %v2910, 0.0
    %v3039 = vsel %vm2783, %v2911, 0.0
    %v3040 = vsel %vm2784, %v2912, 0.0
    %v3041 = vsel %vm2785, %v2913, 0.0
    %v3042 = vsel %vm2786, %v2914, 0.0
    %v3043 = vsel %vm2787, %v2915, 0.0
    %v3044 = vsel %vm2788, %v2916, 0.0
    %v3045 = vsel %vm2789, %v2917, 0.0
    %v3046 = vsel %vm2790, %v2918, 0.0
    %v3047 = vsel %vm2791, %v2919, 0.0
    %v3048 = vsel %vm2792, %v2920, 0.0
    %v3049 = vsel %vm2793, %v2921, 0.0
    %v3050 = vsel %vm2794, %v2922, 0.0
    %v3051 = vsel %vm2795, %v2923, 0.0
    %v3052 = vsel %vm2796, %v2924, 0.0
    %v3053 = vsel %vm2797, %v2925, 0.0
    %v3054 = vsel %vm2798, %v2926, 0.0
    %v3055 = vsel %vm2799, %v2927, 0.0
    %v3056 = vsel %vm2800, %v2928, 0.0
    %v3057 = vsel %vm2801, %v2929, 0.0
    %v3058 = vsel %vm2802, %v2930, 0.0
    %v3059 = vsel %vm2803, %v2931, 0.0
    %v3060 = vsel %vm2804, %v2932, 0.0
    %v3061 = vsel %vm2805, %v2933, 0.0
    %v3062 = vsel %vm2806, %v2934, 0.0
    %v3063 = vsel %vm2807, %v2935, 0.0
    %v3064 = vsel %vm2808, %v2936, 0.0
    %v3065 = vsel %vm2809, %v2937, 0.0
    %v3066 = vsel %vm2810, %v2938, 0.0
    %v3067 = vsel %vm2811, %v2939, 0.0
    %v3068 = vsel %vm2812, %v2940, 0.0
    %v3069 = vsel %vm2813, %v2941, 0.0
    %v3070 = vsel %vm2814, %v2942, 0.0
    %v3071 = vsel %vm2815, %v2943, 0.0
    %v3072 = vsel %vm2816, %v2944, 0.0
    %v3073 = vsel %vm2817, %v2945, 0.0
    %v3074 = vsel %vm2818, %v2946, 0.0
    %v3075 = vsel %vm2819, %v2947, 0.0
    %v3076 = vsel %vm2820, %v2948, 0.0
    %v3077 = vsel %vm2821, %v2949, 0.0
    %v3078 = vsel %vm2822, %v2950, 0.0
    %v3079 = vsel %vm2823, %v2951, 0.0
    %v3080 = vsel %vm2824, %v2952, 0.0
    %v3081 = vsel %vm2825, %v2953, 0.0
    %v3082 = vsel %vm2826, %v2954, 0.0
    %v3083 = vsel %vm2827, %v2955, 0.0
    %vm3084 = vcmp.gt.f32.partialorder %v1884, 1e-08
    %vm3085 = vcmp.gt.f32.partialorder %v1885, 1e-08
    %vm3086 = vcmp.gt.f32.partialorder %v1886, 1e-08
    %vm3087 = vcmp.gt.f32.partialorder %v1887, 1e-08
    %vm3088 = vcmp.gt.f32.partialorder %v1888, 1e-08
    %vm3089 = vcmp.gt.f32.partialorder %v1889, 1e-08
    %vm3090 = vcmp.gt.f32.partialorder %v1890, 1e-08
    %vm3091 = vcmp.gt.f32.partialorder %v1891, 1e-08
    %vm3092 = vcmp.gt.f32.partialorder %v1892, 1e-08
    %vm3093 = vcmp.gt.f32.partialorder %v1893, 1e-08
    %vm3094 = vcmp.gt.f32.partialorder %v1894, 1e-08
    %vm3095 = vcmp.gt.f32.partialorder %v1895, 1e-08
    %vm3096 = vcmp.gt.f32.partialorder %v1896, 1e-08
    %vm3097 = vcmp.gt.f32.partialorder %v1897, 1e-08
    %vm3098 = vcmp.gt.f32.partialorder %v1898, 1e-08
    %vm3099 = vcmp.gt.f32.partialorder %v1899, 1e-08
    %vm3100 = vcmp.gt.f32.partialorder %v1900, 1e-08
    %vm3101 = vcmp.gt.f32.partialorder %v1901, 1e-08
    %vm3102 = vcmp.gt.f32.partialorder %v1902, 1e-08
    %vm3103 = vcmp.gt.f32.partialorder %v1903, 1e-08
    %vm3104 = vcmp.gt.f32.partialorder %v1904, 1e-08
    %vm3105 = vcmp.gt.f32.partialorder %v1905, 1e-08
    %vm3106 = vcmp.gt.f32.partialorder %v1906, 1e-08
    %vm3107 = vcmp.gt.f32.partialorder %v1907, 1e-08
    %vm3108 = vcmp.gt.f32.partialorder %v1908, 1e-08
    %vm3109 = vcmp.gt.f32.partialorder %v1909, 1e-08
    %vm3110 = vcmp.gt.f32.partialorder %v1910, 1e-08
    %vm3111 = vcmp.gt.f32.partialorder %v1911, 1e-08
    %vm3112 = vcmp.gt.f32.partialorder %v1912, 1e-08
    %vm3113 = vcmp.gt.f32.partialorder %v1913, 1e-08
    %vm3114 = vcmp.gt.f32.partialorder %v1914, 1e-08
    %vm3115 = vcmp.gt.f32.partialorder %v1915, 1e-08
    %vm3116 = vcmp.gt.f32.partialorder %v1916, 1e-08
    %vm3117 = vcmp.gt.f32.partialorder %v1917, 1e-08
    %vm3118 = vcmp.gt.f32.partialorder %v1918, 1e-08
    %vm3119 = vcmp.gt.f32.partialorder %v1919, 1e-08
    %vm3120 = vcmp.gt.f32.partialorder %v1920, 1e-08
    %vm3121 = vcmp.gt.f32.partialorder %v1921, 1e-08
    %vm3122 = vcmp.gt.f32.partialorder %v1922, 1e-08
    %vm3123 = vcmp.gt.f32.partialorder %v1923, 1e-08
    %vm3124 = vcmp.gt.f32.partialorder %v1924, 1e-08
    %vm3125 = vcmp.gt.f32.partialorder %v1925, 1e-08
    %vm3126 = vcmp.gt.f32.partialorder %v1926, 1e-08
    %vm3127 = vcmp.gt.f32.partialorder %v1927, 1e-08
    %vm3128 = vcmp.gt.f32.partialorder %v1928, 1e-08
    %vm3129 = vcmp.gt.f32.partialorder %v1929, 1e-08
    %vm3130 = vcmp.gt.f32.partialorder %v1930, 1e-08
    %vm3131 = vcmp.gt.f32.partialorder %v1931, 1e-08
    %vm3132 = vcmp.gt.f32.partialorder %v1932, 1e-08
    %vm3133 = vcmp.gt.f32.partialorder %v1933, 1e-08
    %vm3134 = vcmp.gt.f32.partialorder %v1934, 1e-08
    %vm3135 = vcmp.gt.f32.partialorder %v1935, 1e-08
    %vm3136 = vcmp.gt.f32.partialorder %v1936, 1e-08
    %vm3137 = vcmp.gt.f32.partialorder %v1937, 1e-08
    %vm3138 = vcmp.gt.f32.partialorder %v1938, 1e-08
    %vm3139 = vcmp.gt.f32.partialorder %v1939, 1e-08
    %vm3140 = vcmp.gt.f32.partialorder %v1940, 1e-08
    %vm3141 = vcmp.gt.f32.partialorder %v1941, 1e-08
    %vm3142 = vcmp.gt.f32.partialorder %v1942, 1e-08
    %vm3143 = vcmp.gt.f32.partialorder %v1943, 1e-08
    %vm3144 = vcmp.gt.f32.partialorder %v1944, 1e-08
    %vm3145 = vcmp.gt.f32.partialorder %v1945, 1e-08
    %vm3146 = vcmp.gt.f32.partialorder %v1946, 1e-08
    %vm3147 = vcmp.gt.f32.partialorder %v1947, 1e-08
    %vm3148 = vcmp.gt.f32.partialorder %v1948, 1e-08
    %vm3149 = vcmp.gt.f32.partialorder %v1949, 1e-08
    %vm3150 = vcmp.gt.f32.partialorder %v1950, 1e-08
    %vm3151 = vcmp.gt.f32.partialorder %v1951, 1e-08
    %vm3152 = vcmp.gt.f32.partialorder %v1952, 1e-08
    %vm3153 = vcmp.gt.f32.partialorder %v1953, 1e-08
    %vm3154 = vcmp.gt.f32.partialorder %v1954, 1e-08
    %vm3155 = vcmp.gt.f32.partialorder %v1955, 1e-08
    %vm3156 = vcmp.gt.f32.partialorder %v1956, 1e-08
    %vm3157 = vcmp.gt.f32.partialorder %v1957, 1e-08
    %vm3158 = vcmp.gt.f32.partialorder %v1958, 1e-08
    %vm3159 = vcmp.gt.f32.partialorder %v1959, 1e-08
    %vm3160 = vcmp.gt.f32.partialorder %v1960, 1e-08
    %vm3161 = vcmp.gt.f32.partialorder %v1961, 1e-08
    %vm3162 = vcmp.gt.f32.partialorder %v1962, 1e-08
    %vm3163 = vcmp.gt.f32.partialorder %v1963, 1e-08
    %vm3164 = vcmp.gt.f32.partialorder %v1964, 1e-08
    %vm3165 = vcmp.gt.f32.partialorder %v1965, 1e-08
    %vm3166 = vcmp.gt.f32.partialorder %v1966, 1e-08
    %vm3167 = vcmp.gt.f32.partialorder %v1967, 1e-08
    %vm3168 = vcmp.gt.f32.partialorder %v1968, 1e-08
    %vm3169 = vcmp.gt.f32.partialorder %v1969, 1e-08
    %vm3170 = vcmp.gt.f32.partialorder %v1970, 1e-08
    %vm3171 = vcmp.gt.f32.partialorder %v1971, 1e-08
    %vm3172 = vcmp.gt.f32.partialorder %v1972, 1e-08
    %vm3173 = vcmp.gt.f32.partialorder %v1973, 1e-08
    %vm3174 = vcmp.gt.f32.partialorder %v1974, 1e-08
    %vm3175 = vcmp.gt.f32.partialorder %v1975, 1e-08
    %vm3176 = vcmp.gt.f32.partialorder %v1976, 1e-08
    %vm3177 = vcmp.gt.f32.partialorder %v1977, 1e-08
    %vm3178 = vcmp.gt.f32.partialorder %v1978, 1e-08
    %vm3179 = vcmp.gt.f32.partialorder %v1979, 1e-08
    %vm3180 = vcmp.gt.f32.partialorder %v1980, 1e-08
    %vm3181 = vcmp.gt.f32.partialorder %v1981, 1e-08
    %vm3182 = vcmp.gt.f32.partialorder %v1982, 1e-08
    %vm3183 = vcmp.gt.f32.partialorder %v1983, 1e-08
    %vm3184 = vcmp.gt.f32.partialorder %v1984, 1e-08
    %vm3185 = vcmp.gt.f32.partialorder %v1985, 1e-08
    %vm3186 = vcmp.gt.f32.partialorder %v1986, 1e-08
    %vm3187 = vcmp.gt.f32.partialorder %v1987, 1e-08
    %vm3188 = vcmp.gt.f32.partialorder %v1988, 1e-08
    %vm3189 = vcmp.gt.f32.partialorder %v1989, 1e-08
    %vm3190 = vcmp.gt.f32.partialorder %v1990, 1e-08
    %vm3191 = vcmp.gt.f32.partialorder %v1991, 1e-08
    %vm3192 = vcmp.gt.f32.partialorder %v1992, 1e-08
    %vm3193 = vcmp.gt.f32.partialorder %v1993, 1e-08
    %vm3194 = vcmp.gt.f32.partialorder %v1994, 1e-08
    %vm3195 = vcmp.gt.f32.partialorder %v1995, 1e-08
    %vm3196 = vcmp.gt.f32.partialorder %v1996, 1e-08
    %vm3197 = vcmp.gt.f32.partialorder %v1997, 1e-08
    %vm3198 = vcmp.gt.f32.partialorder %v1998, 1e-08
    %vm3199 = vcmp.gt.f32.partialorder %v1999, 1e-08
    %vm3200 = vcmp.gt.f32.partialorder %v2000, 1e-08
    %vm3201 = vcmp.gt.f32.partialorder %v2001, 1e-08
    %vm3202 = vcmp.gt.f32.partialorder %v2002, 1e-08
    %vm3203 = vcmp.gt.f32.partialorder %v2003, 1e-08
    %vm3204 = vcmp.gt.f32.partialorder %v2004, 1e-08
    %vm3205 = vcmp.gt.f32.partialorder %v2005, 1e-08
    %vm3206 = vcmp.gt.f32.partialorder %v2006, 1e-08
    %vm3207 = vcmp.gt.f32.partialorder %v2007, 1e-08
    %vm3208 = vcmp.gt.f32.partialorder %v2008, 1e-08
    %vm3209 = vcmp.gt.f32.partialorder %v2009, 1e-08
    %vm3210 = vcmp.gt.f32.partialorder %v2010, 1e-08
    %vm3211 = vcmp.gt.f32.partialorder %v2011, 1e-08
    %vm3212 = vmand %vm2700, %vm3084
    %vm3213 = vmand %vm2701, %vm3085
    %vm3214 = vmand %vm2702, %vm3086
    %vm3215 = vmand %vm2703, %vm3087
    %vm3216 = vmand %vm2704, %vm3088
    %vm3217 = vmand %vm2705, %vm3089
    %vm3218 = vmand %vm2706, %vm3090
    %vm3219 = vmand %vm2707, %vm3091
    %vm3220 = vmand %vm2708, %vm3092
    %vm3221 = vmand %vm2709, %vm3093
    %vm3222 = vmand %vm2710, %vm3094
    %vm3223 = vmand %vm2711, %vm3095
    %vm3224 = vmand %vm2712, %vm3096
    %vm3225 = vmand %vm2713, %vm3097
    %vm3226 = vmand %vm2714, %vm3098
    %vm3227 = vmand %vm2715, %vm3099
    %vm3228 = vmand %vm2716, %vm3100
    %vm3229 = vmand %vm2717, %vm3101
    %vm3230 = vmand %vm2718, %vm3102
    %vm3231 = vmand %vm2719, %vm3103
    %vm3232 = vmand %vm2720, %vm3104
    %vm3233 = vmand %vm2721, %vm3105
    %vm3234 = vmand %vm2722, %vm3106
    %vm3235 = vmand %vm2723, %vm3107
    %vm3236 = vmand %vm2724, %vm3108
    %vm3237 = vmand %vm2725, %vm3109
    %vm3238 = vmand %vm2726, %vm3110
    %vm3239 = vmand %vm2727, %vm3111
    %vm3240 = vmand %vm2728, %vm3112
    %vm3241 = vmand %vm2729, %vm3113
    %vm3242 = vmand %vm2730, %vm3114
    %vm3243 = vmand %vm2731, %vm3115
    %vm3244 = vmand %vm2732, %vm3116
    %vm3245 = vmand %vm2733, %vm3117
    %vm3246 = vmand %vm2734, %vm3118
    %vm3247 = vmand %vm2735, %vm3119
    %vm3248 = vmand %vm2736, %vm3120
    %vm3249 = vmand %vm2737, %vm3121
    %vm3250 = vmand %vm2738, %vm3122
    %vm3251 = vmand %vm2739, %vm3123
    %vm3252 = vmand %vm2740, %vm3124
    %vm3253 = vmand %vm2741, %vm3125
    %vm3254 = vmand %vm2742, %vm3126
    %vm3255 = vmand %vm2743, %vm3127
    %vm3256 = vmand %vm2744, %vm3128
    %vm3257 = vmand %vm2745, %vm3129
    %vm3258 = vmand %vm2746, %vm3130
    %vm3259 = vmand %vm2747, %vm3131
    %vm3260 = vmand %vm2748, %vm3132
    %vm3261 = vmand %vm2749, %vm3133
    %vm3262 = vmand %vm2750, %vm3134
    %vm3263 = vmand %vm2751, %vm3135
    %vm3264 = vmand %vm2752, %vm3136
    %vm3265 = vmand %vm2753, %vm3137
    %vm3266 = vmand %vm2754, %vm3138
    %vm3267 = vmand %vm2755, %vm3139
    %vm3268 = vmand %vm2756, %vm3140
    %vm3269 = vmand %vm2757, %vm3141
    %vm3270 = vmand %vm2758, %vm3142
    %vm3271 = vmand %vm2759, %vm3143
    %vm3272 = vmand %vm2760, %vm3144
    %vm3273 = vmand %vm2761, %vm3145
    %vm3274 = vmand %vm2762, %vm3146
    %vm3275 = vmand %vm2763, %vm3147
    %vm3276 = vmand %vm2764, %vm3148
    %vm3277 = vmand %vm2765, %vm3149
    %vm3278 = vmand %vm2766, %vm3150
    %vm3279 = vmand %vm2767, %vm3151
    %vm3280 = vmand %vm2768, %vm3152
    %vm3281 = vmand %vm2769, %vm3153
    %vm3282 = vmand %vm2770, %vm3154
    %vm3283 = vmand %vm2771, %vm3155
    %vm3284 = vmand %vm2772, %vm3156
    %vm3285 = vmand %vm2773, %vm3157
    %vm3286 = vmand %vm2774, %vm3158
    %vm3287 = vmand %vm2775, %vm3159
    %vm3288 = vmand %vm2776, %vm3160
    %vm3289 = vmand %vm2777, %vm3161
    %vm3290 = vmand %vm2778, %vm3162
    %vm3291 = vmand %vm2779, %vm3163
    %vm3292 = vmand %vm2780, %vm3164
    %vm3293 = vmand %vm2781, %vm3165
    %vm3294 = vmand %vm2782, %vm3166
    %vm3295 = vmand %vm2783, %vm3167
    %vm3296 = vmand %vm2784, %vm3168
    %vm3297 = vmand %vm2785, %vm3169
    %vm3298 = vmand %vm2786, %vm3170
    %vm3299 = vmand %vm2787, %vm3171
    %vm3300 = vmand %vm2788, %vm3172
    %vm3301 = vmand %vm2789, %vm3173
    %vm3302 = vmand %vm2790, %vm3174
    %vm3303 = vmand %vm2791, %vm3175
    %vm3304 = vmand %vm2792, %vm3176
    %vm3305 = vmand %vm2793, %vm3177
    %vm3306 = vmand %vm2794, %vm3178
    %vm3307 = vmand %vm2795, %vm3179
    %vm3308 = vmand %vm2796, %vm3180
    %vm3309 = vmand %vm2797, %vm3181
    %vm3310 = vmand %vm2798, %vm3182
    %vm3311 = vmand %vm2799, %vm3183
    %vm3312 = vmand %vm2800, %vm3184
    %vm3313 = vmand %vm2801, %vm3185
    %vm3314 = vmand %vm2802, %vm3186
    %vm3315 = vmand %vm2803, %vm3187
    %vm3316 = vmand %vm2804, %vm3188
    %vm3317 = vmand %vm2805, %vm3189
    %vm3318 = vmand %vm2806, %vm3190
    %vm3319 = vmand %vm2807, %vm3191
    %vm3320 = vmand %vm2808, %vm3192
    %vm3321 = vmand %vm2809, %vm3193
    %vm3322 = vmand %vm2810, %vm3194
    %vm3323 = vmand %vm2811, %vm3195
    %vm3324 = vmand %vm2812, %vm3196
    %vm3325 = vmand %vm2813, %vm3197
    %vm3326 = vmand %vm2814, %vm3198
    %vm3327 = vmand %vm2815, %vm3199
    %vm3328 = vmand %vm2816, %vm3200
    %vm3329 = vmand %vm2817, %vm3201
    %vm3330 = vmand %vm2818, %vm3202
    %vm3331 = vmand %vm2819, %vm3203
    %vm3332 = vmand %vm2820, %vm3204
    %vm3333 = vmand %vm2821, %vm3205
    %vm3334 = vmand %vm2822, %vm3206
    %vm3335 = vmand %vm2823, %vm3207
    %vm3336 = vmand %vm2824, %vm3208
    %vm3337 = vmand %vm2825, %vm3209
    %vm3338 = vmand %vm2826, %vm3210
    %vm3339 = vmand %vm2827, %vm3211
    %v3340 = vsel %vm3212, 1.0, 0.0
    %v3341 = vsel %vm3213, 1.0, 0.0
    %v3342 = vsel %vm3214, 1.0, 0.0
    %v3343 = vsel %vm3215, 1.0, 0.0
    %v3344 = vsel %vm3216, 1.0, 0.0
    %v3345 = vsel %vm3217, 1.0, 0.0
    %v3346 = vsel %vm3218, 1.0, 0.0
    %v3347 = vsel %vm3219, 1.0, 0.0
    %v3348 = vsel %vm3220, 1.0, 0.0
    %v3349 = vsel %vm3221, 1.0, 0.0
    %v3350 = vsel %vm3222, 1.0, 0.0
    %v3351 = vsel %vm3223, 1.0, 0.0
    %v3352 = vsel %vm3224, 1.0, 0.0
    %v3353 = vsel %vm3225, 1.0, 0.0
    %v3354 = vsel %vm3226, 1.0, 0.0
    %v3355 = vsel %vm3227, 1.0, 0.0
    %v3356 = vsel %vm3228, 1.0, 0.0
    %v3357 = vsel %vm3229, 1.0, 0.0
    %v3358 = vsel %vm3230, 1.0, 0.0
    %v3359 = vsel %vm3231, 1.0, 0.0
    %v3360 = vsel %vm3232, 1.0, 0.0
    %v3361 = vsel %vm3233, 1.0, 0.0
    %v3362 = vsel %vm3234, 1.0, 0.0
    %v3363 = vsel %vm3235, 1.0, 0.0
    %v3364 = vsel %vm3236, 1.0, 0.0
    %v3365 = vsel %vm3237, 1.0, 0.0
    %v3366 = vsel %vm3238, 1.0, 0.0
    %v3367 = vsel %vm3239, 1.0, 0.0
    %v3368 = vsel %vm3240, 1.0, 0.0
    %v3369 = vsel %vm3241, 1.0, 0.0
    %v3370 = vsel %vm3242, 1.0, 0.0
    %v3371 = vsel %vm3243, 1.0, 0.0
    %v3372 = vsel %vm3244, 1.0, 0.0
    %v3373 = vsel %vm3245, 1.0, 0.0
    %v3374 = vsel %vm3246, 1.0, 0.0
    %v3375 = vsel %vm3247, 1.0, 0.0
    %v3376 = vsel %vm3248, 1.0, 0.0
    %v3377 = vsel %vm3249, 1.0, 0.0
    %v3378 = vsel %vm3250, 1.0, 0.0
    %v3379 = vsel %vm3251, 1.0, 0.0
    %v3380 = vsel %vm3252, 1.0, 0.0
    %v3381 = vsel %vm3253, 1.0, 0.0
    %v3382 = vsel %vm3254, 1.0, 0.0
    %v3383 = vsel %vm3255, 1.0, 0.0
    %v3384 = vsel %vm3256, 1.0, 0.0
    %v3385 = vsel %vm3257, 1.0, 0.0
    %v3386 = vsel %vm3258, 1.0, 0.0
    %v3387 = vsel %vm3259, 1.0, 0.0
    %v3388 = vsel %vm3260, 1.0, 0.0
    %v3389 = vsel %vm3261, 1.0, 0.0
    %v3390 = vsel %vm3262, 1.0, 0.0
    %v3391 = vsel %vm3263, 1.0, 0.0
    %v3392 = vsel %vm3264, 1.0, 0.0
    %v3393 = vsel %vm3265, 1.0, 0.0
    %v3394 = vsel %vm3266, 1.0, 0.0
    %v3395 = vsel %vm3267, 1.0, 0.0
    %v3396 = vsel %vm3268, 1.0, 0.0
    %v3397 = vsel %vm3269, 1.0, 0.0
    %v3398 = vsel %vm3270, 1.0, 0.0
    %v3399 = vsel %vm3271, 1.0, 0.0
    %v3400 = vsel %vm3272, 1.0, 0.0
    %v3401 = vsel %vm3273, 1.0, 0.0
    %v3402 = vsel %vm3274, 1.0, 0.0
    %v3403 = vsel %vm3275, 1.0, 0.0
    %v3404 = vsel %vm3276, 1.0, 0.0
    %v3405 = vsel %vm3277, 1.0, 0.0
    %v3406 = vsel %vm3278, 1.0, 0.0
    %v3407 = vsel %vm3279, 1.0, 0.0
    %v3408 = vsel %vm3280, 1.0, 0.0
    %v3409 = vsel %vm3281, 1.0, 0.0
    %v3410 = vsel %vm3282, 1.0, 0.0
    %v3411 = vsel %vm3283, 1.0, 0.0
    %v3412 = vsel %vm3284, 1.0, 0.0
    %v3413 = vsel %vm3285, 1.0, 0.0
    %v3414 = vsel %vm3286, 1.0, 0.0
    %v3415 = vsel %vm3287, 1.0, 0.0
    %v3416 = vsel %vm3288, 1.0, 0.0
    %v3417 = vsel %vm3289, 1.0, 0.0
    %v3418 = vsel %vm3290, 1.0, 0.0
    %v3419 = vsel %vm3291, 1.0, 0.0
    %v3420 = vsel %vm3292, 1.0, 0.0
    %v3421 = vsel %vm3293, 1.0, 0.0
    %v3422 = vsel %vm3294, 1.0, 0.0
    %v3423 = vsel %vm3295, 1.0, 0.0
    %v3424 = vsel %vm3296, 1.0, 0.0
    %v3425 = vsel %vm3297, 1.0, 0.0
    %v3426 = vsel %vm3298, 1.0, 0.0
    %v3427 = vsel %vm3299, 1.0, 0.0
    %v3428 = vsel %vm3300, 1.0, 0.0
    %v3429 = vsel %vm3301, 1.0, 0.0
    %v3430 = vsel %vm3302, 1.0, 0.0
    %v3431 = vsel %vm3303, 1.0, 0.0
    %v3432 = vsel %vm3304, 1.0, 0.0
    %v3433 = vsel %vm3305, 1.0, 0.0
    %v3434 = vsel %vm3306, 1.0, 0.0
    %v3435 = vsel %vm3307, 1.0, 0.0
    %v3436 = vsel %vm3308, 1.0, 0.0
    %v3437 = vsel %vm3309, 1.0, 0.0
    %v3438 = vsel %vm3310, 1.0, 0.0
    %v3439 = vsel %vm3311, 1.0, 0.0
    %v3440 = vsel %vm3312, 1.0, 0.0
    %v3441 = vsel %vm3313, 1.0, 0.0
    %v3442 = vsel %vm3314, 1.0, 0.0
    %v3443 = vsel %vm3315, 1.0, 0.0
    %v3444 = vsel %vm3316, 1.0, 0.0
    %v3445 = vsel %vm3317, 1.0, 0.0
    %v3446 = vsel %vm3318, 1.0, 0.0
    %v3447 = vsel %vm3319, 1.0, 0.0
    %v3448 = vsel %vm3320, 1.0, 0.0
    %v3449 = vsel %vm3321, 1.0, 0.0
    %v3450 = vsel %vm3322, 1.0, 0.0
    %v3451 = vsel %vm3323, 1.0, 0.0
    %v3452 = vsel %vm3324, 1.0, 0.0
    %v3453 = vsel %vm3325, 1.0, 0.0
    %v3454 = vsel %vm3326, 1.0, 0.0
    %v3455 = vsel %vm3327, 1.0, 0.0
    %v3456 = vsel %vm3328, 1.0, 0.0
    %v3457 = vsel %vm3329, 1.0, 0.0
    %v3458 = vsel %vm3330, 1.0, 0.0
    %v3459 = vsel %vm3331, 1.0, 0.0
    %v3460 = vsel %vm3332, 1.0, 0.0
    %v3461 = vsel %vm3333, 1.0, 0.0
    %v3462 = vsel %vm3334, 1.0, 0.0
    %v3463 = vsel %vm3335, 1.0, 0.0
    %v3464 = vsel %vm3336, 1.0, 0.0
    %v3465 = vsel %vm3337, 1.0, 0.0
    %v3466 = vsel %vm3338, 1.0, 0.0
    %v3467 = vsel %vm3339, 1.0, 0.0
    %v3468 = vadd.f32 %v2956, %v2957
    %v3469 = vadd.f32 %v3468, %v2958
    %v3470 = vadd.f32 %v3469, %v2959
    %v3471 = vadd.f32 %v3470, %v2960
    %v3472 = vadd.f32 %v3471, %v2961
    %v3473 = vadd.f32 %v3472, %v2962
    %v3474 = vadd.f32 %v3473, %v2963
    %v3475 = vadd.f32 %v3474, %v2964
    %v3476 = vadd.f32 %v3475, %v2965
    %v3477 = vadd.f32 %v3476, %v2966
    %v3478 = vadd.f32 %v3477, %v2967
    %v3479 = vadd.f32 %v3478, %v2968
    %v3480 = vadd.f32 %v3479, %v2969
    %v3481 = vadd.f32 %v3480, %v2970
    %v3482 = vadd.f32 %v3481, %v2971
    %v3483 = vadd.f32 %v3482, %v2972
    %v3484 = vadd.f32 %v3483, %v2973
    %v3485 = vadd.f32 %v3484, %v2974
    %v3486 = vadd.f32 %v3485, %v2975
    %v3487 = vadd.f32 %v3486, %v2976
    %v3488 = vadd.f32 %v3487, %v2977
    %v3489 = vadd.f32 %v3488, %v2978
    %v3490 = vadd.f32 %v3489, %v2979
    %v3491 = vadd.f32 %v3490, %v2980
    %v3492 = vadd.f32 %v3491, %v2981
    %v3493 = vadd.f32 %v3492, %v2982
    %v3494 = vadd.f32 %v3493, %v2983
    %v3495 = vadd.f32 %v3494, %v2984
    %v3496 = vadd.f32 %v3495, %v2985
    %v3497 = vadd.f32 %v3496, %v2986
    %v3498 = vadd.f32 %v3497, %v2987
    %v3499 = vadd.f32 %v3498, %v2988
    %v3500 = vadd.f32 %v3499, %v2989
    %v3501 = vadd.f32 %v3500, %v2990
    %v3502 = vadd.f32 %v3501, %v2991
    %v3503 = vadd.f32 %v3502, %v2992
    %v3504 = vadd.f32 %v3503, %v2993
    %v3505 = vadd.f32 %v3504, %v2994
    %v3506 = vadd.f32 %v3505, %v2995
    %v3507 = vadd.f32 %v3506, %v2996
    %v3508 = vadd.f32 %v3507, %v2997
    %v3509 = vadd.f32 %v3508, %v2998
    %v3510 = vadd.f32 %v3509, %v2999
    %v3511 = vadd.f32 %v3510, %v3000
    %v3512 = vadd.f32 %v3511, %v3001
    %v3513 = vadd.f32 %v3512, %v3002
    %v3514 = vadd.f32 %v3513, %v3003
    %v3515 = vadd.f32 %v3514, %v3004
    %v3516 = vadd.f32 %v3515, %v3005
    %v3517 = vadd.f32 %v3516, %v3006
    %v3518 = vadd.f32 %v3517, %v3007
    %v3519 = vadd.f32 %v3518, %v3008
    %v3520 = vadd.f32 %v3519, %v3009
    %v3521 = vadd.f32 %v3520, %v3010
    %v3522 = vadd.f32 %v3521, %v3011
    %v3523 = vadd.f32 %v3522, %v3012
    %v3524 = vadd.f32 %v3523, %v3013
    %v3525 = vadd.f32 %v3524, %v3014
    %v3526 = vadd.f32 %v3525, %v3015
    %v3527 = vadd.f32 %v3526, %v3016
    %v3528 = vadd.f32 %v3527, %v3017
    %v3529 = vadd.f32 %v3528, %v3018
    %v3530 = vadd.f32 %v3529, %v3019
    %v3531 = vadd.f32 %v3530, %v3020
    %v3532 = vadd.f32 %v3531, %v3021
    %v3533 = vadd.f32 %v3532, %v3022
    %v3534 = vadd.f32 %v3533, %v3023
    %v3535 = vadd.f32 %v3534, %v3024
    %v3536 = vadd.f32 %v3535, %v3025
    %v3537 = vadd.f32 %v3536, %v3026
    %v3538 = vadd.f32 %v3537, %v3027
    %v3539 = vadd.f32 %v3538, %v3028
    %v3540 = vadd.f32 %v3539, %v3029
    %v3541 = vadd.f32 %v3540, %v3030
    %v3542 = vadd.f32 %v3541, %v3031
    %v3543 = vadd.f32 %v3542, %v3032
    %v3544 = vadd.f32 %v3543, %v3033
    %v3545 = vadd.f32 %v3544, %v3034
    %v3546 = vadd.f32 %v3545, %v3035
    %v3547 = vadd.f32 %v3546, %v3036
    %v3548 = vadd.f32 %v3547, %v3037
    %v3549 = vadd.f32 %v3548, %v3038
    %v3550 = vadd.f32 %v3549, %v3039
    %v3551 = vadd.f32 %v3550, %v3040
    %v3552 = vadd.f32 %v3551, %v3041
    %v3553 = vadd.f32 %v3552, %v3042
    %v3554 = vadd.f32 %v3553, %v3043
    %v3555 = vadd.f32 %v3554, %v3044
    %v3556 = vadd.f32 %v3555, %v3045
    %v3557 = vadd.f32 %v3556, %v3046
    %v3558 = vadd.f32 %v3557, %v3047
    %v3559 = vadd.f32 %v3558, %v3048
    %v3560 = vadd.f32 %v3559, %v3049
    %v3561 = vadd.f32 %v3560, %v3050
    %v3562 = vadd.f32 %v3561, %v3051
    %v3563 = vadd.f32 %v3562, %v3052
    %v3564 = vadd.f32 %v3563, %v3053
    %v3565 = vadd.f32 %v3564, %v3054
    %v3566 = vadd.f32 %v3565, %v3055
    %v3567 = vadd.f32 %v3566, %v3056
    %v3568 = vadd.f32 %v3567, %v3057
    %v3569 = vadd.f32 %v3568, %v3058
    %v3570 = vadd.f32 %v3569, %v3059
    %v3571 = vadd.f32 %v3570, %v3060
    %v3572 = vadd.f32 %v3571, %v3061
    %v3573 = vadd.f32 %v3572, %v3062
    %v3574 = vadd.f32 %v3573, %v3063
    %v3575 = vadd.f32 %v3574, %v3064
    %v3576 = vadd.f32 %v3575, %v3065
    %v3577 = vadd.f32 %v3576, %v3066
    %v3578 = vadd.f32 %v3577, %v3067
    %v3579 = vadd.f32 %v3578, %v3068
    %v3580 = vadd.f32 %v3579, %v3069
    %v3581 = vadd.f32 %v3580, %v3070
    %v3582 = vadd.f32 %v3581, %v3071
    %v3583 = vadd.f32 %v3582, %v3072
    %v3584 = vadd.f32 %v3583, %v3073
    %v3585 = vadd.f32 %v3584, %v3074
    %v3586 = vadd.f32 %v3585, %v3075
    %v3587 = vadd.f32 %v3586, %v3076
    %v3588 = vadd.f32 %v3587, %v3077
    %v3589 = vadd.f32 %v3588, %v3078
    %v3590 = vadd.f32 %v3589, %v3079
    %v3591 = vadd.f32 %v3590, %v3080
    %v3592 = vadd.f32 %v3591, %v3081
    %v3593 = vadd.f32 %v3592, %v3082
    %v3594 = vadd.f32 %v3593, %v3083
    %v3595 = vrot.slane %v3594, 4
    %v3596 = vadd.f32 %v3594, %v3595
    %v3597 = vrot.slane %v3596, 2
    %v3598 = vadd.f32 %v3596, %v3597
    %v3599 = vrot.slane %v3598, 1
    %v3600 = vadd.f32 %v3598, %v3599
    %3601 = vst [vmem:[#allocation2] sm:$0x1] %v3600
    %v3602 = vadd.f32 %v3340, %v3341
    %v3603 = vadd.f32 %v3602, %v3342
    %v3604 = vadd.f32 %v3603, %v3343
    %v3605 = vadd.f32 %v3604, %v3344
    %v3606 = vadd.f32 %v3605, %v3345
    %v3607 = vadd.f32 %v3606, %v3346
    %v3608 = vadd.f32 %v3607, %v3347
    %v3609 = vadd.f32 %v3608, %v3348
    %v3610 = vadd.f32 %v3609, %v3349
    %v3611 = vadd.f32 %v3610, %v3350
    %v3612 = vadd.f32 %v3611, %v3351
    %v3613 = vadd.f32 %v3612, %v3352
    %v3614 = vadd.f32 %v3613, %v3353
    %v3615 = vadd.f32 %v3614, %v3354
    %v3616 = vadd.f32 %v3615, %v3355
    %v3617 = vadd.f32 %v3616, %v3356
    %v3618 = vadd.f32 %v3617, %v3357
    %v3619 = vadd.f32 %v3618, %v3358
    %v3620 = vadd.f32 %v3619, %v3359
    %v3621 = vadd.f32 %v3620, %v3360
    %v3622 = vadd.f32 %v3621, %v3361
    %v3623 = vadd.f32 %v3622, %v3362
    %v3624 = vadd.f32 %v3623, %v3363
    %v3625 = vadd.f32 %v3624, %v3364
    %v3626 = vadd.f32 %v3625, %v3365
    %v3627 = vadd.f32 %v3626, %v3366
    %v3628 = vadd.f32 %v3627, %v3367
    %v3629 = vadd.f32 %v3628, %v3368
    %v3630 = vadd.f32 %v3629, %v3369
    %v3631 = vadd.f32 %v3630, %v3370
    %v3632 = vadd.f32 %v3631, %v3371
    %v3633 = vadd.f32 %v3632, %v3372
    %v3634 = vadd.f32 %v3633, %v3373
    %v3635 = vadd.f32 %v3634, %v3374
    %v3636 = vadd.f32 %v3635, %v3375
    %v3637 = vadd.f32 %v3636, %v3376
    %v3638 = vadd.f32 %v3637, %v3377
    %v3639 = vadd.f32 %v3638, %v3378
    %v3640 = vadd.f32 %v3639, %v3379
    %v3641 = vadd.f32 %v3640, %v3380
    %v3642 = vadd.f32 %v3641, %v3381
    %v3643 = vadd.f32 %v3642, %v3382
    %v3644 = vadd.f32 %v3643, %v3383
    %v3645 = vadd.f32 %v3644, %v3384
    %v3646 = vadd.f32 %v3645, %v3385
    %v3647 = vadd.f32 %v3646, %v3386
    %v3648 = vadd.f32 %v3647, %v3387
    %v3649 = vadd.f32 %v3648, %v3388
    %v3650 = vadd.f32 %v3649, %v3389
    %v3651 = vadd.f32 %v3650, %v3390
    %v3652 = vadd.f32 %v3651, %v3391
    %v3653 = vadd.f32 %v3652, %v3392
    %v3654 = vadd.f32 %v3653, %v3393
    %v3655 = vadd.f32 %v3654, %v3394
    %v3656 = vadd.f32 %v3655, %v3395
    %v3657 = vadd.f32 %v3656, %v3396
    %v3658 = vadd.f32 %v3657, %v3397
    %v3659 = vadd.f32 %v3658, %v3398
    %v3660 = vadd.f32 %v3659, %v3399
    %v3661 = vadd.f32 %v3660, %v3400
    %v3662 = vadd.f32 %v3661, %v3401
    %v3663 = vadd.f32 %v3662, %v3402
    %v3664 = vadd.f32 %v3663, %v3403
    %v3665 = vadd.f32 %v3664, %v3404
    %v3666 = vadd.f32 %v3665, %v3405
    %v3667 = vadd.f32 %v3666, %v3406
    %v3668 = vadd.f32 %v3667, %v3407
    %v3669 = vadd.f32 %v3668, %v3408
    %v3670 = vadd.f32 %v3669, %v3409
    %v3671 = vadd.f32 %v3670, %v3410
    %v3672 = vadd.f32 %v3671, %v3411
    %v3673 = vadd.f32 %v3672, %v3412
    %v3674 = vadd.f32 %v3673, %v3413
    %v3675 = vadd.f32 %v3674, %v3414
    %v3676 = vadd.f32 %v3675, %v3415
    %v3677 = vadd.f32 %v3676, %v3416
    %v3678 = vadd.f32 %v3677, %v3417
    %v3679 = vadd.f32 %v3678, %v3418
    %v3680 = vadd.f32 %v3679, %v3419
    %v3681 = vadd.f32 %v3680, %v3420
    %v3682 = vadd.f32 %v3681, %v3421
    %v3683 = vadd.f32 %v3682, %v3422
    %v3684 = vadd.f32 %v3683, %v3423
    %v3685 = vadd.f32 %v3684, %v3424
    %v3686 = vadd.f32 %v3685, %v3425
    %v3687 = vadd.f32 %v3686, %v3426
    %v3688 = vadd.f32 %v3687, %v3427
    %v3689 = vadd.f32 %v3688, %v3428
    %v3690 = vadd.f32 %v3689, %v3429
    %v3691 = vadd.f32 %v3690, %v3430
    %v3692 = vadd.f32 %v3691, %v3431
    %v3693 = vadd.f32 %v3692, %v3432
    %v3694 = vadd.f32 %v3693, %v3433
    %v3695 = vadd.f32 %v3694, %v3434
    %v3696 = vadd.f32 %v3695, %v3435
    %v3697 = vadd.f32 %v3696, %v3436
    %v3698 = vadd.f32 %v3697, %v3437
    %v3699 = vadd.f32 %v3698, %v3438
    %v3700 = vadd.f32 %v3699, %v3439
    %v3701 = vadd.f32 %v3700, %v3440
    %v3702 = vadd.f32 %v3701, %v3441
    %v3703 = vadd.f32 %v3702, %v3442
    %v3704 = vadd.f32 %v3703, %v3443
    %v3705 = vadd.f32 %v3704, %v3444
    %v3706 = vadd.f32 %v3705, %v3445
    %v3707 = vadd.f32 %v3706, %v3446
    %v3708 = vadd.f32 %v3707, %v3447
    %v3709 = vadd.f32 %v3708, %v3448
    %v3710 = vadd.f32 %v3709, %v3449
    %v3711 = vadd.f32 %v3710, %v3450
    %v3712 = vadd.f32 %v3711, %v3451
    %v3713 = vadd.f32 %v3712, %v3452
    %v3714 = vadd.f32 %v3713, %v3453
    %v3715 = vadd.f32 %v3714, %v3454
    %v3716 = vadd.f32 %v3715, %v3455
    %v3717 = vadd.f32 %v3716, %v3456
    %v3718 = vadd.f32 %v3717, %v3457
    %v3719 = vadd.f32 %v3718, %v3458
    %v3720 = vadd.f32 %v3719, %v3459
    %v3721 = vadd.f32 %v3720, %v3460
    %v3722 = vadd.f32 %v3721, %v3461
    %v3723 = vadd.f32 %v3722, %v3462
    %v3724 = vadd.f32 %v3723, %v3463
    %v3725 = vadd.f32 %v3724, %v3464
    %v3726 = vadd.f32 %v3725, %v3465
    %v3727 = vadd.f32 %v3726, %v3466
    %v3728 = vadd.f32 %v3727, %v3467
    %v3729 = vrot.slane %v3728, 4
    %v3730 = vadd.f32 %v3728, %v3729
    %v3731 = vrot.slane %v3730, 2
    %v3732 = vadd.f32 %v3730, %v3731
    %v3733 = vrot.slane %v3732, 1
    %v3734 = vadd.f32 %v3732, %v3733
    %3735 = vst [vmem:[#allocation4] sm:$0x1] %v3734
    // Predicated region
    $region22: #{tpu_custom_call.1} parent=1 // pred_check
      _
    $region23: #{tpu_custom_call.1} parent=1 // pred_check_branch
      %3737 = sbr.rel (0) target = $region25
    $region24: #{tpu_custom_call.1} parent=1 // pred_region
      %s3739 = ssub.s32 16, 16
      %3740 = vsyncadd [#allocation3], %s3739
      %s3742 = sshll.u32 [#allocation2], 4
      %s3743 = int_to_ptr.vmem [resolvable:$true] %s3742
      %3745 = dma.vmem_to_hbm [thread:$0]  %s3743, 16, %s5, [#allocation3]
    $region25: #{tpu_custom_call.1} parent=1 // pred_fallthru
      _
    // Predicated region
    $region26: #{tpu_custom_call.1} parent=1 // pred_check
      _
    $region27: #{tpu_custom_call.1} parent=1 // pred_check_branch
      %3747 = sbr.rel (0) target = $region29
    $region28: #{tpu_custom_call.1} parent=1 // pred_region
      %s3749 = ssub.s32 16, 16
      %3750 = vsyncadd [#allocation5], %s3749
      %s3752 = sshll.u32 [#allocation4], 4
      %s3753 = int_to_ptr.vmem [resolvable:$true] %s3752
      %3755 = dma.vmem_to_hbm [thread:$0]  %s3753, 16, %s6, [#allocation5]
    $region29: #{tpu_custom_call.1} parent=1 // pred_fallthru
      _
    // Predicated region
    $region30: #{tpu_custom_call.1} parent=1 // pred_check
      _
    $region31: #{tpu_custom_call.1} parent=1 // pred_check_branch
      %3757 = sbr.rel (0) target = $region33
    $region32: #{tpu_custom_call.1} parent=1 // pred_region
      %3758 = dma.done [#allocation3], 16
    $region33: #{tpu_custom_call.1} parent=1 // pred_fallthru
      _
    // Predicated region
    $region34: #{tpu_custom_call.1} parent=1 // pred_check
      _
    $region35: #{tpu_custom_call.1} parent=1 // pred_check_branch
      %3760 = sbr.rel (0) target = $region37
    $region36: #{tpu_custom_call.1} parent=1 // pred_region
      %3761 = dma.done [#allocation5], 16
    $region37: #{tpu_custom_call.1} parent=1 // pred_fallthru
      _
    %3762 = vsyncpa [#allocation3], 1
    %3763 = vsyncpa [#allocation5], 1

</llo_original>
